<compile_context>
chip_gen: v5e
topology: v5e:2x2
jax: 0.10.0
libtpu: 0.0.40
codegen_flags: <defaults>
</compile_context>

<pallas_src>
import jax
import jax.numpy as jnp
from jax.experimental import pallas as pl
from jax.experimental.pallas import tpu as pltpu


def _graphsage_kernel(a_ref, x_ref, wl_ref, wr_ref, b_ref, o_ref, h_ref):
    layer = pl.program_id(0)        # 0: conv1(+ReLU) into h scratch, 1: conv2 into out
    col = pl.program_id(1)          # output-column tile index
    tn = o_ref.shape[-1]            # column tile width (static)

    a = a_ref[...]                  # (N, N) bf16, resident across all steps

    @pl.when(layer == 0)
    def _layer1():
        x = x_ref[...]                                                   # (N, F) bf16
        xl = jnp.dot(x, wl_ref[...], preferred_element_type=jnp.float32)  # (N, TN)
        agg = jnp.dot(a, xl.astype(jnp.bfloat16),
                      preferred_element_type=jnp.float32)                 # (N, TN)
        h = agg + b_ref[...] + jnp.dot(x, wr_ref[...],
                                       preferred_element_type=jnp.float32)
        h = jnp.maximum(h, 0.0)                                           # ReLU, f32 on VPU
        off = pl.multiple_of(col * tn, tn)
        h_ref[:, pl.ds(off, tn)] = h.astype(h_ref.dtype)                  # stays in VMEM

    @pl.when(layer == 1)
    def _layer2():
        h = h_ref[...]                                                    # (N, F) bf16
        hl = jnp.dot(h, wl_ref[...], preferred_element_type=jnp.float32)
        agg = jnp.dot(a, hl.astype(jnp.bfloat16),
                      preferred_element_type=jnp.float32)
        y = agg + b_ref[...] + jnp.dot(h, wr_ref[...],
                                       preferred_element_type=jnp.float32)
        o_ref[...] = y.astype(o_ref.dtype)


def prepare_graphsage_params(params, compute_dtype=jnp.bfloat16):
    """One-time cast + stacking of both SAGEConv layers' parameters.

    Hoisted out of graphsage_forward so the per-call path pays no per-forward
    f32->bf16 weight round trip through HBM.
    """
    (wl1, wr1, b1), (wl2, wr2, b2) = params
    wl = jnp.stack([wl1, wl2]).astype(compute_dtype)   # (2, F_in, F_out)
    wr = jnp.stack([wr1, wr2]).astype(compute_dtype)   # (2, F_in, F_out)
    b = jnp.stack([b1, b2]).astype(jnp.float32)        # (2, 1, F_out)
    return wl, wr, b


def graphsage_forward(x, a_norm, packed_params, *, tn=256,
                      out_dtype=jnp.bfloat16):
    """Fused two-layer GraphSAGE forward.

    x / a_norm should already be in the kernel compute dtype (bf16);
    packed_params comes from prepare_graphsage_params (casts hoisted).
    """
    wl, wr, b = packed_params
    n, f_in = x.shape
    f_out = wl.shape[-1]
    assert wl.shape == (2, f_in, f_out) and wr.shape == (2, f_in, f_out)
    assert b.shape == (2, 1, f_out)
    assert f_in == f_out, "stacked-weight path assumes equal layer widths"
    assert f_out % tn == 0 and n % 8 == 0 and a_norm.shape == (n, n)
    n_tiles = f_out // tn

    return pl.pallas_call(
        _graphsage_kernel,
        out_shape=jax.ShapeDtypeStruct((n, f_out), out_dtype),
        grid_spec=pltpu.PrefetchScalarGridSpec(
            num_scalar_prefetch=0,
            grid=(2, n_tiles),                                   # (layer, col tile)
            in_specs=[
                # A_norm and x: constant block index -> DMA'd once, resident.
                pl.BlockSpec((n, n), lambda l, c: (0, 0)),
                pl.BlockSpec((n, f_in), lambda l, c: (0, 0)),
                # Stacked weights / bias: column-tiled, per-step index change
                # -> double-buffered DMA overlaps the previous tile's MXU work.
                # (v5e: bump to pipeline_mode=pl.Buffered(3) if DMA stays exposed.)
                pl.BlockSpec((None, f_in, tn), lambda l, c: (l, 0, c)),
                pl.BlockSpec((None, f_in, tn), lambda l, c: (l, 0, c)),
                pl.BlockSpec((None, 1, tn), lambda l, c: (l, 0, c)),
            ],
            # layer 0 -> block (0, 0) always (never written, never flushed);
            # layer 1 -> block (0, c) written once each.
            out_specs=pl.BlockSpec((n, tn), lambda l, c: (0, l * c)),
            # Resident hidden activation h (never round-trips through HBM).
            scratch_shapes=[pltpu.VMEM((n, f_out), jnp.bfloat16)],
        ),
        compiler_params=pltpu.CompilerParams(
            # Layer axis and column axis both carry dependencies on the
            # resident h scratch -> keep them "arbitrary".
            dimension_semantics=("arbitrary", "arbitrary"),
            # ~2 MiB actually used; 32 MiB is safe on v5e/v6e (128 MiB VMEM)
            # and v7x (64 MiB VMEM).
            vmem_limit_bytes=32 * 1024 * 1024,
        ),
    )(a_norm, x, wl, wr, b)


def build_normalized_adjacency(edge_index, num_nodes):
    # edge_index: (2, E) with row 0 = source j, row 1 = target i (messages j -> i)
    src, dst = edge_index[0], edge_index[1]
    a = jnp.zeros((num_nodes, num_nodes), jnp.float32).at[dst, src].add(1.0)
    deg = a.sum(axis=1, keepdims=True)
    return a / jnp.maximum(deg, 1.0)


def init_params(key, f_in, f_out):
    k1, k2, k3 = jax.random.split(key, 3)
    scale = 1.0 / jnp.sqrt(f_in)
    w_l = jax.random.uniform(k1, (f_in, f_out), jnp.float32, -scale, scale)
    w_r = jax.random.uniform(k2, (f_in, f_out), jnp.float32, -scale, scale)
    b_l = jax.random.uniform(k3, (1, f_out), jnp.float32, -scale, scale)
    return w_l, w_r, b_l


def reference_forward(x, a_norm, params):
    (wl1, wr1, b1), (wl2, wr2, b2) = params
    hp = jax.lax.Precision.HIGHEST
    h = (jnp.dot(jnp.dot(a_norm, x, precision=hp), wl1, precision=hp)
         + b1 + jnp.dot(x, wr1, precision=hp))
    h = jnp.maximum(h, 0.0)
    return (jnp.dot(jnp.dot(a_norm, h, precision=hp), wl2, precision=hp)
            + b2 + jnp.dot(h, wr2, precision=hp))


if __name__ == "__main__":
    key = jax.random.PRNGKey(0)
    k_x, k_e, k_p1, k_p2 = jax.random.split(key, 4)

    # N=128 fills MXU rows / vreg lanes on all generations (v6e/v7x MXUs are
    # 256-wide; bump N/row tiles to 256 if the node count grows).
    N, F, E = 128, 768, 512

    x = jax.random.normal(k_x, (N, F), jnp.float32)
    edge_index = jax.random.randint(k_e, (2, E), 0, N, jnp.int32)
    a_norm = build_normalized_adjacency(edge_index, N)
    params = (init_params(k_p1, F, F), init_params(k_p2, F, F))

    # One-time packing / dtype casts, hoisted out of the per-call path.
    packed = prepare_graphsage_params(params)
    x_bf16 = x.astype(jnp.bfloat16)
    a_bf16 = a_norm.astype(jnp.bfloat16)

    out = jax.block_until_ready(graphsage_forward(x_bf16, a_bf16, packed))

    ref = reference_forward(x, a_norm, params)
    assert out.shape == (N, F)
    out_f32 = out.astype(jnp.float32)
    # bf16 MXU inputs / bf16 output with f32 accumulation -> loose-but-meaningful tolerance.
    rel_err = jnp.linalg.norm(out_f32 - ref) / jnp.linalg.norm(ref)
    max_err = jnp.max(jnp.abs(out_f32 - ref))
    assert rel_err < 5e-2 and max_err < 0.5, (float(rel_err), float(max_err))

    print("KERNEL_OK")
</pallas_src>

<mosaic_0001>
module attributes {stable_mosaic.version = 11 : i64} {
  func.func @_graphsage_kernel(%arg0: i32, %arg1: i32, %arg2: memref<128x128xbf16, #tpu.memory_space<vmem>>, %arg3: memref<128x768xbf16, #tpu.memory_space<vmem>>, %arg4: memref<1x768x256xbf16, #tpu.memory_space<vmem>>, %arg5: memref<1x768x256xbf16, #tpu.memory_space<vmem>>, %arg6: memref<1x1x256xf32, #tpu.memory_space<vmem>>, %arg7: memref<128x256xbf16, #tpu.memory_space<vmem>>, %arg8: memref<128x768xbf16, #tpu.memory_space<vmem>>) attributes {dimension_semantics = [#tpu.dimension_semantics<arbitrary>, #tpu.dimension_semantics<arbitrary>], iteration_bounds = array<i64: 2, 3>, scalar_prefetch = 0 : i64, scratch_operands = 1 : i64, tpu.core_type = #tpu.core_type<tc>, window_params = [{pipeline_mode = #tpu.pipeline_mode<synchronous>, transform_indices = @transform_0, window_bounds = array<i64: 128, 128>}, {pipeline_mode = #tpu.pipeline_mode<synchronous>, transform_indices = @transform_1, window_bounds = array<i64: 128, 768>}, {transform_indices = @transform_2, window_bounds = array<i64: 1, 768, 256>}, {transform_indices = @transform_3, window_bounds = array<i64: 1, 768, 256>}, {transform_indices = @transform_4, window_bounds = array<i64: 1, 1, 256>}, {transform_indices = @transform_5, window_bounds = array<i64: 128, 256>}]} {
    %c0 = arith.constant 0 : index
    %c0_0 = arith.constant 0 : index
    %0 = vector.load %arg2[%c0, %c0_0] : memref<128x128xbf16, #tpu.memory_space<vmem>>, vector<128x128xbf16>
    %c0_i32 = arith.constant 0 : i32
    %1 = arith.cmpi eq, %arg0, %c0_i32 : i32
    %2 = arith.extui %1 : i1 to i32
    %c0_i32_1 = arith.constant 0 : i32
    %3 = arith.cmpi ne, %2, %c0_i32_1 : i32
    scf.if %3 {
      %c0_3 = arith.constant 0 : index
      %c0_4 = arith.constant 0 : index
      %7 = vector.load %arg3[%c0_3, %c0_4] : memref<128x768xbf16, #tpu.memory_space<vmem>>, vector<128x768xbf16>
      %c0_5 = arith.constant 0 : index
      %c0_6 = arith.constant 0 : index
      %c0_7 = arith.constant 0 : index
      %8 = vector.load %arg4[%c0_5, %c0_6, %c0_7] : memref<1x768x256xbf16, #tpu.memory_space<vmem>>, vector<1x768x256xbf16>
      %9 = vector.shape_cast %8 : vector<1x768x256xbf16> to vector<768x256xbf16>
      %cst = arith.constant dense<0.000000e+00> : vector<128x256xf32>
      %10 = tpu.matmul %7, %9, %cst {dimension_numbers = #tpu.dot_dimension_numbers<[1], [0], [0], [1], [0, 0, 1, 1], [], []>} : vector<128x768xbf16>, vector<768x256xbf16>, vector<128x256xf32> -> vector<128x256xf32>
      %11 = arith.truncf %10 : vector<128x256xf32> to vector<128x256xbf16>
      %cst_8 = arith.constant dense<0.000000e+00> : vector<128x256xf32>
      %12 = tpu.matmul %0, %11, %cst_8 {dimension_numbers = #tpu.dot_dimension_numbers<[1], [0], [0], [1], [0, 0, 1, 1], [], []>} : vector<128x128xbf16>, vector<128x256xbf16>, vector<128x256xf32> -> vector<128x256xf32>
      %c0_9 = arith.constant 0 : index
      %c0_10 = arith.constant 0 : index
      %c0_11 = arith.constant 0 : index
      %13 = vector.load %arg6[%c0_9, %c0_10, %c0_11] : memref<1x1x256xf32, #tpu.memory_space<vmem>>, vector<1x1x256xf32>
      %14 = vector.shape_cast %13 : vector<1x1x256xf32> to vector<1x256xf32>
      %15 = vector.broadcast %14 : vector<1x256xf32> to vector<128x256xf32>
      %16 = arith.addf %12, %15 : vector<128x256xf32>
      %c0_12 = arith.constant 0 : index
      %c0_13 = arith.constant 0 : index
      %c0_14 = arith.constant 0 : index
      %17 = vector.load %arg5[%c0_12, %c0_13, %c0_14] : memref<1x768x256xbf16, #tpu.memory_space<vmem>>, vector<1x768x256xbf16>
      %18 = vector.shape_cast %17 : vector<1x768x256xbf16> to vector<768x256xbf16>
      %cst_15 = arith.constant dense<0.000000e+00> : vector<128x256xf32>
      %19 = tpu.matmul %7, %18, %cst_15 {dimension_numbers = #tpu.dot_dimension_numbers<[1], [0], [0], [1], [0, 0, 1, 1], [], []>} : vector<128x768xbf16>, vector<768x256xbf16>, vector<128x256xf32> -> vector<128x256xf32>
      %20 = arith.addf %16, %19 : vector<128x256xf32>
      %cst_16 = arith.constant 0.000000e+00 : f32
      %21 = vector.broadcast %cst_16 : f32 to vector<128x256xf32>
      %22 = arith.maximumf %20, %21 : vector<128x256xf32>
      %c256_i32 = arith.constant 256 : i32
      %23 = arith.muli %arg1, %c256_i32 : i32
      %24 = tpu.assume_multiple %23, 256 : i32
      %25 = arith.truncf %22 : vector<128x256xf32> to vector<128x256xbf16>
      %c0_17 = arith.constant 0 : index
      %26 = arith.index_cast %24 : i32 to index
      %27 = vector.load %arg8[%c0_17, %26] : memref<128x768xbf16, #tpu.memory_space<vmem>>, vector<128x256xbf16>
      tpu.vector_store %arg8[%c0_17, %26], %25 {strides = array<i32>} : memref<128x768xbf16, #tpu.memory_space<vmem>>, vector<128x256xbf16>,
    } else {
    }
    %c1_i32 = arith.constant 1 : i32
    %4 = arith.cmpi eq, %arg0, %c1_i32 : i32
    %5 = arith.extui %4 : i1 to i32
    %c0_i32_2 = arith.constant 0 : i32
    %6 = arith.cmpi ne, %5, %c0_i32_2 : i32
    scf.if %6 {
      %c0_3 = arith.constant 0 : index
      %c0_4 = arith.constant 0 : index
      %7 = vector.load %arg8[%c0_3, %c0_4] : memref<128x768xbf16, #tpu.memory_space<vmem>>, vector<128x768xbf16>
      %c0_5 = arith.constant 0 : index
      %c0_6 = arith.constant 0 : index
      %c0_7 = arith.constant 0 : index
      %8 = vector.load %arg4[%c0_5, %c0_6, %c0_7] : memref<1x768x256xbf16, #tpu.memory_space<vmem>>, vector<1x768x256xbf16>
      %9 = vector.shape_cast %8 : vector<1x768x256xbf16> to vector<768x256xbf16>
      %cst = arith.constant dense<0.000000e+00> : vector<128x256xf32>
      %10 = tpu.matmul %7, %9, %cst {dimension_numbers = #tpu.dot_dimension_numbers<[1], [0], [0], [1], [0, 0, 1, 1], [], []>} : vector<128x768xbf16>, vector<768x256xbf16>, vector<128x256xf32> -> vector<128x256xf32>
      %11 = arith.truncf %10 : vector<128x256xf32> to vector<128x256xbf16>
      %cst_8 = arith.constant dense<0.000000e+00> : vector<128x256xf32>
      %12 = tpu.matmul %0, %11, %cst_8 {dimension_numbers = #tpu.dot_dimension_numbers<[1], [0], [0], [1], [0, 0, 1, 1], [], []>} : vector<128x128xbf16>, vector<128x256xbf16>, vector<128x256xf32> -> vector<128x256xf32>
      %c0_9 = arith.constant 0 : index
      %c0_10 = arith.constant 0 : index
      %c0_11 = arith.constant 0 : index
      %13 = vector.load %arg6[%c0_9, %c0_10, %c0_11] : memref<1x1x256xf32, #tpu.memory_space<vmem>>, vector<1x1x256xf32>
      %14 = vector.shape_cast %13 : vector<1x1x256xf32> to vector<1x256xf32>
      %15 = vector.broadcast %14 : vector<1x256xf32> to vector<128x256xf32>
      %16 = arith.addf %12, %15 : vector<128x256xf32>
      %c0_12 = arith.constant 0 : index
      %c0_13 = arith.constant 0 : index
      %c0_14 = arith.constant 0 : index
      %17 = vector.load %arg5[%c0_12, %c0_13, %c0_14] : memref<1x768x256xbf16, #tpu.memory_space<vmem>>, vector<1x768x256xbf16>
      %18 = vector.shape_cast %17 : vector<1x768x256xbf16> to vector<768x256xbf16>
      %cst_15 = arith.constant dense<0.000000e+00> : vector<128x256xf32>
      %19 = tpu.matmul %7, %18, %cst_15 {dimension_numbers = #tpu.dot_dimension_numbers<[1], [0], [0], [1], [0, 0, 1, 1], [], []>} : vector<128x768xbf16>, vector<768x256xbf16>, vector<128x256xf32> -> vector<128x256xf32>
      %20 = arith.addf %16, %19 : vector<128x256xf32>
      %21 = arith.truncf %20 : vector<128x256xf32> to vector<128x256xbf16>
      %c0_16 = arith.constant 0 : index
      %c0_17 = arith.constant 0 : index
      %22 = vector.load %arg7[%c0_16, %c0_17] : memref<128x256xbf16, #tpu.memory_space<vmem>>, vector<128x256xbf16>
      tpu.vector_store %arg7[%c0_16, %c0_17], %21 {strides = array<i32>} : memref<128x256xbf16, #tpu.memory_space<vmem>>, vector<128x256xbf16>,
    } else {
    }
    return
  }
  func.func @transform_0(%arg0: i32, %arg1: i32) -> (i32, i32) {
    %c0_i32 = arith.constant 0 : i32
    %c0_i32_0 = arith.constant 0 : i32
    %c0_i32_1 = arith.constant 0 : i32
    return %c0_i32, %c0_i32_0 : i32, i32
  }
  func.func @transform_1(%arg0: i32, %arg1: i32) -> (i32, i32) {
    %c0_i32 = arith.constant 0 : i32
    %c0_i32_0 = arith.constant 0 : i32
    %c0_i32_1 = arith.constant 0 : i32
    return %c0_i32, %c0_i32_0 : i32, i32
  }
  func.func @transform_2(%arg0: i32, %arg1: i32) -> (i32, i32, i32) {
    %c0_i32 = arith.constant 0 : i32
    %c0_i32_0 = arith.constant 0 : i32
    return %arg0, %c0_i32, %arg1 : i32, i32, i32
  }
  func.func @transform_3(%arg0: i32, %arg1: i32) -> (i32, i32, i32) {
    %c0_i32 = arith.constant 0 : i32
    %c0_i32_0 = arith.constant 0 : i32
    return %arg0, %c0_i32, %arg1 : i32, i32, i32
  }
  func.func @transform_4(%arg0: i32, %arg1: i32) -> (i32, i32, i32) {
    %c0_i32 = arith.constant 0 : i32
    %c0_i32_0 = arith.constant 0 : i32
    return %arg0, %c0_i32, %arg1 : i32, i32, i32
  }
  func.func @transform_5(%arg0: i32, %arg1: i32) -> (i32, i32) {
    %0 = arith.muli %arg0, %arg1 : i32
    %c0_i32 = arith.constant 0 : i32
    %c0_i32_0 = arith.constant 0 : i32
    return %c0_i32, %0 : i32, i32
  }
}

</mosaic_0001>

<llo_original>
// kernel: tpu_custom_call.1
$region0: #{tpu_custom_call.1}
  #allocation0 [shape = 'u32[]', space=smem, size = 0x4, offset = 0x4, fixed_abs, tag = 'smem constant byte address 0x4 - core index']
  #allocation1 [shape = 'u32[72,128]{1,0:T(1,128)}', space=vmem, size = 0x9000, scoped, tag = 'internal scratch']
  #allocation2 [shape = 'bf16[128,768]{1,0:T(8,128)(2,1)}', space=vmem, size = 0x30000, scoped, tag = 'scratch operand']
  %s0 = inlined_call_operand.hbm [shape: bf16[128,128], index: 0, kind: input, shape index: {}]
  %s1 = inlined_call_operand.hbm [shape: bf16[128,768], index: 1, kind: input, shape index: {}]
  %s2 = inlined_call_operand.hbm [shape: bf16[2,768,768], index: 2, kind: input, shape index: {}]
  %s3 = inlined_call_operand.hbm [shape: bf16[2,768,768], index: 3, kind: input, shape index: {}]
  %s4 = inlined_call_operand.hbm [shape: f32[2,1,768], index: 4, kind: input, shape index: {}]
  %s5 = inlined_call_operand.hbm [shape: bf16[128,768], index: 5, kind: output, shape index: {}]
  %s6 = sld [smem:[#allocation0]]
  $region81: #{tpu_custom_call.1} parent=0
    _
  %s8 = ssub.s32 1, %s6
  %s9 = scalar_select 0, %s8, %s6
  $region1: #{tpu_custom_call.1} parent=0
    #allocation3 [shape = 'u8[32768]{0}', space=vmem, size = 0x8000, scoped, tag = 'input window, operand 0, single buffered']
    #allocation4 [shape = 's32[2]{0}', space=sflag, size = 0x8, scoped, tag = 'scoped memory for tpu_custom_call.1']
    #allocation5 [shape = 's32[2]{0}', space=sflag, size = 0x8, scoped, tag = 'scoped memory for tpu_custom_call.1']
    #allocation6 [shape = 'u8[196608]{0}', space=vmem, size = 0x30000, scoped, tag = 'input window, operand 1, single buffered']
    #allocation7 [shape = 's32[1]{0}', space=sflag, size = 0x4, scoped, tag = 'scoped memory for tpu_custom_call.1']
    #allocation8 [shape = 'u8[786432]{0}', space=vmem, size = 0xc0000, scoped, tag = 'input window, operand 2']
    #allocation9 [shape = 'u8[786432]{0}', space=vmem, size = 0xc0000, scoped, tag = 'input window, operand 3']
    #allocation10 [shape = 'u8[2048]{0}', space=vmem, size = 0x800, scoped, tag = 'input window, operand 4']
    #allocation11 [shape = 'u8[131072]{0}', space=vmem, size = 0x20000, scoped, tag = 'output window, operand 0']
    %10 = vsyncpa [#allocation4], 0
    %11 = vsyncpa [#allocation7], 0
    %12 = vsyncpa [#allocation5], 0
    %s13 = scalar_lea.sflag [#allocation5], 1
    %14 = vsyncpa %s13, 0
    loop: start=0, step=1, limit=8
    $region2: #{tpu_custom_call.1} parent=1 // loop_pre_header
      _
    $region3: #{tpu_custom_call.1} parent=1 // loop_header
      %s16 = sphi 0, %s20
      %p17 = scmp.ge.s32.totalorder %s16, 8
      %s23 = sphi 0, %s35
      %s24 = sphi 0, %s31
      %s25 = sphi 0, %s23
      %s26 = sphi 0, %s24
      %s27 = sphi 0, %s25
      %s28 = sphi 0, %s26
      %s36 = sphi 0, %s36
      %s38 = sphi 0, %s36
      %s39 = sphi 0, %s38
      %s53 = sphi 0, %s39
      %s57 = sphi 0, %s57
      %s59 = sphi 0, %s57
      %s60 = sphi 0, %s59
      %s74 = sphi 0, %s60
      %s82 = sphi 0, %s84
      %s85 = sphi 0, %s82
      %s86 = sphi 0, %s85
      %s102 = sphi 0, %s86
      %s110 = sphi 0, %s112
      %s113 = sphi 0, %s110
      %s114 = sphi 0, %s113
      %s130 = sphi 0, %s114
      %s138 = sphi 0, %s140
      %s141 = sphi 0, %s138
      %s142 = sphi 0, %s141
      %s158 = sphi 0, %s142
      %s166 = sphi 0, %s168
      %s169 = sphi 0, %s166
      %s170 = sphi 0, %s169
      %s186 = sphi 0, %s170
    $region4: #{tpu_custom_call.1} parent=1 // loop_header_branch
      %19 = sbr.rel (%p17) target = $region8
    $region5: #{tpu_custom_call.1} parent=1 // loop_body
      %s21 = ssub.s32 %s16, 1
      %s22 = ssub.s32 %s16, 2
      %s29 = sadd.s32 1, %s24
      %p30 = scmp.ge.s32.totalorder %s29, 3
      %s31 = scalar_select %p30, 0, %s29
      %s32 = sadd.s32 1, %s23
      %s33 = scalar_select %p30, %s32, %s23
      %p34 = scmp.ge.s32.totalorder %s33, 2
      %s35 = scalar_select %p34, 0, %s33
      %s37 = sadd.s32 %s36, 1
      %p40 = scmp.eq.s32.totalorder %s16, 5
      %p41 = scmp.ne.s32.totalorder %s36, %s38
      %p42 = scmp.eq.s32.totalorder %s16, 0
      %p43 = por %p41, %p42
      %p44 = scmp.ne.s32.totalorder %s36, %s38
      %p45 = scmp.eq.s32.totalorder %s21, 5
      %p46 = por %p44, %p45
      %p47 = scmp.ne.s32.totalorder %s38, %s39
      %p48 = scmp.eq.s32.totalorder %s21, 0
      %p49 = por %p47, %p48
      %p50 = scmp.ne.s32.totalorder %s38, %s39
      %p51 = scmp.eq.s32.totalorder %s22, 5
      %p52 = por %p50, %p51
      %p54 = scmp.ne.s32.totalorder %s39, %s53
      %p55 = scmp.eq.s32.totalorder %s22, 0
      %p56 = por %p54, %p55
      %s58 = sadd.s32 %s57, 1
      %p61 = scmp.eq.s32.totalorder %s16, 5
      %p62 = scmp.ne.s32.totalorder %s57, %s59
      %p63 = scmp.eq.s32.totalorder %s16, 0
      %p64 = por %p62, %p63
      %p65 = scmp.ne.s32.totalorder %s57, %s59
      %p66 = scmp.eq.s32.totalorder %s21, 5
      %p67 = por %p65, %p66
      %p68 = scmp.ne.s32.totalorder %s59, %s60
      %p69 = scmp.eq.s32.totalorder %s21, 0
      %p70 = por %p68, %p69
      %p71 = scmp.ne.s32.totalorder %s59, %s60
      %p72 = scmp.eq.s32.totalorder %s22, 5
      %p73 = por %p71, %p72
      %p75 = scmp.ne.s32.totalorder %s60, %s74
      %p76 = scmp.eq.s32.totalorder %s22, 0
      %p77 = por %p75, %p76
      %s78 = ssub.s32 %s23, %s35
      %s79 = ssub.s32 %s24, %s31
      %s80 = sor.u32 %s78, %s79
      %p81 = scmp.eq.s32.totalorder %s80, 0
      %s83 = sadd.s32 %s82, 1
      %s84 = scalar_select %p81, %s82, %s83
      %p87 = pneg %p81
      %p88 = scmp.eq.s32.totalorder %s16, 5
      %p89 = por %p87, %p88
      %p90 = scmp.ne.s32.totalorder %s82, %s85
      %p91 = scmp.eq.s32.totalorder %s16, 0
      %p92 = por %p90, %p91
      %p93 = scmp.ne.s32.totalorder %s82, %s85
      %p94 = scmp.eq.s32.totalorder %s21, 5
      %p95 = por %p93, %p94
      %p96 = scmp.ne.s32.totalorder %s85, %s86
      %p97 = scmp.eq.s32.totalorder %s21, 0
      %p98 = por %p96, %p97
      %p99 = scmp.ne.s32.totalorder %s85, %s86
      %p100 = scmp.eq.s32.totalorder %s22, 5
      %p101 = por %p99, %p100
      %p103 = scmp.ne.s32.totalorder %s86, %s102
      %p104 = scmp.eq.s32.totalorder %s22, 0
      %p105 = por %p103, %p104
      %s106 = ssub.s32 %s23, %s35
      %s107 = ssub.s32 %s24, %s31
      %s108 = sor.u32 %s106, %s107
      %p109 = scmp.eq.s32.totalorder %s108, 0
      %s111 = sadd.s32 %s110, 1
      %s112 = scalar_select %p109, %s110, %s111
      %p115 = pneg %p109
      %p116 = scmp.eq.s32.totalorder %s16, 5
      %p117 = por %p115, %p116
      %p118 = scmp.ne.s32.totalorder %s110, %s113
      %p119 = scmp.eq.s32.totalorder %s16, 0
      %p120 = por %p118, %p119
      %p121 = scmp.ne.s32.totalorder %s110, %s113
      %p122 = scmp.eq.s32.totalorder %s21, 5
      %p123 = por %p121, %p122
      %p124 = scmp.ne.s32.totalorder %s113, %s114
      %p125 = scmp.eq.s32.totalorder %s21, 0
      %p126 = por %p124, %p125
      %p127 = scmp.ne.s32.totalorder %s113, %s114
      %p128 = scmp.eq.s32.totalorder %s22, 5
      %p129 = por %p127, %p128
      %p131 = scmp.ne.s32.totalorder %s114, %s130
      %p132 = scmp.eq.s32.totalorder %s22, 0
      %p133 = por %p131, %p132
      %s134 = ssub.s32 %s23, %s35
      %s135 = ssub.s32 %s24, %s31
      %s136 = sor.u32 %s134, %s135
      %p137 = scmp.eq.s32.totalorder %s136, 0
      %s139 = sadd.s32 %s138, 1
      %s140 = scalar_select %p137, %s138, %s139
      %p143 = pneg %p137
      %p144 = scmp.eq.s32.totalorder %s16, 5
      %p145 = por %p143, %p144
      %p146 = scmp.ne.s32.totalorder %s138, %s141
      %p147 = scmp.eq.s32.totalorder %s16, 0
      %p148 = por %p146, %p147
      %p149 = scmp.ne.s32.totalorder %s138, %s141
      %p150 = scmp.eq.s32.totalorder %s21, 5
      %p151 = por %p149, %p150
      %p152 = scmp.ne.s32.totalorder %s141, %s142
      %p153 = scmp.eq.s32.totalorder %s21, 0
      %p154 = por %p152, %p153
      %p155 = scmp.ne.s32.totalorder %s141, %s142
      %p156 = scmp.eq.s32.totalorder %s22, 5
      %p157 = por %p155, %p156
      %p159 = scmp.ne.s32.totalorder %s142, %s158
      %p160 = scmp.eq.s32.totalorder %s22, 0
      %p161 = por %p159, %p160
      %s162 = smul.u32 %s23, %s24
      %s163 = smul.u32 %s35, %s31
      %s164 = ssub.s32 %s162, %s163
      %p165 = scmp.eq.s32.totalorder %s164, 0
      %s167 = sadd.s32 %s166, 1
      %s168 = scalar_select %p165, %s166, %s167
      %p171 = pneg %p165
      %p172 = scmp.eq.s32.totalorder %s16, 5
      %p173 = por %p171, %p172
      %p174 = scmp.ne.s32.totalorder %s166, %s169
      %p175 = scmp.eq.s32.totalorder %s16, 0
      %p176 = por %p174, %p175
      %p177 = scmp.ne.s32.totalorder %s166, %s169
      %p178 = scmp.eq.s32.totalorder %s21, 5
      %p179 = por %p177, %p178
      %p180 = scmp.ne.s32.totalorder %s169, %s170
      %p181 = scmp.eq.s32.totalorder %s21, 0
      %p182 = por %p180, %p181
      %p183 = scmp.ne.s32.totalorder %s169, %s170
      %p184 = scmp.eq.s32.totalorder %s22, 5
      %p185 = por %p183, %p184
      %p187 = scmp.ne.s32.totalorder %s170, %s186
      %p188 = scmp.eq.s32.totalorder %s22, 0
      %p189 = por %p187, %p188
      %p190 = scmp.le.s32.totalorder 1, %s16
      %p191 = scmp.lt.s32.totalorder %s16, 7
      %p192 = pnand %p190, %p191
      %p193 = pneg %p192
      // Predicated region
      $region9: #{tpu_custom_call.1} parent=5 // pred_check
        _
      $region10: #{tpu_custom_call.1} parent=5 // pred_check_branch
        %195 = sbr.rel (%p192) target = $region12
      $region11: #{tpu_custom_call.1} parent=5 // pred_region
        %s196 = ssub.s32 %s16, 1
        // Predicated region
        $region13: #{tpu_custom_call.1} parent=11 // pred_check
          %p197 = pneg %p49
        $region14: #{tpu_custom_call.1} parent=11 // pred_check_branch
          %199 = sbr.rel (%p197) target = $region16
        $region15: #{tpu_custom_call.1} parent=11 // pred_region
          %201 = vsyncadd [#allocation4], 0
          %s202 = sshll.u32 %s0, 4
          %s203 = int_to_ptr.hbm [resolvable:$true] %s202
          %s204 = sshll.u32 [#allocation3], 4
          %s205 = int_to_ptr.vmem [resolvable:$true] %s204
          %210 = dma.hbm_to_vmem [thread:$0]  %s203, 1024, %s205, [#allocation4], 64, 64, 4
        $region16: #{tpu_custom_call.1} parent=11 // pred_fallthru
          _
        // Predicated region
        $region17: #{tpu_custom_call.1} parent=11 // pred_check
          %p211 = pneg %p70
        $region18: #{tpu_custom_call.1} parent=11 // pred_check_branch
          %213 = sbr.rel (%p211) target = $region20
        $region19: #{tpu_custom_call.1} parent=11 // pred_region
          %215 = vsyncadd [#allocation7], 0
          %s216 = sshll.u32 %s1, 4
          %s217 = int_to_ptr.hbm [resolvable:$true] %s216
          %s218 = sshll.u32 [#allocation6], 4
          %s219 = int_to_ptr.vmem [resolvable:$true] %s218
          %224 = dma.hbm_to_vmem [thread:$0]  %s217, 6144, %s219, [#allocation7], 384, 384, 24
        $region20: #{tpu_custom_call.1} parent=11 // pred_fallthru
          _
      $region12: #{tpu_custom_call.1} parent=5 // pred_fallthru
        _
      %p225 = scmp.lt.s32.totalorder %s16, 6
      // Predicated region
      $region21: #{tpu_custom_call.1} parent=5 // pred_check
        %p226 = pneg %p225
      $region22: #{tpu_custom_call.1} parent=5 // pred_check_branch
        %228 = sbr.rel (%p226) target = $region24
      $region23: #{tpu_custom_call.1} parent=5 // pred_region
        // Predicated region
        $region25: #{tpu_custom_call.1} parent=23 // pred_check
          %p229 = pneg %p92
        $region26: #{tpu_custom_call.1} parent=23 // pred_check_branch
          %231 = sbr.rel (%p229) target = $region28
        $region27: #{tpu_custom_call.1} parent=23 // pred_region
          %s232 = sand.u32 %s16, 1
          %s233 = scalar_lea.sflag [#allocation4], %s232
          %s234 = sand.u32 %s82, 1
          %s235 = smul.addr %s234, 768
          %s236 = scalar_lea.vmem [#allocation8], %s235
          %s237 = smul.u32 2, %s24
          %239 = vsyncadd %s233, 0
          %s240 = smul.addr %s23, 576
          %s241 = sadd.s32 %s237, %s240
          %s242 = smul.addr %s241, 4
          %s243 = scalar_lea.hbm %s2, %s242
          %s244 = sshll.u32 %s243, 4
          %s245 = int_to_ptr.hbm [resolvable:$true] %s244
          %s246 = sshll.u32 %s236, 4
          %s247 = int_to_ptr.vmem [resolvable:$true] %s246
          %252 = dma.hbm_to_vmem [thread:$0]  %s245, 12288, %s247, %s233, 384, 128, 8
        $region28: #{tpu_custom_call.1} parent=23 // pred_fallthru
          _
        // Predicated region
        $region29: #{tpu_custom_call.1} parent=23 // pred_check
          %p253 = pneg %p120
        $region30: #{tpu_custom_call.1} parent=23 // pred_check_branch
          %255 = sbr.rel (%p253) target = $region32
        $region31: #{tpu_custom_call.1} parent=23 // pred_region
          %s256 = sand.u32 %s16, 1
          %s257 = scalar_lea.sflag [#allocation4], %s256
          %s258 = sand.u32 %s110, 1
          %s259 = smul.addr %s258, 768
          %s260 = scalar_lea.vmem [#allocation9], %s259
          %s261 = smul.u32 2, %s24
          %263 = vsyncadd %s257, 0
          %s264 = smul.addr %s23, 576
          %s265 = sadd.s32 %s261, %s264
          %s266 = smul.addr %s265, 4
          %s267 = scalar_lea.hbm %s3, %s266
          %s268 = sshll.u32 %s267, 4
          %s269 = int_to_ptr.hbm [resolvable:$true] %s268
          %s270 = sshll.u32 %s260, 4
          %s271 = int_to_ptr.vmem [resolvable:$true] %s270
          %276 = dma.hbm_to_vmem [thread:$0]  %s269, 12288, %s271, %s257, 384, 128, 8
        $region32: #{tpu_custom_call.1} parent=23 // pred_fallthru
          _
        // Predicated region
        $region33: #{tpu_custom_call.1} parent=23 // pred_check
          %p277 = pneg %p148
        $region34: #{tpu_custom_call.1} parent=23 // pred_check_branch
          %279 = sbr.rel (%p277) target = $region36
        $region35: #{tpu_custom_call.1} parent=23 // pred_region
          %s280 = sand.u32 %s16, 1
          %s281 = scalar_lea.sflag [#allocation4], %s280
          %s282 = sand.u32 %s138, 1
          %s283 = smul.addr %s282, 2
          %s284 = scalar_lea.vmem [#allocation10], %s283
          %s285 = smul.u32 2, %s24
          %287 = vsyncadd %s281, 0
          %s288 = smul.addr %s23, 6
          %s289 = sadd.s32 %s285, %s288
          %s290 = scalar_lea.hbm %s4, %s289
          %s292 = sshll.u32 %s290, 4
          %s293 = int_to_ptr.hbm [resolvable:$true] %s292
          %s294 = sshll.u32 %s284, 4
          %s295 = int_to_ptr.vmem [resolvable:$true] %s294
          %297 = dma.hbm_to_vmem [thread:$0]  %s293, 32, %s295, %s281
        $region36: #{tpu_custom_call.1} parent=23 // pred_fallthru
          _
      $region24: #{tpu_custom_call.1} parent=5 // pred_fallthru
        _
      %p298 = scmp.le.s32.totalorder 1, %s16
      %p299 = scmp.lt.s32.totalorder %s16, 7
      %p300 = pnand %p298, %p299
      %p301 = pneg %p300
      // Predicated region
      $region37: #{tpu_custom_call.1} parent=5 // pred_check
        _
      $region38: #{tpu_custom_call.1} parent=5 // pred_check_branch
        %303 = sbr.rel (%p300) target = $region40
      $region39: #{tpu_custom_call.1} parent=5 // pred_region
        %s304 = ssub.s32 %s16, 1
        // Predicated region
        $region41: #{tpu_custom_call.1} parent=39 // pred_check
          %p305 = pneg %p49
        $region42: #{tpu_custom_call.1} parent=39 // pred_check_branch
          %307 = sbr.rel (%p305) target = $region44
        $region43: #{tpu_custom_call.1} parent=39 // pred_region
          %309 = dma.done [#allocation4], 1024
        $region44: #{tpu_custom_call.1} parent=39 // pred_fallthru
          _
        // Predicated region
        $region45: #{tpu_custom_call.1} parent=39 // pred_check
          %p310 = pneg %p70
        $region46: #{tpu_custom_call.1} parent=39 // pred_check_branch
          %312 = sbr.rel (%p310) target = $region48
        $region47: #{tpu_custom_call.1} parent=39 // pred_region
          %314 = dma.done [#allocation7], 6144
        $region48: #{tpu_custom_call.1} parent=39 // pred_fallthru
          _
        %s315 = sand.u32 %s21, 1
        %s316 = scalar_lea.sflag [#allocation4], %s315
        %s317 = sand.u32 %s85, 1
        %s318 = smul.addr %s317, 768
        %s319 = scalar_lea.vmem [#allocation8], %s318
        // Predicated region
        $region49: #{tpu_custom_call.1} parent=39 // pred_check
          %p320 = pneg %p98
        $region50: #{tpu_custom_call.1} parent=39 // pred_check_branch
          %322 = sbr.rel (%p320) target = $region52
        $region51: #{tpu_custom_call.1} parent=39 // pred_region
          %324 = dma.done %s316, 12288
        $region52: #{tpu_custom_call.1} parent=39 // pred_fallthru
          _
        %s325 = sand.u32 %s21, 1
        %s326 = scalar_lea.sflag [#allocation4], %s325
        %s327 = sand.u32 %s113, 1
        %s328 = smul.addr %s327, 768
        %s329 = scalar_lea.vmem [#allocation9], %s328
        // Predicated region
        $region53: #{tpu_custom_call.1} parent=39 // pred_check
          %p330 = pneg %p126
        $region54: #{tpu_custom_call.1} parent=39 // pred_check_branch
          %332 = sbr.rel (%p330) target = $region56
        $region55: #{tpu_custom_call.1} parent=39 // pred_region
          %334 = dma.done %s326, 12288
        $region56: #{tpu_custom_call.1} parent=39 // pred_fallthru
          _
        %s335 = sand.u32 %s21, 1
        %s336 = scalar_lea.sflag [#allocation4], %s335
        %s337 = sand.u32 %s141, 1
        %s338 = smul.addr %s337, 2
        %s339 = scalar_lea.vmem [#allocation10], %s338
        // Predicated region
        $region57: #{tpu_custom_call.1} parent=39 // pred_check
          %p340 = pneg %p154
        $region58: #{tpu_custom_call.1} parent=39 // pred_check_branch
          %342 = sbr.rel (%p340) target = $region60
        $region59: #{tpu_custom_call.1} parent=39 // pred_region
          %344 = dma.done %s336, 32
        $region60: #{tpu_custom_call.1} parent=39 // pred_fallthru
          _
        %p345 = pneg %p49
        %p346 = pneg %p46
        %p347 = pneg %p70
        %p348 = pneg %p67
        %s349 = sand.u32 %s21, 1
        %s350 = scalar_lea.sflag [#allocation4], %s349
        %s351 = sand.u32 %s85, 1
        %s352 = smul.addr %s351, 768
        %s353 = scalar_lea.vmem [#allocation8], %s352
        %p354 = pneg %p98
        %p355 = pneg %p95
        %s356 = sand.u32 %s21, 1
        %s357 = scalar_lea.sflag [#allocation4], %s356
        %s358 = sand.u32 %s113, 1
        %s359 = smul.addr %s358, 768
        %s360 = scalar_lea.vmem [#allocation9], %s359
        %p361 = pneg %p126
        %p362 = pneg %p123
        %s363 = sand.u32 %s21, 1
        %s364 = scalar_lea.sflag [#allocation4], %s363
        %s365 = sand.u32 %s141, 1
        %s366 = smul.addr %s365, 2
        %s367 = scalar_lea.vmem [#allocation10], %s366
        %p368 = pneg %p154
        %p369 = pneg %p151
        %p370 = pneg %p182
        %p371 = pneg %p179
        %s372 = sand.u32 %s169, 1
        %s373 = scalar_lea.sflag [#allocation5], %s372
        %s374 = sand.u32 %s169, 1
        %s375 = smul.addr %s374, 128
        %s376 = scalar_lea.vmem [#allocation11], %s375
        %s377 = smul.u32 2, %s26
        %s378 = smul.u32 2, %s26
        %s379 = smul.u32 2, %s26
        %s380 = smul.u32 %s25, %s26
        %s381 = smul.u32 2, %s380
        %v382 = vld [vmem:[#allocation3] sm:$0xf]
        %v383 = vld [vmem:[#allocation3 + $0x4] sm:$0xf]
        %v384 = vld [vmem:[#allocation3 + $0x8] sm:$0xf]
        %v385 = vld [vmem:[#allocation3 + $0xc] sm:$0xf]
        %v386 = vld [vmem:[#allocation3 + $0x10] sm:$0xf]
        %v387 = vld [vmem:[#allocation3 + $0x14] sm:$0xf]
        %v388 = vld [vmem:[#allocation3 + $0x18] sm:$0xf]
        %v389 = vld [vmem:[#allocation3 + $0x1c] sm:$0xf]
        %v390 = vld [vmem:[#allocation3 + $0x20] sm:$0xf]
        %v391 = vld [vmem:[#allocation3 + $0x24] sm:$0xf]
        %v392 = vld [vmem:[#allocation3 + $0x28] sm:$0xf]
        %v393 = vld [vmem:[#allocation3 + $0x2c] sm:$0xf]
        %v394 = vld [vmem:[#allocation3 + $0x30] sm:$0xf]
        %v395 = vld [vmem:[#allocation3 + $0x34] sm:$0xf]
        %v396 = vld [vmem:[#allocation3 + $0x38] sm:$0xf]
        %v397 = vld [vmem:[#allocation3 + $0x3c] sm:$0xf]
        %p398 = scmp.eq.s32.totalorder %s25, 0
        // Predicated region
        $region61: #{tpu_custom_call.1} parent=39 // pred_check
          %p399 = pneg %p398
        $region62: #{tpu_custom_call.1} parent=39 // pred_check_branch
          %401 = sbr.rel (%p399) target = $region64
        $region63: #{tpu_custom_call.1} parent=39 // pred_region
          %v402 = vld [vmem:[#allocation6] sm:$0xff]
          %v403 = vld [vmem:[#allocation6 + $0x8] sm:$0xff]
          %v404 = vld [vmem:[#allocation6 + $0x10] sm:$0xff]
          %v405 = vld [vmem:[#allocation6 + $0x18] sm:$0xff]
          %v406 = vld [vmem:[#allocation6 + $0x20] sm:$0xff]
          %v407 = vld [vmem:[#allocation6 + $0x28] sm:$0xff]
          %v408 = vld [vmem:[#allocation6 + $0x30] sm:$0xff]
          %v409 = vld [vmem:[#allocation6 + $0x38] sm:$0xff]
          %v410 = vld [vmem:[#allocation6 + $0x40] sm:$0xff]
          %v411 = vld [vmem:[#allocation6 + $0x48] sm:$0xff]
          %v412 = vld [vmem:[#allocation6 + $0x50] sm:$0xff]
          %v413 = vld [vmem:[#allocation6 + $0x58] sm:$0xff]
          %v414 = vld [vmem:[#allocation6 + $0x60] sm:$0xff]
          %v415 = vld [vmem:[#allocation6 + $0x68] sm:$0xff]
          %v416 = vld [vmem:[#allocation6 + $0x70] sm:$0xff]
          %v417 = vld [vmem:[#allocation6 + $0x78] sm:$0xff]
          %v418 = vld [vmem:[#allocation6 + $0x80] sm:$0xff]
          %v419 = vld [vmem:[#allocation6 + $0x88] sm:$0xff]
          %v420 = vld [vmem:[#allocation6 + $0x90] sm:$0xff]
          %v421 = vld [vmem:[#allocation6 + $0x98] sm:$0xff]
          %v422 = vld [vmem:[#allocation6 + $0xa0] sm:$0xff]
          %v423 = vld [vmem:[#allocation6 + $0xa8] sm:$0xff]
          %v424 = vld [vmem:[#allocation6 + $0xb0] sm:$0xff]
          %v425 = vld [vmem:[#allocation6 + $0xb8] sm:$0xff]
          %v426 = vld [vmem:[#allocation6 + $0xc0] sm:$0xff]
          %v427 = vld [vmem:[#allocation6 + $0xc8] sm:$0xff]
          %v428 = vld [vmem:[#allocation6 + $0xd0] sm:$0xff]
          %v429 = vld [vmem:[#allocation6 + $0xd8] sm:$0xff]
          %v430 = vld [vmem:[#allocation6 + $0xe0] sm:$0xff]
          %v431 = vld [vmem:[#allocation6 + $0xe8] sm:$0xff]
          %v432 = vld [vmem:[#allocation6 + $0xf0] sm:$0xff]
          %v433 = vld [vmem:[#allocation6 + $0xf8] sm:$0xff]
          %v434 = vld [vmem:[#allocation6 + $0x100] sm:$0xff]
          %v435 = vld [vmem:[#allocation6 + $0x108] sm:$0xff]
          %v436 = vld [vmem:[#allocation6 + $0x110] sm:$0xff]
          %v437 = vld [vmem:[#allocation6 + $0x118] sm:$0xff]
          %v438 = vld [vmem:[#allocation6 + $0x120] sm:$0xff]
          %v439 = vld [vmem:[#allocation6 + $0x128] sm:$0xff]
          %v440 = vld [vmem:[#allocation6 + $0x130] sm:$0xff]
          %v441 = vld [vmem:[#allocation6 + $0x138] sm:$0xff]
          %v442 = vld [vmem:[#allocation6 + $0x140] sm:$0xff]
          %v443 = vld [vmem:[#allocation6 + $0x148] sm:$0xff]
          %v444 = vld [vmem:[#allocation6 + $0x150] sm:$0xff]
          %v445 = vld [vmem:[#allocation6 + $0x158] sm:$0xff]
          %v446 = vld [vmem:[#allocation6 + $0x160] sm:$0xff]
          %v447 = vld [vmem:[#allocation6 + $0x168] sm:$0xff]
          %v448 = vld [vmem:[#allocation6 + $0x170] sm:$0xff]
          %v449 = vld [vmem:[#allocation6 + $0x178] sm:$0xff]
          %v450 = vld [vmem:[%s319] sm:$0xff]
          %v451 = vld [vmem:[%s319 + $0x8] sm:$0xff]
          %v452 = vld [vmem:[%s319 + $0x10] sm:$0xff]
          %v453 = vld [vmem:[%s319 + $0x18] sm:$0xff]
          %v454 = vld [vmem:[%s319 + $0x20] sm:$0xff]
          %v455 = vld [vmem:[%s319 + $0x28] sm:$0xff]
          %v456 = vld [vmem:[%s319 + $0x30] sm:$0xff]
          %v457 = vld [vmem:[%s319 + $0x38] sm:$0xff]
          %v458 = vld [vmem:[%s319 + $0x40] sm:$0xff]
          %v459 = vld [vmem:[%s319 + $0x48] sm:$0xff]
          %v460 = vld [vmem:[%s319 + $0x50] sm:$0xff]
          %v461 = vld [vmem:[%s319 + $0x58] sm:$0xff]
          %v462 = vld [vmem:[%s319 + $0x60] sm:$0xff]
          %v463 = vld [vmem:[%s319 + $0x68] sm:$0xff]
          %v464 = vld [vmem:[%s319 + $0x70] sm:$0xff]
          %v465 = vld [vmem:[%s319 + $0x78] sm:$0xff]
          %v466 = vld [vmem:[%s319 + $0x80] sm:$0xff]
          %v467 = vld [vmem:[%s319 + $0x88] sm:$0xff]
          %v468 = vld [vmem:[%s319 + $0x90] sm:$0xff]
          %v469 = vld [vmem:[%s319 + $0x98] sm:$0xff]
          %v470 = vld [vmem:[%s319 + $0xa0] sm:$0xff]
          %v471 = vld [vmem:[%s319 + $0xa8] sm:$0xff]
          %v472 = vld [vmem:[%s319 + $0xb0] sm:$0xff]
          %v473 = vld [vmem:[%s319 + $0xb8] sm:$0xff]
          %v474 = vld [vmem:[%s319 + $0xc0] sm:$0xff]
          %v475 = vld [vmem:[%s319 + $0xc8] sm:$0xff]
          %v476 = vld [vmem:[%s319 + $0xd0] sm:$0xff]
          %v477 = vld [vmem:[%s319 + $0xd8] sm:$0xff]
          %v478 = vld [vmem:[%s319 + $0xe0] sm:$0xff]
          %v479 = vld [vmem:[%s319 + $0xe8] sm:$0xff]
          %v480 = vld [vmem:[%s319 + $0xf0] sm:$0xff]
          %v481 = vld [vmem:[%s319 + $0xf8] sm:$0xff]
          %v482 = vld [vmem:[%s319 + $0x100] sm:$0xff]
          %v483 = vld [vmem:[%s319 + $0x108] sm:$0xff]
          %v484 = vld [vmem:[%s319 + $0x110] sm:$0xff]
          %v485 = vld [vmem:[%s319 + $0x118] sm:$0xff]
          %v486 = vld [vmem:[%s319 + $0x120] sm:$0xff]
          %v487 = vld [vmem:[%s319 + $0x128] sm:$0xff]
          %v488 = vld [vmem:[%s319 + $0x130] sm:$0xff]
          %v489 = vld [vmem:[%s319 + $0x138] sm:$0xff]
          %v490 = vld [vmem:[%s319 + $0x140] sm:$0xff]
          %v491 = vld [vmem:[%s319 + $0x148] sm:$0xff]
          %v492 = vld [vmem:[%s319 + $0x150] sm:$0xff]
          %v493 = vld [vmem:[%s319 + $0x158] sm:$0xff]
          %v494 = vld [vmem:[%s319 + $0x160] sm:$0xff]
          %v495 = vld [vmem:[%s319 + $0x168] sm:$0xff]
          %v496 = vld [vmem:[%s319 + $0x170] sm:$0xff]
          %v497 = vld [vmem:[%s319 + $0x178] sm:$0xff]
          %v498 = vld [vmem:[%s319 + $0x180] sm:$0xff]
          %v499 = vld [vmem:[%s319 + $0x188] sm:$0xff]
          %v500 = vld [vmem:[%s319 + $0x190] sm:$0xff]
          %v501 = vld [vmem:[%s319 + $0x198] sm:$0xff]
          %v502 = vld [vmem:[%s319 + $0x1a0] sm:$0xff]
          %v503 = vld [vmem:[%s319 + $0x1a8] sm:$0xff]
          %v504 = vld [vmem:[%s319 + $0x1b0] sm:$0xff]
          %v505 = vld [vmem:[%s319 + $0x1b8] sm:$0xff]
          %v506 = vld [vmem:[%s319 + $0x1c0] sm:$0xff]
          %v507 = vld [vmem:[%s319 + $0x1c8] sm:$0xff]
          %v508 = vld [vmem:[%s319 + $0x1d0] sm:$0xff]
          %v509 = vld [vmem:[%s319 + $0x1d8] sm:$0xff]
          %v510 = vld [vmem:[%s319 + $0x1e0] sm:$0xff]
          %v511 = vld [vmem:[%s319 + $0x1e8] sm:$0xff]
          %v512 = vld [vmem:[%s319 + $0x1f0] sm:$0xff]
          %v513 = vld [vmem:[%s319 + $0x1f8] sm:$0xff]
          %v514 = vld [vmem:[%s319 + $0x200] sm:$0xff]
          %v515 = vld [vmem:[%s319 + $0x208] sm:$0xff]
          %v516 = vld [vmem:[%s319 + $0x210] sm:$0xff]
          %v517 = vld [vmem:[%s319 + $0x218] sm:$0xff]
          %v518 = vld [vmem:[%s319 + $0x220] sm:$0xff]
          %v519 = vld [vmem:[%s319 + $0x228] sm:$0xff]
          %v520 = vld [vmem:[%s319 + $0x230] sm:$0xff]
          %v521 = vld [vmem:[%s319 + $0x238] sm:$0xff]
          %v522 = vld [vmem:[%s319 + $0x240] sm:$0xff]
          %v523 = vld [vmem:[%s319 + $0x248] sm:$0xff]
          %v524 = vld [vmem:[%s319 + $0x250] sm:$0xff]
          %v525 = vld [vmem:[%s319 + $0x258] sm:$0xff]
          %v526 = vld [vmem:[%s319 + $0x260] sm:$0xff]
          %v527 = vld [vmem:[%s319 + $0x268] sm:$0xff]
          %v528 = vld [vmem:[%s319 + $0x270] sm:$0xff]
          %v529 = vld [vmem:[%s319 + $0x278] sm:$0xff]
          %v530 = vld [vmem:[%s319 + $0x280] sm:$0xff]
          %v531 = vld [vmem:[%s319 + $0x288] sm:$0xff]
          %v532 = vld [vmem:[%s319 + $0x290] sm:$0xff]
          %v533 = vld [vmem:[%s319 + $0x298] sm:$0xff]
          %v534 = vld [vmem:[%s319 + $0x2a0] sm:$0xff]
          %v535 = vld [vmem:[%s319 + $0x2a8] sm:$0xff]
          %v536 = vld [vmem:[%s319 + $0x2b0] sm:$0xff]
          %v537 = vld [vmem:[%s319 + $0x2b8] sm:$0xff]
          %v538 = vld [vmem:[%s319 + $0x2c0] sm:$0xff]
          %v539 = vld [vmem:[%s319 + $0x2c8] sm:$0xff]
          %v540 = vld [vmem:[%s319 + $0x2d0] sm:$0xff]
          %v541 = vld [vmem:[%s319 + $0x2d8] sm:$0xff]
          %v542 = vld [vmem:[%s319 + $0x2e0] sm:$0xff]
          %v543 = vld [vmem:[%s319 + $0x2e8] sm:$0xff]
          %v544 = vld [vmem:[%s319 + $0x2f0] sm:$0xff]
          %v545 = vld [vmem:[%s319 + $0x2f8] sm:$0xff]
          %v594 = vunpack.c.l.b16 %v402
          %v595 = vunpack.c.h.b16 %v402
          %v596 = vunpack.c.l.b16 %v403
          %v597 = vunpack.c.h.b16 %v403
          %v598 = vunpack.c.l.b16 %v404
          %v599 = vunpack.c.h.b16 %v404
          %v600 = vunpack.c.l.b16 %v405
          %v601 = vunpack.c.h.b16 %v405
          %v602 = vunpack.c.l.b16 %v406
          %v603 = vunpack.c.h.b16 %v406
          %v604 = vunpack.c.l.b16 %v407
          %v605 = vunpack.c.h.b16 %v407
          %v606 = vunpack.c.l.b16 %v408
          %v607 = vunpack.c.h.b16 %v408
          %v608 = vunpack.c.l.b16 %v409
          %v609 = vunpack.c.h.b16 %v409
          %v610 = vunpack.c.l.b16 %v410
          %v611 = vunpack.c.h.b16 %v410
          %v612 = vunpack.c.l.b16 %v411
          %v613 = vunpack.c.h.b16 %v411
          %v614 = vunpack.c.l.b16 %v412
          %v615 = vunpack.c.h.b16 %v412
          %v616 = vunpack.c.l.b16 %v413
          %v617 = vunpack.c.h.b16 %v413
          %v618 = vunpack.c.l.b16 %v414
          %v619 = vunpack.c.h.b16 %v414
          %v620 = vunpack.c.l.b16 %v415
          %v621 = vunpack.c.h.b16 %v415
          %v622 = vunpack.c.l.b16 %v416
          %v623 = vunpack.c.h.b16 %v416
          %v624 = vunpack.c.l.b16 %v417
          %v625 = vunpack.c.h.b16 %v417
          %v626 = vunpack.c.l.b16 %v418
          %v627 = vunpack.c.h.b16 %v418
          %v628 = vunpack.c.l.b16 %v419
          %v629 = vunpack.c.h.b16 %v419
          %v630 = vunpack.c.l.b16 %v420
          %v631 = vunpack.c.h.b16 %v420
          %v632 = vunpack.c.l.b16 %v421
          %v633 = vunpack.c.h.b16 %v421
          %v634 = vunpack.c.l.b16 %v422
          %v635 = vunpack.c.h.b16 %v422
          %v636 = vunpack.c.l.b16 %v423
          %v637 = vunpack.c.h.b16 %v423
          %v638 = vunpack.c.l.b16 %v424
          %v639 = vunpack.c.h.b16 %v424
          %v640 = vunpack.c.l.b16 %v425
          %v641 = vunpack.c.h.b16 %v425
          %v642 = vunpack.c.l.b16 %v426
          %v643 = vunpack.c.h.b16 %v426
          %v644 = vunpack.c.l.b16 %v427
          %v645 = vunpack.c.h.b16 %v427
          %v646 = vunpack.c.l.b16 %v428
          %v647 = vunpack.c.h.b16 %v428
          %v648 = vunpack.c.l.b16 %v429
          %v649 = vunpack.c.h.b16 %v429
          %v650 = vunpack.c.l.b16 %v430
          %v651 = vunpack.c.h.b16 %v430
          %v652 = vunpack.c.l.b16 %v431
          %v653 = vunpack.c.h.b16 %v431
          %v654 = vunpack.c.l.b16 %v432
          %v655 = vunpack.c.h.b16 %v432
          %v656 = vunpack.c.l.b16 %v433
          %v657 = vunpack.c.h.b16 %v433
          %v658 = vunpack.c.l.b16 %v434
          %v659 = vunpack.c.h.b16 %v434
          %v660 = vunpack.c.l.b16 %v435
          %v661 = vunpack.c.h.b16 %v435
          %v662 = vunpack.c.l.b16 %v436
          %v663 = vunpack.c.h.b16 %v436
          %v664 = vunpack.c.l.b16 %v437
          %v665 = vunpack.c.h.b16 %v437
          %v666 = vunpack.c.l.b16 %v438
          %v667 = vunpack.c.h.b16 %v438
          %v668 = vunpack.c.l.b16 %v439
          %v669 = vunpack.c.h.b16 %v439
          %v670 = vunpack.c.l.b16 %v440
          %v671 = vunpack.c.h.b16 %v440
          %v672 = vunpack.c.l.b16 %v441
          %v673 = vunpack.c.h.b16 %v441
          %v674 = vunpack.c.l.b16 %v442
          %v675 = vunpack.c.h.b16 %v442
          %v676 = vunpack.c.l.b16 %v443
          %v677 = vunpack.c.h.b16 %v443
          %v678 = vunpack.c.l.b16 %v444
          %v679 = vunpack.c.h.b16 %v444
          %v680 = vunpack.c.l.b16 %v445
          %v681 = vunpack.c.h.b16 %v445
          %v682 = vunpack.c.l.b16 %v446
          %v683 = vunpack.c.h.b16 %v446
          %v684 = vunpack.c.l.b16 %v447
          %v685 = vunpack.c.h.b16 %v447
          %v686 = vunpack.c.l.b16 %v448
          %v687 = vunpack.c.h.b16 %v448
          %v688 = vunpack.c.l.b16 %v449
          %v689 = vunpack.c.h.b16 %v449
          %v690 = vpack.c.b16 %v600, %v594
          %v691 = vpack.c.b16 %v601, %v595
          %v692 = vpack.c.b16 %v602, %v596
          %v693 = vpack.c.b16 %v603, %v597
          %v694 = vpack.c.b16 %v604, %v598
          %v695 = vpack.c.b16 %v605, %v599
          %v696 = vpack.c.b16 %v612, %v606
          %v697 = vpack.c.b16 %v613, %v607
          %v698 = vpack.c.b16 %v614, %v608
          %v699 = vpack.c.b16 %v615, %v609
          %v700 = vpack.c.b16 %v616, %v610
          %v701 = vpack.c.b16 %v617, %v611
          %v702 = vpack.c.b16 %v624, %v618
          %v703 = vpack.c.b16 %v625, %v619
          %v704 = vpack.c.b16 %v626, %v620
          %v705 = vpack.c.b16 %v627, %v621
          %v706 = vpack.c.b16 %v628, %v622
          %v707 = vpack.c.b16 %v629, %v623
          %v708 = vpack.c.b16 %v636, %v630
          %v709 = vpack.c.b16 %v637, %v631
          %v710 = vpack.c.b16 %v638, %v632
          %v711 = vpack.c.b16 %v639, %v633
          %v712 = vpack.c.b16 %v640, %v634
          %v713 = vpack.c.b16 %v641, %v635
          %v714 = vpack.c.b16 %v648, %v642
          %v715 = vpack.c.b16 %v649, %v643
          %v716 = vpack.c.b16 %v650, %v644
          %v717 = vpack.c.b16 %v651, %v645
          %v718 = vpack.c.b16 %v652, %v646
          %v719 = vpack.c.b16 %v653, %v647
          %v720 = vpack.c.b16 %v660, %v654
          %v721 = vpack.c.b16 %v661, %v655
          %v722 = vpack.c.b16 %v662, %v656
          %v723 = vpack.c.b16 %v663, %v657
          %v724 = vpack.c.b16 %v664, %v658
          %v725 = vpack.c.b16 %v665, %v659
          %v726 = vpack.c.b16 %v672, %v666
          %v727 = vpack.c.b16 %v673, %v667
          %v728 = vpack.c.b16 %v674, %v668
          %v729 = vpack.c.b16 %v675, %v669
          %v730 = vpack.c.b16 %v676, %v670
          %v731 = vpack.c.b16 %v677, %v671
          %v732 = vpack.c.b16 %v684, %v678
          %v733 = vpack.c.b16 %v685, %v679
          %v734 = vpack.c.b16 %v686, %v680
          %v735 = vpack.c.b16 %v687, %v681
          %v736 = vpack.c.b16 %v688, %v682
          %v737 = vpack.c.b16 %v689, %v683
          %v882 = vunpack.c.l.b16 %v450
          %v883 = vunpack.c.h.b16 %v450
          %v884 = vunpack.c.l.b16 %v451
          %v885 = vunpack.c.h.b16 %v451
          %v886 = vunpack.c.l.b16 %v452
          %v887 = vunpack.c.h.b16 %v452
          %v888 = vunpack.c.l.b16 %v453
          %v889 = vunpack.c.h.b16 %v453
          %v890 = vunpack.c.l.b16 %v454
          %v891 = vunpack.c.h.b16 %v454
          %v892 = vunpack.c.l.b16 %v455
          %v893 = vunpack.c.h.b16 %v455
          %v894 = vunpack.c.l.b16 %v456
          %v895 = vunpack.c.h.b16 %v456
          %v896 = vunpack.c.l.b16 %v457
          %v897 = vunpack.c.h.b16 %v457
          %v898 = vunpack.c.l.b16 %v458
          %v899 = vunpack.c.h.b16 %v458
          %v900 = vunpack.c.l.b16 %v459
          %v901 = vunpack.c.h.b16 %v459
          %v902 = vunpack.c.l.b16 %v460
          %v903 = vunpack.c.h.b16 %v460
          %v904 = vunpack.c.l.b16 %v461
          %v905 = vunpack.c.h.b16 %v461
          %v906 = vunpack.c.l.b16 %v462
          %v907 = vunpack.c.h.b16 %v462
          %v908 = vunpack.c.l.b16 %v463
          %v909 = vunpack.c.h.b16 %v463
          %v910 = vunpack.c.l.b16 %v464
          %v911 = vunpack.c.h.b16 %v464
          %v912 = vunpack.c.l.b16 %v465
          %v913 = vunpack.c.h.b16 %v465
          %v914 = vunpack.c.l.b16 %v466
          %v915 = vunpack.c.h.b16 %v466
          %v916 = vunpack.c.l.b16 %v467
          %v917 = vunpack.c.h.b16 %v467
          %v918 = vunpack.c.l.b16 %v468
          %v919 = vunpack.c.h.b16 %v468
          %v920 = vunpack.c.l.b16 %v469
          %v921 = vunpack.c.h.b16 %v469
          %v922 = vunpack.c.l.b16 %v470
          %v923 = vunpack.c.h.b16 %v470
          %v924 = vunpack.c.l.b16 %v471
          %v925 = vunpack.c.h.b16 %v471
          %v926 = vunpack.c.l.b16 %v472
          %v927 = vunpack.c.h.b16 %v472
          %v928 = vunpack.c.l.b16 %v473
          %v929 = vunpack.c.h.b16 %v473
          %v930 = vunpack.c.l.b16 %v474
          %v931 = vunpack.c.h.b16 %v474
          %v932 = vunpack.c.l.b16 %v475
          %v933 = vunpack.c.h.b16 %v475
          %v934 = vunpack.c.l.b16 %v476
          %v935 = vunpack.c.h.b16 %v476
          %v936 = vunpack.c.l.b16 %v477
          %v937 = vunpack.c.h.b16 %v477
          %v938 = vunpack.c.l.b16 %v478
          %v939 = vunpack.c.h.b16 %v478
          %v940 = vunpack.c.l.b16 %v479
          %v941 = vunpack.c.h.b16 %v479
          %v942 = vunpack.c.l.b16 %v480
          %v943 = vunpack.c.h.b16 %v480
          %v944 = vunpack.c.l.b16 %v481
          %v945 = vunpack.c.h.b16 %v481
          %v946 = vunpack.c.l.b16 %v482
          %v947 = vunpack.c.h.b16 %v482
          %v948 = vunpack.c.l.b16 %v483
          %v949 = vunpack.c.h.b16 %v483
          %v950 = vunpack.c.l.b16 %v484
          %v951 = vunpack.c.h.b16 %v484
          %v952 = vunpack.c.l.b16 %v485
          %v953 = vunpack.c.h.b16 %v485
          %v954 = vunpack.c.l.b16 %v486
          %v955 = vunpack.c.h.b16 %v486
          %v956 = vunpack.c.l.b16 %v487
          %v957 = vunpack.c.h.b16 %v487
          %v958 = vunpack.c.l.b16 %v488
          %v959 = vunpack.c.h.b16 %v488
          %v960 = vunpack.c.l.b16 %v489
          %v961 = vunpack.c.h.b16 %v489
          %v962 = vunpack.c.l.b16 %v490
          %v963 = vunpack.c.h.b16 %v490
          %v964 = vunpack.c.l.b16 %v491
          %v965 = vunpack.c.h.b16 %v491
          %v966 = vunpack.c.l.b16 %v492
          %v967 = vunpack.c.h.b16 %v492
          %v968 = vunpack.c.l.b16 %v493
          %v969 = vunpack.c.h.b16 %v493
          %v970 = vunpack.c.l.b16 %v494
          %v971 = vunpack.c.h.b16 %v494
          %v972 = vunpack.c.l.b16 %v495
          %v973 = vunpack.c.h.b16 %v495
          %v974 = vunpack.c.l.b16 %v496
          %v975 = vunpack.c.h.b16 %v496
          %v976 = vunpack.c.l.b16 %v497
          %v977 = vunpack.c.h.b16 %v497
          %v978 = vunpack.c.l.b16 %v498
          %v979 = vunpack.c.h.b16 %v498
          %v980 = vunpack.c.l.b16 %v499
          %v981 = vunpack.c.h.b16 %v499
          %v982 = vunpack.c.l.b16 %v500
          %v983 = vunpack.c.h.b16 %v500
          %v984 = vunpack.c.l.b16 %v501
          %v985 = vunpack.c.h.b16 %v501
          %v986 = vunpack.c.l.b16 %v502
          %v987 = vunpack.c.h.b16 %v502
          %v988 = vunpack.c.l.b16 %v503
          %v989 = vunpack.c.h.b16 %v503
          %v990 = vunpack.c.l.b16 %v504
          %v991 = vunpack.c.h.b16 %v504
          %v992 = vunpack.c.l.b16 %v505
          %v993 = vunpack.c.h.b16 %v505
          %v994 = vunpack.c.l.b16 %v506
          %v995 = vunpack.c.h.b16 %v506
          %v996 = vunpack.c.l.b16 %v507
          %v997 = vunpack.c.h.b16 %v507
          %v998 = vunpack.c.l.b16 %v508
          %v999 = vunpack.c.h.b16 %v508
          %v1000 = vunpack.c.l.b16 %v509
          %v1001 = vunpack.c.h.b16 %v509
          %v1002 = vunpack.c.l.b16 %v510
          %v1003 = vunpack.c.h.b16 %v510
          %v1004 = vunpack.c.l.b16 %v511
          %v1005 = vunpack.c.h.b16 %v511
          %v1006 = vunpack.c.l.b16 %v512
          %v1007 = vunpack.c.h.b16 %v512
          %v1008 = vunpack.c.l.b16 %v513
          %v1009 = vunpack.c.h.b16 %v513
          %v1010 = vunpack.c.l.b16 %v514
          %v1011 = vunpack.c.h.b16 %v514
          %v1012 = vunpack.c.l.b16 %v515
          %v1013 = vunpack.c.h.b16 %v515
          %v1014 = vunpack.c.l.b16 %v516
          %v1015 = vunpack.c.h.b16 %v516
          %v1016 = vunpack.c.l.b16 %v517
          %v1017 = vunpack.c.h.b16 %v517
          %v1018 = vunpack.c.l.b16 %v518
          %v1019 = vunpack.c.h.b16 %v518
          %v1020 = vunpack.c.l.b16 %v519
          %v1021 = vunpack.c.h.b16 %v519
          %v1022 = vunpack.c.l.b16 %v520
          %v1023 = vunpack.c.h.b16 %v520
          %v1024 = vunpack.c.l.b16 %v521
          %v1025 = vunpack.c.h.b16 %v521
          %v1026 = vunpack.c.l.b16 %v522
          %v1027 = vunpack.c.h.b16 %v522
          %v1028 = vunpack.c.l.b16 %v523
          %v1029 = vunpack.c.h.b16 %v523
          %v1030 = vunpack.c.l.b16 %v524
          %v1031 = vunpack.c.h.b16 %v524
          %v1032 = vunpack.c.l.b16 %v525
          %v1033 = vunpack.c.h.b16 %v525
          %v1034 = vunpack.c.l.b16 %v526
          %v1035 = vunpack.c.h.b16 %v526
          %v1036 = vunpack.c.l.b16 %v527
          %v1037 = vunpack.c.h.b16 %v527
          %v1038 = vunpack.c.l.b16 %v528
          %v1039 = vunpack.c.h.b16 %v528
          %v1040 = vunpack.c.l.b16 %v529
          %v1041 = vunpack.c.h.b16 %v529
          %v1042 = vunpack.c.l.b16 %v530
          %v1043 = vunpack.c.h.b16 %v530
          %v1044 = vunpack.c.l.b16 %v531
          %v1045 = vunpack.c.h.b16 %v531
          %v1046 = vunpack.c.l.b16 %v532
          %v1047 = vunpack.c.h.b16 %v532
          %v1048 = vunpack.c.l.b16 %v533
          %v1049 = vunpack.c.h.b16 %v533
          %v1050 = vunpack.c.l.b16 %v534
          %v1051 = vunpack.c.h.b16 %v534
          %v1052 = vunpack.c.l.b16 %v535
          %v1053 = vunpack.c.h.b16 %v535
          %v1054 = vunpack.c.l.b16 %v536
          %v1055 = vunpack.c.h.b16 %v536
          %v1056 = vunpack.c.l.b16 %v537
          %v1057 = vunpack.c.h.b16 %v537
          %v1058 = vunpack.c.l.b16 %v538
          %v1059 = vunpack.c.h.b16 %v538
          %v1060 = vunpack.c.l.b16 %v539
          %v1061 = vunpack.c.h.b16 %v539
          %v1062 = vunpack.c.l.b16 %v540
          %v1063 = vunpack.c.h.b16 %v540
          %v1064 = vunpack.c.l.b16 %v541
          %v1065 = vunpack.c.h.b16 %v541
          %v1066 = vunpack.c.l.b16 %v542
          %v1067 = vunpack.c.h.b16 %v542
          %v1068 = vunpack.c.l.b16 %v543
          %v1069 = vunpack.c.h.b16 %v543
          %v1070 = vunpack.c.l.b16 %v544
          %v1071 = vunpack.c.h.b16 %v544
          %v1072 = vunpack.c.l.b16 %v545
          %v1073 = vunpack.c.h.b16 %v545
          %v1074 = vpack.c.b16 %v884, %v882
          %v1075 = vpack.c.b16 %v885, %v883
          %v1076 = vpack.c.b16 %v888, %v886
          %v1077 = vpack.c.b16 %v889, %v887
          %v1078 = vpack.c.b16 %v892, %v890
          %v1079 = vpack.c.b16 %v893, %v891
          %v1080 = vpack.c.b16 %v896, %v894
          %v1081 = vpack.c.b16 %v897, %v895
          %v1082 = vpack.c.b16 %v900, %v898
          %v1083 = vpack.c.b16 %v901, %v899
          %v1084 = vpack.c.b16 %v904, %v902
          %v1085 = vpack.c.b16 %v905, %v903
          %v1086 = vpack.c.b16 %v908, %v906
          %v1087 = vpack.c.b16 %v909, %v907
          %v1088 = vpack.c.b16 %v912, %v910
          %v1089 = vpack.c.b16 %v913, %v911
          %v1090 = vpack.c.b16 %v916, %v914
          %v1091 = vpack.c.b16 %v917, %v915
          %v1092 = vpack.c.b16 %v920, %v918
          %v1093 = vpack.c.b16 %v921, %v919
          %v1094 = vpack.c.b16 %v924, %v922
          %v1095 = vpack.c.b16 %v925, %v923
          %v1096 = vpack.c.b16 %v928, %v926
          %v1097 = vpack.c.b16 %v929, %v927
          %v1098 = vpack.c.b16 %v932, %v930
          %v1099 = vpack.c.b16 %v933, %v931
          %v1100 = vpack.c.b16 %v936, %v934
          %v1101 = vpack.c.b16 %v937, %v935
          %v1102 = vpack.c.b16 %v940, %v938
          %v1103 = vpack.c.b16 %v941, %v939
          %v1104 = vpack.c.b16 %v944, %v942
          %v1105 = vpack.c.b16 %v945, %v943
          %v1106 = vpack.c.b16 %v948, %v946
          %v1107 = vpack.c.b16 %v949, %v947
          %v1108 = vpack.c.b16 %v952, %v950
          %v1109 = vpack.c.b16 %v953, %v951
          %v1110 = vpack.c.b16 %v956, %v954
          %v1111 = vpack.c.b16 %v957, %v955
          %v1112 = vpack.c.b16 %v960, %v958
          %v1113 = vpack.c.b16 %v961, %v959
          %v1114 = vpack.c.b16 %v964, %v962
          %v1115 = vpack.c.b16 %v965, %v963
          %v1116 = vpack.c.b16 %v968, %v966
          %v1117 = vpack.c.b16 %v969, %v967
          %v1118 = vpack.c.b16 %v972, %v970
          %v1119 = vpack.c.b16 %v973, %v971
          %v1120 = vpack.c.b16 %v976, %v974
          %v1121 = vpack.c.b16 %v977, %v975
          %v1122 = vpack.c.b16 %v980, %v978
          %v1123 = vpack.c.b16 %v981, %v979
          %v1124 = vpack.c.b16 %v984, %v982
          %v1125 = vpack.c.b16 %v985, %v983
          %v1126 = vpack.c.b16 %v988, %v986
          %v1127 = vpack.c.b16 %v989, %v987
          %v1128 = vpack.c.b16 %v992, %v990
          %v1129 = vpack.c.b16 %v993, %v991
          %v1130 = vpack.c.b16 %v996, %v994
          %v1131 = vpack.c.b16 %v997, %v995
          %v1132 = vpack.c.b16 %v1000, %v998
          %v1133 = vpack.c.b16 %v1001, %v999
          %v1134 = vpack.c.b16 %v1004, %v1002
          %v1135 = vpack.c.b16 %v1005, %v1003
          %v1136 = vpack.c.b16 %v1008, %v1006
          %v1137 = vpack.c.b16 %v1009, %v1007
          %v1138 = vpack.c.b16 %v1012, %v1010
          %v1139 = vpack.c.b16 %v1013, %v1011
          %v1140 = vpack.c.b16 %v1016, %v1014
          %v1141 = vpack.c.b16 %v1017, %v1015
          %v1142 = vpack.c.b16 %v1020, %v1018
          %v1143 = vpack.c.b16 %v1021, %v1019
          %v1144 = vpack.c.b16 %v1024, %v1022
          %v1145 = vpack.c.b16 %v1025, %v1023
          %v1146 = vpack.c.b16 %v1028, %v1026
          %v1147 = vpack.c.b16 %v1029, %v1027
          %v1148 = vpack.c.b16 %v1032, %v1030
          %v1149 = vpack.c.b16 %v1033, %v1031
          %v1150 = vpack.c.b16 %v1036, %v1034
          %v1151 = vpack.c.b16 %v1037, %v1035
          %v1152 = vpack.c.b16 %v1040, %v1038
          %v1153 = vpack.c.b16 %v1041, %v1039
          %v1154 = vpack.c.b16 %v1044, %v1042
          %v1155 = vpack.c.b16 %v1045, %v1043
          %v1156 = vpack.c.b16 %v1048, %v1046
          %v1157 = vpack.c.b16 %v1049, %v1047
          %v1158 = vpack.c.b16 %v1052, %v1050
          %v1159 = vpack.c.b16 %v1053, %v1051
          %v1160 = vpack.c.b16 %v1056, %v1054
          %v1161 = vpack.c.b16 %v1057, %v1055
          %v1162 = vpack.c.b16 %v1060, %v1058
          %v1163 = vpack.c.b16 %v1061, %v1059
          %v1164 = vpack.c.b16 %v1064, %v1062
          %v1165 = vpack.c.b16 %v1065, %v1063
          %v1166 = vpack.c.b16 %v1068, %v1066
          %v1167 = vpack.c.b16 %v1069, %v1067
          %v1168 = vpack.c.b16 %v1072, %v1070
          %v1169 = vpack.c.b16 %v1073, %v1071
          %1266 = vmatpush.bf16.msra.mxu0 %v1088
          %1267 = vmatpush.bf16.msra.mxu0 %v1086
          %1268 = vmatpush.bf16.msra.mxu0 %v1084
          %1269 = vmatpush.bf16.msra.mxu0 %v1082
          %1270 = vmatpush.bf16.msra.mxu0 %v1080
          %1271 = vmatpush.bf16.msra.mxu0 %v1078
          %1272 = vmatpush.bf16.msra.mxu0 %v1076
          %1273 = vmatpush.bf16.msra.mxu0 %v1074
          %1274 = vmatmul.bf16.gmra.mxu0 %v690
          %v1275 = vpop.f32.mrf.mxu0
          %v1276 = vadd.f32 0.0, %v1275
          %v1277 = vpop.f32.mrf.mxu0
          %v1278 = vadd.f32 0.0, %v1277
          %1279 = vmatmul.bf16.gmra.mxu0 %v696
          %v1280 = vpop.f32.mrf.mxu0
          %v1281 = vadd.f32 0.0, %v1280
          %v1282 = vpop.f32.mrf.mxu0
          %v1283 = vadd.f32 0.0, %v1282
          %1284 = vmatmul.bf16.gmra.mxu0 %v702
          %v1285 = vpop.f32.mrf.mxu0
          %v1286 = vadd.f32 0.0, %v1285
          %v1287 = vpop.f32.mrf.mxu0
          %v1288 = vadd.f32 0.0, %v1287
          %1289 = vmatmul.bf16.gmra.mxu0 %v708
          %v1290 = vpop.f32.mrf.mxu0
          %v1291 = vadd.f32 0.0, %v1290
          %v1292 = vpop.f32.mrf.mxu0
          %v1293 = vadd.f32 0.0, %v1292
          %1294 = vmatmul.bf16.gmra.mxu0 %v714
          %v1295 = vpop.f32.mrf.mxu0
          %v1296 = vadd.f32 0.0, %v1295
          %v1297 = vpop.f32.mrf.mxu0
          %v1298 = vadd.f32 0.0, %v1297
          %1299 = vmatmul.bf16.gmra.mxu0 %v720
          %v1300 = vpop.f32.mrf.mxu0
          %v1301 = vadd.f32 0.0, %v1300
          %v1302 = vpop.f32.mrf.mxu0
          %v1303 = vadd.f32 0.0, %v1302
          %1304 = vmatmul.bf16.gmra.mxu0 %v726
          %v1305 = vpop.f32.mrf.mxu0
          %v1306 = vadd.f32 0.0, %v1305
          %v1307 = vpop.f32.mrf.mxu0
          %v1308 = vadd.f32 0.0, %v1307
          %1309 = vmatmul.bf16.gmra.mxu0 %v732
          %v1310 = vpop.f32.mrf.mxu0
          %v1311 = vadd.f32 0.0, %v1310
          %v1312 = vpop.f32.mrf.mxu0
          %v1313 = vadd.f32 0.0, %v1312
          %1314 = vdwg.mxu0
          %1315 = vmatpush.bf16.msra.mxu0 %v1104
          %1316 = vmatpush.bf16.msra.mxu0 %v1102
          %1317 = vmatpush.bf16.msra.mxu0 %v1100
          %1318 = vmatpush.bf16.msra.mxu0 %v1098
          %1319 = vmatpush.bf16.msra.mxu0 %v1096
          %1320 = vmatpush.bf16.msra.mxu0 %v1094
          %1321 = vmatpush.bf16.msra.mxu0 %v1092
          %1322 = vmatpush.bf16.msra.mxu0 %v1090
          %1323 = vmatmul.bf16.gmra.mxu0 %v691
          %v1324 = vpop.f32.mrf.mxu0
          %v1325 = vadd.f32 %v1276, %v1324
          %v1326 = vpop.f32.mrf.mxu0
          %v1327 = vadd.f32 %v1278, %v1326
          %1328 = vmatmul.bf16.gmra.mxu0 %v697
          %v1329 = vpop.f32.mrf.mxu0
          %v1330 = vadd.f32 %v1281, %v1329
          %v1331 = vpop.f32.mrf.mxu0
          %v1332 = vadd.f32 %v1283, %v1331
          %1333 = vmatmul.bf16.gmra.mxu0 %v703
          %v1334 = vpop.f32.mrf.mxu0
          %v1335 = vadd.f32 %v1286, %v1334
          %v1336 = vpop.f32.mrf.mxu0
          %v1337 = vadd.f32 %v1288, %v1336
          %1338 = vmatmul.bf16.gmra.mxu0 %v709
          %v1339 = vpop.f32.mrf.mxu0
          %v1340 = vadd.f32 %v1291, %v1339
          %v1341 = vpop.f32.mrf.mxu0
          %v1342 = vadd.f32 %v1293, %v1341
          %1343 = vmatmul.bf16.gmra.mxu0 %v715
          %v1344 = vpop.f32.mrf.mxu0
          %v1345 = vadd.f32 %v1296, %v1344
          %v1346 = vpop.f32.mrf.mxu0
          %v1347 = vadd.f32 %v1298, %v1346
          %1348 = vmatmul.bf16.gmra.mxu0 %v721
          %v1349 = vpop.f32.mrf.mxu0
          %v1350 = vadd.f32 %v1301, %v1349
          %v1351 = vpop.f32.mrf.mxu0
          %v1352 = vadd.f32 %v1303, %v1351
          %1353 = vmatmul.bf16.gmra.mxu0 %v727
          %v1354 = vpop.f32.mrf.mxu0
          %v1355 = vadd.f32 %v1306, %v1354
          %v1356 = vpop.f32.mrf.mxu0
          %v1357 = vadd.f32 %v1308, %v1356
          %1358 = vmatmul.bf16.gmra.mxu0 %v733
          %v1359 = vpop.f32.mrf.mxu0
          %v1360 = vadd.f32 %v1311, %v1359
          %v1361 = vpop.f32.mrf.mxu0
          %v1362 = vadd.f32 %v1313, %v1361
          %1363 = vdwg.mxu0
          %1364 = vmatpush.bf16.msra.mxu0 %v1120
          %1365 = vmatpush.bf16.msra.mxu0 %v1118
          %1366 = vmatpush.bf16.msra.mxu0 %v1116
          %1367 = vmatpush.bf16.msra.mxu0 %v1114
          %1368 = vmatpush.bf16.msra.mxu0 %v1112
          %1369 = vmatpush.bf16.msra.mxu0 %v1110
          %1370 = vmatpush.bf16.msra.mxu0 %v1108
          %1371 = vmatpush.bf16.msra.mxu0 %v1106
          %1372 = vmatmul.bf16.gmra.mxu0 %v692
          %v1373 = vpop.f32.mrf.mxu0
          %v1374 = vadd.f32 %v1325, %v1373
          %v1375 = vpop.f32.mrf.mxu0
          %v1376 = vadd.f32 %v1327, %v1375
          %1377 = vmatmul.bf16.gmra.mxu0 %v698
          %v1378 = vpop.f32.mrf.mxu0
          %v1379 = vadd.f32 %v1330, %v1378
          %v1380 = vpop.f32.mrf.mxu0
          %v1381 = vadd.f32 %v1332, %v1380
          %1382 = vmatmul.bf16.gmra.mxu0 %v704
          %v1383 = vpop.f32.mrf.mxu0
          %v1384 = vadd.f32 %v1335, %v1383
          %v1385 = vpop.f32.mrf.mxu0
          %v1386 = vadd.f32 %v1337, %v1385
          %1387 = vmatmul.bf16.gmra.mxu0 %v710
          %v1388 = vpop.f32.mrf.mxu0
          %v1389 = vadd.f32 %v1340, %v1388
          %v1390 = vpop.f32.mrf.mxu0
          %v1391 = vadd.f32 %v1342, %v1390
          %1392 = vmatmul.bf16.gmra.mxu0 %v716
          %v1393 = vpop.f32.mrf.mxu0
          %v1394 = vadd.f32 %v1345, %v1393
          %v1395 = vpop.f32.mrf.mxu0
          %v1396 = vadd.f32 %v1347, %v1395
          %1397 = vmatmul.bf16.gmra.mxu0 %v722
          %v1398 = vpop.f32.mrf.mxu0
          %v1399 = vadd.f32 %v1350, %v1398
          %v1400 = vpop.f32.mrf.mxu0
          %v1401 = vadd.f32 %v1352, %v1400
          %1402 = vmatmul.bf16.gmra.mxu0 %v728
          %v1403 = vpop.f32.mrf.mxu0
          %v1404 = vadd.f32 %v1355, %v1403
          %v1405 = vpop.f32.mrf.mxu0
          %v1406 = vadd.f32 %v1357, %v1405
          %1407 = vmatmul.bf16.gmra.mxu0 %v734
          %v1408 = vpop.f32.mrf.mxu0
          %v1409 = vadd.f32 %v1360, %v1408
          %v1410 = vpop.f32.mrf.mxu0
          %v1411 = vadd.f32 %v1362, %v1410
          %1412 = vdwg.mxu0
          %1413 = vmatpush.bf16.msra.mxu0 %v1136
          %1414 = vmatpush.bf16.msra.mxu0 %v1134
          %1415 = vmatpush.bf16.msra.mxu0 %v1132
          %1416 = vmatpush.bf16.msra.mxu0 %v1130
          %1417 = vmatpush.bf16.msra.mxu0 %v1128
          %1418 = vmatpush.bf16.msra.mxu0 %v1126
          %1419 = vmatpush.bf16.msra.mxu0 %v1124
          %1420 = vmatpush.bf16.msra.mxu0 %v1122
          %1421 = vmatmul.bf16.gmra.mxu0 %v693
          %v1422 = vpop.f32.mrf.mxu0
          %v1423 = vadd.f32 %v1374, %v1422
          %v1424 = vpop.f32.mrf.mxu0
          %v1425 = vadd.f32 %v1376, %v1424
          %1426 = vmatmul.bf16.gmra.mxu0 %v699
          %v1427 = vpop.f32.mrf.mxu0
          %v1428 = vadd.f32 %v1379, %v1427
          %v1429 = vpop.f32.mrf.mxu0
          %v1430 = vadd.f32 %v1381, %v1429
          %1431 = vmatmul.bf16.gmra.mxu0 %v705
          %v1432 = vpop.f32.mrf.mxu0
          %v1433 = vadd.f32 %v1384, %v1432
          %v1434 = vpop.f32.mrf.mxu0
          %v1435 = vadd.f32 %v1386, %v1434
          %1436 = vmatmul.bf16.gmra.mxu0 %v711
          %v1437 = vpop.f32.mrf.mxu0
          %v1438 = vadd.f32 %v1389, %v1437
          %v1439 = vpop.f32.mrf.mxu0
          %v1440 = vadd.f32 %v1391, %v1439
          %1441 = vmatmul.bf16.gmra.mxu0 %v717
          %v1442 = vpop.f32.mrf.mxu0
          %v1443 = vadd.f32 %v1394, %v1442
          %v1444 = vpop.f32.mrf.mxu0
          %v1445 = vadd.f32 %v1396, %v1444
          %1446 = vmatmul.bf16.gmra.mxu0 %v723
          %v1447 = vpop.f32.mrf.mxu0
          %v1448 = vadd.f32 %v1399, %v1447
          %v1449 = vpop.f32.mrf.mxu0
          %v1450 = vadd.f32 %v1401, %v1449
          %1451 = vmatmul.bf16.gmra.mxu0 %v729
          %v1452 = vpop.f32.mrf.mxu0
          %v1453 = vadd.f32 %v1404, %v1452
          %v1454 = vpop.f32.mrf.mxu0
          %v1455 = vadd.f32 %v1406, %v1454
          %1456 = vmatmul.bf16.gmra.mxu0 %v735
          %v1457 = vpop.f32.mrf.mxu0
          %v1458 = vadd.f32 %v1409, %v1457
          %v1459 = vpop.f32.mrf.mxu0
          %v1460 = vadd.f32 %v1411, %v1459
          %1461 = vdwg.mxu0
          %1462 = vmatpush.bf16.msra.mxu0 %v1152
          %1463 = vmatpush.bf16.msra.mxu0 %v1150
          %1464 = vmatpush.bf16.msra.mxu0 %v1148
          %1465 = vmatpush.bf16.msra.mxu0 %v1146
          %1466 = vmatpush.bf16.msra.mxu0 %v1144
          %1467 = vmatpush.bf16.msra.mxu0 %v1142
          %1468 = vmatpush.bf16.msra.mxu0 %v1140
          %1469 = vmatpush.bf16.msra.mxu0 %v1138
          %1470 = vmatmul.bf16.gmra.mxu0 %v694
          %v1471 = vpop.f32.mrf.mxu0
          %v1472 = vadd.f32 %v1423, %v1471
          %v1473 = vpop.f32.mrf.mxu0
          %v1474 = vadd.f32 %v1425, %v1473
          %1475 = vmatmul.bf16.gmra.mxu0 %v700
          %v1476 = vpop.f32.mrf.mxu0
          %v1477 = vadd.f32 %v1428, %v1476
          %v1478 = vpop.f32.mrf.mxu0
          %v1479 = vadd.f32 %v1430, %v1478
          %1480 = vmatmul.bf16.gmra.mxu0 %v706
          %v1481 = vpop.f32.mrf.mxu0
          %v1482 = vadd.f32 %v1433, %v1481
          %v1483 = vpop.f32.mrf.mxu0
          %v1484 = vadd.f32 %v1435, %v1483
          %1485 = vmatmul.bf16.gmra.mxu0 %v712
          %v1486 = vpop.f32.mrf.mxu0
          %v1487 = vadd.f32 %v1438, %v1486
          %v1488 = vpop.f32.mrf.mxu0
          %v1489 = vadd.f32 %v1440, %v1488
          %1490 = vmatmul.bf16.gmra.mxu0 %v718
          %v1491 = vpop.f32.mrf.mxu0
          %v1492 = vadd.f32 %v1443, %v1491
          %v1493 = vpop.f32.mrf.mxu0
          %v1494 = vadd.f32 %v1445, %v1493
          %1495 = vmatmul.bf16.gmra.mxu0 %v724
          %v1496 = vpop.f32.mrf.mxu0
          %v1497 = vadd.f32 %v1448, %v1496
          %v1498 = vpop.f32.mrf.mxu0
          %v1499 = vadd.f32 %v1450, %v1498
          %1500 = vmatmul.bf16.gmra.mxu0 %v730
          %v1501 = vpop.f32.mrf.mxu0
          %v1502 = vadd.f32 %v1453, %v1501
          %v1503 = vpop.f32.mrf.mxu0
          %v1504 = vadd.f32 %v1455, %v1503
          %1505 = vmatmul.bf16.gmra.mxu0 %v736
          %v1506 = vpop.f32.mrf.mxu0
          %v1507 = vadd.f32 %v1458, %v1506
          %v1508 = vpop.f32.mrf.mxu0
          %v1509 = vadd.f32 %v1460, %v1508
          %1510 = vdwg.mxu0
          %1511 = vmatpush.bf16.msra.mxu0 %v1168
          %1512 = vmatpush.bf16.msra.mxu0 %v1166
          %1513 = vmatpush.bf16.msra.mxu0 %v1164
          %1514 = vmatpush.bf16.msra.mxu0 %v1162
          %1515 = vmatpush.bf16.msra.mxu0 %v1160
          %1516 = vmatpush.bf16.msra.mxu0 %v1158
          %1517 = vmatpush.bf16.msra.mxu0 %v1156
          %1518 = vmatpush.bf16.msra.mxu0 %v1154
          %1519 = vmatmul.bf16.gmra.mxu0 %v695
          %v1520 = vpop.f32.mrf.mxu0
          %v1521 = vadd.f32 %v1472, %v1520
          %v1522 = vpop.f32.mrf.mxu0
          %v1523 = vadd.f32 %v1474, %v1522
          %1524 = vmatmul.bf16.gmra.mxu0 %v701
          %v1525 = vpop.f32.mrf.mxu0
          %v1526 = vadd.f32 %v1477, %v1525
          %v1527 = vpop.f32.mrf.mxu0
          %v1528 = vadd.f32 %v1479, %v1527
          %1529 = vmatmul.bf16.gmra.mxu0 %v707
          %v1530 = vpop.f32.mrf.mxu0
          %v1531 = vadd.f32 %v1482, %v1530
          %v1532 = vpop.f32.mrf.mxu0
          %v1533 = vadd.f32 %v1484, %v1532
          %1534 = vmatmul.bf16.gmra.mxu0 %v713
          %v1535 = vpop.f32.mrf.mxu0
          %v1536 = vadd.f32 %v1487, %v1535
          %v1537 = vpop.f32.mrf.mxu0
          %v1538 = vadd.f32 %v1489, %v1537
          %1539 = vmatmul.bf16.gmra.mxu0 %v719
          %v1540 = vpop.f32.mrf.mxu0
          %v1541 = vadd.f32 %v1492, %v1540
          %v1542 = vpop.f32.mrf.mxu0
          %v1543 = vadd.f32 %v1494, %v1542
          %1544 = vmatmul.bf16.gmra.mxu0 %v725
          %v1545 = vpop.f32.mrf.mxu0
          %v1546 = vadd.f32 %v1497, %v1545
          %v1547 = vpop.f32.mrf.mxu0
          %v1548 = vadd.f32 %v1499, %v1547
          %1549 = vmatmul.bf16.gmra.mxu0 %v731
          %v1550 = vpop.f32.mrf.mxu0
          %v1551 = vadd.f32 %v1502, %v1550
          %v1552 = vpop.f32.mrf.mxu0
          %v1553 = vadd.f32 %v1504, %v1552
          %1554 = vmatmul.bf16.gmra.mxu0 %v737
          %v1555 = vpop.f32.mrf.mxu0
          %v1556 = vadd.f32 %v1507, %v1555
          %v1557 = vpop.f32.mrf.mxu0
          %v1558 = vadd.f32 %v1509, %v1557
          %1559 = vdwg.mxu0
          %1560 = vmatpush.bf16.msra.mxu0 %v1089
          %1561 = vmatpush.bf16.msra.mxu0 %v1087
          %1562 = vmatpush.bf16.msra.mxu0 %v1085
          %1563 = vmatpush.bf16.msra.mxu0 %v1083
          %1564 = vmatpush.bf16.msra.mxu0 %v1081
          %1565 = vmatpush.bf16.msra.mxu0 %v1079
          %1566 = vmatpush.bf16.msra.mxu0 %v1077
          %1567 = vmatpush.bf16.msra.mxu0 %v1075
          %1568 = vmatmul.bf16.gmra.mxu0 %v690
          %v1569 = vpop.f32.mrf.mxu0
          %v1570 = vadd.f32 0.0, %v1569
          %v1571 = vpop.f32.mrf.mxu0
          %v1572 = vadd.f32 0.0, %v1571
          %1573 = vmatmul.bf16.gmra.mxu0 %v696
          %v1574 = vpop.f32.mrf.mxu0
          %v1575 = vadd.f32 0.0, %v1574
          %v1576 = vpop.f32.mrf.mxu0
          %v1577 = vadd.f32 0.0, %v1576
          %1578 = vmatmul.bf16.gmra.mxu0 %v702
          %v1579 = vpop.f32.mrf.mxu0
          %v1580 = vadd.f32 0.0, %v1579
          %v1581 = vpop.f32.mrf.mxu0
          %v1582 = vadd.f32 0.0, %v1581
          %1583 = vmatmul.bf16.gmra.mxu0 %v708
          %v1584 = vpop.f32.mrf.mxu0
          %v1585 = vadd.f32 0.0, %v1584
          %v1586 = vpop.f32.mrf.mxu0
          %v1587 = vadd.f32 0.0, %v1586
          %1588 = vmatmul.bf16.gmra.mxu0 %v714
          %v1589 = vpop.f32.mrf.mxu0
          %v1590 = vadd.f32 0.0, %v1589
          %v1591 = vpop.f32.mrf.mxu0
          %v1592 = vadd.f32 0.0, %v1591
          %1593 = vmatmul.bf16.gmra.mxu0 %v720
          %v1594 = vpop.f32.mrf.mxu0
          %v1595 = vadd.f32 0.0, %v1594
          %v1596 = vpop.f32.mrf.mxu0
          %v1597 = vadd.f32 0.0, %v1596
          %1598 = vmatmul.bf16.gmra.mxu0 %v726
          %v1599 = vpop.f32.mrf.mxu0
          %v1600 = vadd.f32 0.0, %v1599
          %v1601 = vpop.f32.mrf.mxu0
          %v1602 = vadd.f32 0.0, %v1601
          %1603 = vmatmul.bf16.gmra.mxu0 %v732
          %v1604 = vpop.f32.mrf.mxu0
          %v1605 = vadd.f32 0.0, %v1604
          %v1606 = vpop.f32.mrf.mxu0
          %v1607 = vadd.f32 0.0, %v1606
          %1608 = vdwg.mxu0
          %1609 = vmatpush.bf16.msra.mxu0 %v1105
          %1610 = vmatpush.bf16.msra.mxu0 %v1103
          %1611 = vmatpush.bf16.msra.mxu0 %v1101
          %1612 = vmatpush.bf16.msra.mxu0 %v1099
          %1613 = vmatpush.bf16.msra.mxu0 %v1097
          %1614 = vmatpush.bf16.msra.mxu0 %v1095
          %1615 = vmatpush.bf16.msra.mxu0 %v1093
          %1616 = vmatpush.bf16.msra.mxu0 %v1091
          %1617 = vmatmul.bf16.gmra.mxu0 %v691
          %v1618 = vpop.f32.mrf.mxu0
          %v1619 = vadd.f32 %v1570, %v1618
          %v1620 = vpop.f32.mrf.mxu0
          %v1621 = vadd.f32 %v1572, %v1620
          %1622 = vmatmul.bf16.gmra.mxu0 %v697
          %v1623 = vpop.f32.mrf.mxu0
          %v1624 = vadd.f32 %v1575, %v1623
          %v1625 = vpop.f32.mrf.mxu0
          %v1626 = vadd.f32 %v1577, %v1625
          %1627 = vmatmul.bf16.gmra.mxu0 %v703
          %v1628 = vpop.f32.mrf.mxu0
          %v1629 = vadd.f32 %v1580, %v1628
          %v1630 = vpop.f32.mrf.mxu0
          %v1631 = vadd.f32 %v1582, %v1630
          %1632 = vmatmul.bf16.gmra.mxu0 %v709
          %v1633 = vpop.f32.mrf.mxu0
          %v1634 = vadd.f32 %v1585, %v1633
          %v1635 = vpop.f32.mrf.mxu0
          %v1636 = vadd.f32 %v1587, %v1635
          %1637 = vmatmul.bf16.gmra.mxu0 %v715
          %v1638 = vpop.f32.mrf.mxu0
          %v1639 = vadd.f32 %v1590, %v1638
          %v1640 = vpop.f32.mrf.mxu0
          %v1641 = vadd.f32 %v1592, %v1640
          %1642 = vmatmul.bf16.gmra.mxu0 %v721
          %v1643 = vpop.f32.mrf.mxu0
          %v1644 = vadd.f32 %v1595, %v1643
          %v1645 = vpop.f32.mrf.mxu0
          %v1646 = vadd.f32 %v1597, %v1645
          %1647 = vmatmul.bf16.gmra.mxu0 %v727
          %v1648 = vpop.f32.mrf.mxu0
          %v1649 = vadd.f32 %v1600, %v1648
          %v1650 = vpop.f32.mrf.mxu0
          %v1651 = vadd.f32 %v1602, %v1650
          %1652 = vmatmul.bf16.gmra.mxu0 %v733
          %v1653 = vpop.f32.mrf.mxu0
          %v1654 = vadd.f32 %v1605, %v1653
          %v1655 = vpop.f32.mrf.mxu0
          %v1656 = vadd.f32 %v1607, %v1655
          %1657 = vdwg.mxu0
          %1658 = vmatpush.bf16.msra.mxu0 %v1121
          %1659 = vmatpush.bf16.msra.mxu0 %v1119
          %1660 = vmatpush.bf16.msra.mxu0 %v1117
          %1661 = vmatpush.bf16.msra.mxu0 %v1115
          %1662 = vmatpush.bf16.msra.mxu0 %v1113
          %1663 = vmatpush.bf16.msra.mxu0 %v1111
          %1664 = vmatpush.bf16.msra.mxu0 %v1109
          %1665 = vmatpush.bf16.msra.mxu0 %v1107
          %1666 = vmatmul.bf16.gmra.mxu0 %v692
          %v1667 = vpop.f32.mrf.mxu0
          %v1668 = vadd.f32 %v1619, %v1667
          %v1669 = vpop.f32.mrf.mxu0
          %v1670 = vadd.f32 %v1621, %v1669
          %1671 = vmatmul.bf16.gmra.mxu0 %v698
          %v1672 = vpop.f32.mrf.mxu0
          %v1673 = vadd.f32 %v1624, %v1672
          %v1674 = vpop.f32.mrf.mxu0
          %v1675 = vadd.f32 %v1626, %v1674
          %1676 = vmatmul.bf16.gmra.mxu0 %v704
          %v1677 = vpop.f32.mrf.mxu0
          %v1678 = vadd.f32 %v1629, %v1677
          %v1679 = vpop.f32.mrf.mxu0
          %v1680 = vadd.f32 %v1631, %v1679
          %1681 = vmatmul.bf16.gmra.mxu0 %v710
          %v1682 = vpop.f32.mrf.mxu0
          %v1683 = vadd.f32 %v1634, %v1682
          %v1684 = vpop.f32.mrf.mxu0
          %v1685 = vadd.f32 %v1636, %v1684
          %1686 = vmatmul.bf16.gmra.mxu0 %v716
          %v1687 = vpop.f32.mrf.mxu0
          %v1688 = vadd.f32 %v1639, %v1687
          %v1689 = vpop.f32.mrf.mxu0
          %v1690 = vadd.f32 %v1641, %v1689
          %1691 = vmatmul.bf16.gmra.mxu0 %v722
          %v1692 = vpop.f32.mrf.mxu0
          %v1693 = vadd.f32 %v1644, %v1692
          %v1694 = vpop.f32.mrf.mxu0
          %v1695 = vadd.f32 %v1646, %v1694
          %1696 = vmatmul.bf16.gmra.mxu0 %v728
          %v1697 = vpop.f32.mrf.mxu0
          %v1698 = vadd.f32 %v1649, %v1697
          %v1699 = vpop.f32.mrf.mxu0
          %v1700 = vadd.f32 %v1651, %v1699
          %1701 = vmatmul.bf16.gmra.mxu0 %v734
          %v1702 = vpop.f32.mrf.mxu0
          %v1703 = vadd.f32 %v1654, %v1702
          %v1704 = vpop.f32.mrf.mxu0
          %v1705 = vadd.f32 %v1656, %v1704
          %1706 = vdwg.mxu0
          %1707 = vmatpush.bf16.msra.mxu0 %v1137
          %1708 = vmatpush.bf16.msra.mxu0 %v1135
          %1709 = vmatpush.bf16.msra.mxu0 %v1133
          %1710 = vmatpush.bf16.msra.mxu0 %v1131
          %1711 = vmatpush.bf16.msra.mxu0 %v1129
          %1712 = vmatpush.bf16.msra.mxu0 %v1127
          %1713 = vmatpush.bf16.msra.mxu0 %v1125
          %1714 = vmatpush.bf16.msra.mxu0 %v1123
          %1715 = vmatmul.bf16.gmra.mxu0 %v693
          %v1716 = vpop.f32.mrf.mxu0
          %v1717 = vadd.f32 %v1668, %v1716
          %v1718 = vpop.f32.mrf.mxu0
          %v1719 = vadd.f32 %v1670, %v1718
          %1720 = vmatmul.bf16.gmra.mxu0 %v699
          %v1721 = vpop.f32.mrf.mxu0
          %v1722 = vadd.f32 %v1673, %v1721
          %v1723 = vpop.f32.mrf.mxu0
          %v1724 = vadd.f32 %v1675, %v1723
          %1725 = vmatmul.bf16.gmra.mxu0 %v705
          %v1726 = vpop.f32.mrf.mxu0
          %v1727 = vadd.f32 %v1678, %v1726
          %v1728 = vpop.f32.mrf.mxu0
          %v1729 = vadd.f32 %v1680, %v1728
          %1730 = vmatmul.bf16.gmra.mxu0 %v711
          %v1731 = vpop.f32.mrf.mxu0
          %v1732 = vadd.f32 %v1683, %v1731
          %v1733 = vpop.f32.mrf.mxu0
          %v1734 = vadd.f32 %v1685, %v1733
          %1735 = vmatmul.bf16.gmra.mxu0 %v717
          %v1736 = vpop.f32.mrf.mxu0
          %v1737 = vadd.f32 %v1688, %v1736
          %v1738 = vpop.f32.mrf.mxu0
          %v1739 = vadd.f32 %v1690, %v1738
          %1740 = vmatmul.bf16.gmra.mxu0 %v723
          %v1741 = vpop.f32.mrf.mxu0
          %v1742 = vadd.f32 %v1693, %v1741
          %v1743 = vpop.f32.mrf.mxu0
          %v1744 = vadd.f32 %v1695, %v1743
          %1745 = vmatmul.bf16.gmra.mxu0 %v729
          %v1746 = vpop.f32.mrf.mxu0
          %v1747 = vadd.f32 %v1698, %v1746
          %v1748 = vpop.f32.mrf.mxu0
          %v1749 = vadd.f32 %v1700, %v1748
          %1750 = vmatmul.bf16.gmra.mxu0 %v735
          %v1751 = vpop.f32.mrf.mxu0
          %v1752 = vadd.f32 %v1703, %v1751
          %v1753 = vpop.f32.mrf.mxu0
          %v1754 = vadd.f32 %v1705, %v1753
          %1755 = vdwg.mxu0
          %1756 = vmatpush.bf16.msra.mxu0 %v1153
          %1757 = vmatpush.bf16.msra.mxu0 %v1151
          %1758 = vmatpush.bf16.msra.mxu0 %v1149
          %1759 = vmatpush.bf16.msra.mxu0 %v1147
          %1760 = vmatpush.bf16.msra.mxu0 %v1145
          %1761 = vmatpush.bf16.msra.mxu0 %v1143
          %1762 = vmatpush.bf16.msra.mxu0 %v1141
          %1763 = vmatpush.bf16.msra.mxu0 %v1139
          %1764 = vmatmul.bf16.gmra.mxu0 %v694
          %v1765 = vpop.f32.mrf.mxu0
          %v1766 = vadd.f32 %v1717, %v1765
          %v1767 = vpop.f32.mrf.mxu0
          %v1768 = vadd.f32 %v1719, %v1767
          %1769 = vmatmul.bf16.gmra.mxu0 %v700
          %v1770 = vpop.f32.mrf.mxu0
          %v1771 = vadd.f32 %v1722, %v1770
          %v1772 = vpop.f32.mrf.mxu0
          %v1773 = vadd.f32 %v1724, %v1772
          %1774 = vmatmul.bf16.gmra.mxu0 %v706
          %v1775 = vpop.f32.mrf.mxu0
          %v1776 = vadd.f32 %v1727, %v1775
          %v1777 = vpop.f32.mrf.mxu0
          %v1778 = vadd.f32 %v1729, %v1777
          %1779 = vmatmul.bf16.gmra.mxu0 %v712
          %v1780 = vpop.f32.mrf.mxu0
          %v1781 = vadd.f32 %v1732, %v1780
          %v1782 = vpop.f32.mrf.mxu0
          %v1783 = vadd.f32 %v1734, %v1782
          %1784 = vmatmul.bf16.gmra.mxu0 %v718
          %v1785 = vpop.f32.mrf.mxu0
          %v1786 = vadd.f32 %v1737, %v1785
          %v1787 = vpop.f32.mrf.mxu0
          %v1788 = vadd.f32 %v1739, %v1787
          %1789 = vmatmul.bf16.gmra.mxu0 %v724
          %v1790 = vpop.f32.mrf.mxu0
          %v1791 = vadd.f32 %v1742, %v1790
          %v1792 = vpop.f32.mrf.mxu0
          %v1793 = vadd.f32 %v1744, %v1792
          %1794 = vmatmul.bf16.gmra.mxu0 %v730
          %v1795 = vpop.f32.mrf.mxu0
          %v1796 = vadd.f32 %v1747, %v1795
          %v1797 = vpop.f32.mrf.mxu0
          %v1798 = vadd.f32 %v1749, %v1797
          %1799 = vmatmul.bf16.gmra.mxu0 %v736
          %v1800 = vpop.f32.mrf.mxu0
          %v1801 = vadd.f32 %v1752, %v1800
          %v1802 = vpop.f32.mrf.mxu0
          %v1803 = vadd.f32 %v1754, %v1802
          %1804 = vdwg.mxu0
          %1805 = vmatpush.bf16.msra.mxu0 %v1169
          %1806 = vmatpush.bf16.msra.mxu0 %v1167
          %1807 = vmatpush.bf16.msra.mxu0 %v1165
          %1808 = vmatpush.bf16.msra.mxu0 %v1163
          %1809 = vmatpush.bf16.msra.mxu0 %v1161
          %1810 = vmatpush.bf16.msra.mxu0 %v1159
          %1811 = vmatpush.bf16.msra.mxu0 %v1157
          %1812 = vmatpush.bf16.msra.mxu0 %v1155
          %1813 = vmatmul.bf16.gmra.mxu0 %v695
          %v1814 = vpop.f32.mrf.mxu0
          %v1815 = vadd.f32 %v1766, %v1814
          %v1816 = vpop.f32.mrf.mxu0
          %v1817 = vadd.f32 %v1768, %v1816
          %1818 = vmatmul.bf16.gmra.mxu0 %v701
          %v1819 = vpop.f32.mrf.mxu0
          %v1820 = vadd.f32 %v1771, %v1819
          %v1821 = vpop.f32.mrf.mxu0
          %v1822 = vadd.f32 %v1773, %v1821
          %1823 = vmatmul.bf16.gmra.mxu0 %v707
          %v1824 = vpop.f32.mrf.mxu0
          %v1825 = vadd.f32 %v1776, %v1824
          %v1826 = vpop.f32.mrf.mxu0
          %v1827 = vadd.f32 %v1778, %v1826
          %1828 = vmatmul.bf16.gmra.mxu0 %v713
          %v1829 = vpop.f32.mrf.mxu0
          %v1830 = vadd.f32 %v1781, %v1829
          %v1831 = vpop.f32.mrf.mxu0
          %v1832 = vadd.f32 %v1783, %v1831
          %1833 = vmatmul.bf16.gmra.mxu0 %v719
          %v1834 = vpop.f32.mrf.mxu0
          %v1835 = vadd.f32 %v1786, %v1834
          %v1836 = vpop.f32.mrf.mxu0
          %v1837 = vadd.f32 %v1788, %v1836
          %1838 = vmatmul.bf16.gmra.mxu0 %v725
          %v1839 = vpop.f32.mrf.mxu0
          %v1840 = vadd.f32 %v1791, %v1839
          %v1841 = vpop.f32.mrf.mxu0
          %v1842 = vadd.f32 %v1793, %v1841
          %1843 = vmatmul.bf16.gmra.mxu0 %v731
          %v1844 = vpop.f32.mrf.mxu0
          %v1845 = vadd.f32 %v1796, %v1844
          %v1846 = vpop.f32.mrf.mxu0
          %v1847 = vadd.f32 %v1798, %v1846
          %1848 = vmatmul.bf16.gmra.mxu0 %v737
          %v1849 = vpop.f32.mrf.mxu0
          %v1850 = vadd.f32 %v1801, %v1849
          %v1851 = vpop.f32.mrf.mxu0
          %v1852 = vadd.f32 %v1803, %v1851
          %1853 = vdwg.mxu0
          %v1854 = vpack.c.bf16 %v1523, %v1521
          %v1855 = vpack.c.bf16 %v1817, %v1815
          %v1856 = vpack.c.bf16 %v1528, %v1526
          %v1857 = vpack.c.bf16 %v1822, %v1820
          %v1858 = vpack.c.bf16 %v1533, %v1531
          %v1859 = vpack.c.bf16 %v1827, %v1825
          %v1860 = vpack.c.bf16 %v1538, %v1536
          %v1861 = vpack.c.bf16 %v1832, %v1830
          %v1862 = vpack.c.bf16 %v1543, %v1541
          %v1863 = vpack.c.bf16 %v1837, %v1835
          %v1864 = vpack.c.bf16 %v1548, %v1546
          %v1865 = vpack.c.bf16 %v1842, %v1840
          %v1866 = vpack.c.bf16 %v1553, %v1551
          %v1867 = vpack.c.bf16 %v1847, %v1845
          %v1868 = vpack.c.bf16 %v1558, %v1556
          %v1869 = vpack.c.bf16 %v1852, %v1850
          %v1870 = vld [vmem:[%s339] sm:$0x3]
          %v1872 = vperm.slane %v1870, 0
          %v1873 = vperm.slane %v1870, 1
          %v1892 = vunpack.c.l.b16 %v382
          %v1893 = vunpack.c.l.b16 %v383
          %v1894 = vunpack.c.l.b16 %v384
          %v1895 = vunpack.c.l.b16 %v385
          %v1896 = vunpack.c.l.b16 %v386
          %v1897 = vunpack.c.l.b16 %v387
          %v1898 = vunpack.c.l.b16 %v388
          %v1899 = vunpack.c.l.b16 %v389
          %v1900 = vunpack.c.l.b16 %v390
          %v1901 = vunpack.c.l.b16 %v391
          %v1902 = vunpack.c.l.b16 %v392
          %v1903 = vunpack.c.l.b16 %v393
          %v1904 = vunpack.c.l.b16 %v394
          %v1905 = vunpack.c.l.b16 %v395
          %v1906 = vunpack.c.l.b16 %v396
          %v1907 = vunpack.c.l.b16 %v397
          %v1908 = vpack.c.b16 %v1893, %v1892
          %v1909 = vpack.c.b16 %v1895, %v1894
          %v1910 = vpack.c.b16 %v1897, %v1896
          %v1911 = vpack.c.b16 %v1899, %v1898
          %v1912 = vpack.c.b16 %v1901, %v1900
          %v1913 = vpack.c.b16 %v1903, %v1902
          %v1914 = vpack.c.b16 %v1905, %v1904
          %v1915 = vpack.c.b16 %v1907, %v1906
          %1924 = vmatpush.bf16.msra.mxu0 %v1868
          %1925 = vmatpush.bf16.msra.mxu0 %v1866
          %1926 = vmatpush.bf16.msra.mxu0 %v1864
          %1927 = vmatpush.bf16.msra.mxu0 %v1862
          %1928 = vmatpush.bf16.msra.mxu0 %v1860
          %1929 = vmatpush.bf16.msra.mxu0 %v1858
          %1930 = vmatpush.bf16.msra.mxu0 %v1856
          %1931 = vmatpush.bf16.msra.mxu0 %v1854
          %1932 = vmatmul.bf16.gmra.mxu0 %v1908
          %v1933 = vpop.f32.mrf.mxu0
          %v1934 = vadd.f32 %v1872, %v1933
          %v1935 = vpop.f32.mrf.mxu0
          %v1936 = vadd.f32 %v1872, %v1935
          %1937 = vmatmul.bf16.gmra.mxu0 %v1909
          %v1938 = vpop.f32.mrf.mxu0
          %v1939 = vadd.f32 %v1872, %v1938
          %v1940 = vpop.f32.mrf.mxu0
          %v1941 = vadd.f32 %v1872, %v1940
          %1942 = vmatmul.bf16.gmra.mxu0 %v1910
          %v1943 = vpop.f32.mrf.mxu0
          %v1944 = vadd.f32 %v1872, %v1943
          %v1945 = vpop.f32.mrf.mxu0
          %v1946 = vadd.f32 %v1872, %v1945
          %1947 = vmatmul.bf16.gmra.mxu0 %v1911
          %v1948 = vpop.f32.mrf.mxu0
          %v1949 = vadd.f32 %v1872, %v1948
          %v1950 = vpop.f32.mrf.mxu0
          %v1951 = vadd.f32 %v1872, %v1950
          %1952 = vmatmul.bf16.gmra.mxu0 %v1912
          %v1953 = vpop.f32.mrf.mxu0
          %v1954 = vadd.f32 %v1872, %v1953
          %v1955 = vpop.f32.mrf.mxu0
          %v1956 = vadd.f32 %v1872, %v1955
          %1957 = vmatmul.bf16.gmra.mxu0 %v1913
          %v1958 = vpop.f32.mrf.mxu0
          %v1959 = vadd.f32 %v1872, %v1958
          %v1960 = vpop.f32.mrf.mxu0
          %v1961 = vadd.f32 %v1872, %v1960
          %1962 = vmatmul.bf16.gmra.mxu0 %v1914
          %v1963 = vpop.f32.mrf.mxu0
          %v1964 = vadd.f32 %v1872, %v1963
          %v1965 = vpop.f32.mrf.mxu0
          %v1966 = vadd.f32 %v1872, %v1965
          %1967 = vmatmul.bf16.gmra.mxu0 %v1915
          %v1968 = vpop.f32.mrf.mxu0
          %v1969 = vadd.f32 %v1872, %v1968
          %v1970 = vpop.f32.mrf.mxu0
          %v1971 = vadd.f32 %v1872, %v1970
          %1972 = vdwg.mxu0
          %1973 = vmatpush.bf16.msra.mxu0 %v1869
          %1974 = vmatpush.bf16.msra.mxu0 %v1867
          %1975 = vmatpush.bf16.msra.mxu0 %v1865
          %1976 = vmatpush.bf16.msra.mxu0 %v1863
          %1977 = vmatpush.bf16.msra.mxu0 %v1861
          %1978 = vmatpush.bf16.msra.mxu0 %v1859
          %1979 = vmatpush.bf16.msra.mxu0 %v1857
          %1980 = vmatpush.bf16.msra.mxu0 %v1855
          %1981 = vmatmul.bf16.gmra.mxu0 %v1908
          %v1982 = vpop.f32.mrf.mxu0
          %v1983 = vadd.f32 %v1873, %v1982
          %v1984 = vpop.f32.mrf.mxu0
          %v1985 = vadd.f32 %v1873, %v1984
          %1986 = vmatmul.bf16.gmra.mxu0 %v1909
          %v1987 = vpop.f32.mrf.mxu0
          %v1988 = vadd.f32 %v1873, %v1987
          %v1989 = vpop.f32.mrf.mxu0
          %v1990 = vadd.f32 %v1873, %v1989
          %1991 = vmatmul.bf16.gmra.mxu0 %v1910
          %v1992 = vpop.f32.mrf.mxu0
          %v1993 = vadd.f32 %v1873, %v1992
          %v1994 = vpop.f32.mrf.mxu0
          %v1995 = vadd.f32 %v1873, %v1994
          %1996 = vmatmul.bf16.gmra.mxu0 %v1911
          %v1997 = vpop.f32.mrf.mxu0
          %v1998 = vadd.f32 %v1873, %v1997
          %v1999 = vpop.f32.mrf.mxu0
          %v2000 = vadd.f32 %v1873, %v1999
          %2001 = vmatmul.bf16.gmra.mxu0 %v1912
          %v2002 = vpop.f32.mrf.mxu0
          %v2003 = vadd.f32 %v1873, %v2002
          %v2004 = vpop.f32.mrf.mxu0
          %v2005 = vadd.f32 %v1873, %v2004
          %2006 = vmatmul.bf16.gmra.mxu0 %v1913
          %v2007 = vpop.f32.mrf.mxu0
          %v2008 = vadd.f32 %v1873, %v2007
          %v2009 = vpop.f32.mrf.mxu0
          %v2010 = vadd.f32 %v1873, %v2009
          %2011 = vmatmul.bf16.gmra.mxu0 %v1914
          %v2012 = vpop.f32.mrf.mxu0
          %v2013 = vadd.f32 %v1873, %v2012
          %v2014 = vpop.f32.mrf.mxu0
          %v2015 = vadd.f32 %v1873, %v2014
          %2016 = vmatmul.bf16.gmra.mxu0 %v1915
          %v2017 = vpop.f32.mrf.mxu0
          %v2018 = vadd.f32 %v1873, %v2017
          %v2019 = vpop.f32.mrf.mxu0
          %v2020 = vadd.f32 %v1873, %v2019
          %2021 = vdwg.mxu0
          %v2022 = vld [vmem:[%s329] sm:$0xff]
          %v2023 = vld [vmem:[%s329 + $0x8] sm:$0xff]
          %v2024 = vld [vmem:[%s329 + $0x10] sm:$0xff]
          %v2025 = vld [vmem:[%s329 + $0x18] sm:$0xff]
          %v2026 = vld [vmem:[%s329 + $0x20] sm:$0xff]
          %v2027 = vld [vmem:[%s329 + $0x28] sm:$0xff]
          %v2028 = vld [vmem:[%s329 + $0x30] sm:$0xff]
          %v2029 = vld [vmem:[%s329 + $0x38] sm:$0xff]
          %v2030 = vld [vmem:[%s329 + $0x40] sm:$0xff]
          %v2031 = vld [vmem:[%s329 + $0x48] sm:$0xff]
          %v2032 = vld [vmem:[%s329 + $0x50] sm:$0xff]
          %v2033 = vld [vmem:[%s329 + $0x58] sm:$0xff]
          %v2034 = vld [vmem:[%s329 + $0x60] sm:$0xff]
          %v2035 = vld [vmem:[%s329 + $0x68] sm:$0xff]
          %v2036 = vld [vmem:[%s329 + $0x70] sm:$0xff]
          %v2037 = vld [vmem:[%s329 + $0x78] sm:$0xff]
          %v2038 = vld [vmem:[%s329 + $0x80] sm:$0xff]
          %v2039 = vld [vmem:[%s329 + $0x88] sm:$0xff]
          %v2040 = vld [vmem:[%s329 + $0x90] sm:$0xff]
          %v2041 = vld [vmem:[%s329 + $0x98] sm:$0xff]
          %v2042 = vld [vmem:[%s329 + $0xa0] sm:$0xff]
          %v2043 = vld [vmem:[%s329 + $0xa8] sm:$0xff]
          %v2044 = vld [vmem:[%s329 + $0xb0] sm:$0xff]
          %v2045 = vld [vmem:[%s329 + $0xb8] sm:$0xff]
          %v2046 = vld [vmem:[%s329 + $0xc0] sm:$0xff]
          %v2047 = vld [vmem:[%s329 + $0xc8] sm:$0xff]
          %v2048 = vld [vmem:[%s329 + $0xd0] sm:$0xff]
          %v2049 = vld [vmem:[%s329 + $0xd8] sm:$0xff]
          %v2050 = vld [vmem:[%s329 + $0xe0] sm:$0xff]
          %v2051 = vld [vmem:[%s329 + $0xe8] sm:$0xff]
          %v2052 = vld [vmem:[%s329 + $0xf0] sm:$0xff]
          %v2053 = vld [vmem:[%s329 + $0xf8] sm:$0xff]
          %v2054 = vld [vmem:[%s329 + $0x100] sm:$0xff]
          %v2055 = vld [vmem:[%s329 + $0x108] sm:$0xff]
          %v2056 = vld [vmem:[%s329 + $0x110] sm:$0xff]
          %v2057 = vld [vmem:[%s329 + $0x118] sm:$0xff]
          %v2058 = vld [vmem:[%s329 + $0x120] sm:$0xff]
          %v2059 = vld [vmem:[%s329 + $0x128] sm:$0xff]
          %v2060 = vld [vmem:[%s329 + $0x130] sm:$0xff]
          %v2061 = vld [vmem:[%s329 + $0x138] sm:$0xff]
          %v2062 = vld [vmem:[%s329 + $0x140] sm:$0xff]
          %v2063 = vld [vmem:[%s329 + $0x148] sm:$0xff]
          %v2064 = vld [vmem:[%s329 + $0x150] sm:$0xff]
          %v2065 = vld [vmem:[%s329 + $0x158] sm:$0xff]
          %v2066 = vld [vmem:[%s329 + $0x160] sm:$0xff]
          %v2067 = vld [vmem:[%s329 + $0x168] sm:$0xff]
          %v2068 = vld [vmem:[%s329 + $0x170] sm:$0xff]
          %v2069 = vld [vmem:[%s329 + $0x178] sm:$0xff]
          %v2070 = vld [vmem:[%s329 + $0x180] sm:$0xff]
          %v2071 = vld [vmem:[%s329 + $0x188] sm:$0xff]
          %v2072 = vld [vmem:[%s329 + $0x190] sm:$0xff]
          %v2073 = vld [vmem:[%s329 + $0x198] sm:$0xff]
          %v2074 = vld [vmem:[%s329 + $0x1a0] sm:$0xff]
          %v2075 = vld [vmem:[%s329 + $0x1a8] sm:$0xff]
          %v2076 = vld [vmem:[%s329 + $0x1b0] sm:$0xff]
          %v2077 = vld [vmem:[%s329 + $0x1b8] sm:$0xff]
          %v2078 = vld [vmem:[%s329 + $0x1c0] sm:$0xff]
          %v2079 = vld [vmem:[%s329 + $0x1c8] sm:$0xff]
          %v2080 = vld [vmem:[%s329 + $0x1d0] sm:$0xff]
          %v2081 = vld [vmem:[%s329 + $0x1d8] sm:$0xff]
          %v2082 = vld [vmem:[%s329 + $0x1e0] sm:$0xff]
          %v2083 = vld [vmem:[%s329 + $0x1e8] sm:$0xff]
          %v2084 = vld [vmem:[%s329 + $0x1f0] sm:$0xff]
          %v2085 = vld [vmem:[%s329 + $0x1f8] sm:$0xff]
          %v2086 = vld [vmem:[%s329 + $0x200] sm:$0xff]
          %v2087 = vld [vmem:[%s329 + $0x208] sm:$0xff]
          %v2088 = vld [vmem:[%s329 + $0x210] sm:$0xff]
          %v2089 = vld [vmem:[%s329 + $0x218] sm:$0xff]
          %v2090 = vld [vmem:[%s329 + $0x220] sm:$0xff]
          %v2091 = vld [vmem:[%s329 + $0x228] sm:$0xff]
          %v2092 = vld [vmem:[%s329 + $0x230] sm:$0xff]
          %v2093 = vld [vmem:[%s329 + $0x238] sm:$0xff]
          %v2094 = vld [vmem:[%s329 + $0x240] sm:$0xff]
          %v2095 = vld [vmem:[%s329 + $0x248] sm:$0xff]
          %v2096 = vld [vmem:[%s329 + $0x250] sm:$0xff]
          %v2097 = vld [vmem:[%s329 + $0x258] sm:$0xff]
          %v2098 = vld [vmem:[%s329 + $0x260] sm:$0xff]
          %v2099 = vld [vmem:[%s329 + $0x268] sm:$0xff]
          %v2100 = vld [vmem:[%s329 + $0x270] sm:$0xff]
          %v2101 = vld [vmem:[%s329 + $0x278] sm:$0xff]
          %v2102 = vld [vmem:[%s329 + $0x280] sm:$0xff]
          %v2103 = vld [vmem:[%s329 + $0x288] sm:$0xff]
          %v2104 = vld [vmem:[%s329 + $0x290] sm:$0xff]
          %v2105 = vld [vmem:[%s329 + $0x298] sm:$0xff]
          %v2106 = vld [vmem:[%s329 + $0x2a0] sm:$0xff]
          %v2107 = vld [vmem:[%s329 + $0x2a8] sm:$0xff]
          %v2108 = vld [vmem:[%s329 + $0x2b0] sm:$0xff]
          %v2109 = vld [vmem:[%s329 + $0x2b8] sm:$0xff]
          %v2110 = vld [vmem:[%s329 + $0x2c0] sm:$0xff]
          %v2111 = vld [vmem:[%s329 + $0x2c8] sm:$0xff]
          %v2112 = vld [vmem:[%s329 + $0x2d0] sm:$0xff]
          %v2113 = vld [vmem:[%s329 + $0x2d8] sm:$0xff]
          %v2114 = vld [vmem:[%s329 + $0x2e0] sm:$0xff]
          %v2115 = vld [vmem:[%s329 + $0x2e8] sm:$0xff]
          %v2116 = vld [vmem:[%s329 + $0x2f0] sm:$0xff]
          %v2117 = vld [vmem:[%s329 + $0x2f8] sm:$0xff]
          %v2214 = vunpack.c.l.b16 %v2022
          %v2215 = vunpack.c.h.b16 %v2022
          %v2216 = vunpack.c.l.b16 %v2023
          %v2217 = vunpack.c.h.b16 %v2023
          %v2218 = vunpack.c.l.b16 %v2024
          %v2219 = vunpack.c.h.b16 %v2024
          %v2220 = vunpack.c.l.b16 %v2025
          %v2221 = vunpack.c.h.b16 %v2025
          %v2222 = vunpack.c.l.b16 %v2026
          %v2223 = vunpack.c.h.b16 %v2026
          %v2224 = vunpack.c.l.b16 %v2027
          %v2225 = vunpack.c.h.b16 %v2027
          %v2226 = vunpack.c.l.b16 %v2028
          %v2227 = vunpack.c.h.b16 %v2028
          %v2228 = vunpack.c.l.b16 %v2029
          %v2229 = vunpack.c.h.b16 %v2029
          %v2230 = vunpack.c.l.b16 %v2030
          %v2231 = vunpack.c.h.b16 %v2030
          %v2232 = vunpack.c.l.b16 %v2031
          %v2233 = vunpack.c.h.b16 %v2031
          %v2234 = vunpack.c.l.b16 %v2032
          %v2235 = vunpack.c.h.b16 %v2032
          %v2236 = vunpack.c.l.b16 %v2033
          %v2237 = vunpack.c.h.b16 %v2033
          %v2238 = vunpack.c.l.b16 %v2034
          %v2239 = vunpack.c.h.b16 %v2034
          %v2240 = vunpack.c.l.b16 %v2035
          %v2241 = vunpack.c.h.b16 %v2035
          %v2242 = vunpack.c.l.b16 %v2036
          %v2243 = vunpack.c.h.b16 %v2036
          %v2244 = vunpack.c.l.b16 %v2037
          %v2245 = vunpack.c.h.b16 %v2037
          %v2246 = vunpack.c.l.b16 %v2038
          %v2247 = vunpack.c.h.b16 %v2038
          %v2248 = vunpack.c.l.b16 %v2039
          %v2249 = vunpack.c.h.b16 %v2039
          %v2250 = vunpack.c.l.b16 %v2040
          %v2251 = vunpack.c.h.b16 %v2040
          %v2252 = vunpack.c.l.b16 %v2041
          %v2253 = vunpack.c.h.b16 %v2041
          %v2254 = vunpack.c.l.b16 %v2042
          %v2255 = vunpack.c.h.b16 %v2042
          %v2256 = vunpack.c.l.b16 %v2043
          %v2257 = vunpack.c.h.b16 %v2043
          %v2258 = vunpack.c.l.b16 %v2044
          %v2259 = vunpack.c.h.b16 %v2044
          %v2260 = vunpack.c.l.b16 %v2045
          %v2261 = vunpack.c.h.b16 %v2045
          %v2262 = vunpack.c.l.b16 %v2046
          %v2263 = vunpack.c.h.b16 %v2046
          %v2264 = vunpack.c.l.b16 %v2047
          %v2265 = vunpack.c.h.b16 %v2047
          %v2266 = vunpack.c.l.b16 %v2048
          %v2267 = vunpack.c.h.b16 %v2048
          %v2268 = vunpack.c.l.b16 %v2049
          %v2269 = vunpack.c.h.b16 %v2049
          %v2270 = vunpack.c.l.b16 %v2050
          %v2271 = vunpack.c.h.b16 %v2050
          %v2272 = vunpack.c.l.b16 %v2051
          %v2273 = vunpack.c.h.b16 %v2051
          %v2274 = vunpack.c.l.b16 %v2052
          %v2275 = vunpack.c.h.b16 %v2052
          %v2276 = vunpack.c.l.b16 %v2053
          %v2277 = vunpack.c.h.b16 %v2053
          %v2278 = vunpack.c.l.b16 %v2054
          %v2279 = vunpack.c.h.b16 %v2054
          %v2280 = vunpack.c.l.b16 %v2055
          %v2281 = vunpack.c.h.b16 %v2055
          %v2282 = vunpack.c.l.b16 %v2056
          %v2283 = vunpack.c.h.b16 %v2056
          %v2284 = vunpack.c.l.b16 %v2057
          %v2285 = vunpack.c.h.b16 %v2057
          %v2286 = vunpack.c.l.b16 %v2058
          %v2287 = vunpack.c.h.b16 %v2058
          %v2288 = vunpack.c.l.b16 %v2059
          %v2289 = vunpack.c.h.b16 %v2059
          %v2290 = vunpack.c.l.b16 %v2060
          %v2291 = vunpack.c.h.b16 %v2060
          %v2292 = vunpack.c.l.b16 %v2061
          %v2293 = vunpack.c.h.b16 %v2061
          %v2294 = vunpack.c.l.b16 %v2062
          %v2295 = vunpack.c.h.b16 %v2062
          %v2296 = vunpack.c.l.b16 %v2063
          %v2297 = vunpack.c.h.b16 %v2063
          %v2298 = vunpack.c.l.b16 %v2064
          %v2299 = vunpack.c.h.b16 %v2064
          %v2300 = vunpack.c.l.b16 %v2065
          %v2301 = vunpack.c.h.b16 %v2065
          %v2302 = vunpack.c.l.b16 %v2066
          %v2303 = vunpack.c.h.b16 %v2066
          %v2304 = vunpack.c.l.b16 %v2067
          %v2305 = vunpack.c.h.b16 %v2067
          %v2306 = vunpack.c.l.b16 %v2068
          %v2307 = vunpack.c.h.b16 %v2068
          %v2308 = vunpack.c.l.b16 %v2069
          %v2309 = vunpack.c.h.b16 %v2069
          %v2310 = vunpack.c.l.b16 %v2070
          %v2311 = vunpack.c.h.b16 %v2070
          %v2312 = vunpack.c.l.b16 %v2071
          %v2313 = vunpack.c.h.b16 %v2071
          %v2314 = vunpack.c.l.b16 %v2072
          %v2315 = vunpack.c.h.b16 %v2072
          %v2316 = vunpack.c.l.b16 %v2073
          %v2317 = vunpack.c.h.b16 %v2073
          %v2318 = vunpack.c.l.b16 %v2074
          %v2319 = vunpack.c.h.b16 %v2074
          %v2320 = vunpack.c.l.b16 %v2075
          %v2321 = vunpack.c.h.b16 %v2075
          %v2322 = vunpack.c.l.b16 %v2076
          %v2323 = vunpack.c.h.b16 %v2076
          %v2324 = vunpack.c.l.b16 %v2077
          %v2325 = vunpack.c.h.b16 %v2077
          %v2326 = vunpack.c.l.b16 %v2078
          %v2327 = vunpack.c.h.b16 %v2078
          %v2328 = vunpack.c.l.b16 %v2079
          %v2329 = vunpack.c.h.b16 %v2079
          %v2330 = vunpack.c.l.b16 %v2080
          %v2331 = vunpack.c.h.b16 %v2080
          %v2332 = vunpack.c.l.b16 %v2081
          %v2333 = vunpack.c.h.b16 %v2081
          %v2334 = vunpack.c.l.b16 %v2082
          %v2335 = vunpack.c.h.b16 %v2082
          %v2336 = vunpack.c.l.b16 %v2083
          %v2337 = vunpack.c.h.b16 %v2083
          %v2338 = vunpack.c.l.b16 %v2084
          %v2339 = vunpack.c.h.b16 %v2084
          %v2340 = vunpack.c.l.b16 %v2085
          %v2341 = vunpack.c.h.b16 %v2085
          %v2342 = vunpack.c.l.b16 %v2086
          %v2343 = vunpack.c.h.b16 %v2086
          %v2344 = vunpack.c.l.b16 %v2087
          %v2345 = vunpack.c.h.b16 %v2087
          %v2346 = vunpack.c.l.b16 %v2088
          %v2347 = vunpack.c.h.b16 %v2088
          %v2348 = vunpack.c.l.b16 %v2089
          %v2349 = vunpack.c.h.b16 %v2089
          %v2350 = vunpack.c.l.b16 %v2090
          %v2351 = vunpack.c.h.b16 %v2090
          %v2352 = vunpack.c.l.b16 %v2091
          %v2353 = vunpack.c.h.b16 %v2091
          %v2354 = vunpack.c.l.b16 %v2092
          %v2355 = vunpack.c.h.b16 %v2092
          %v2356 = vunpack.c.l.b16 %v2093
          %v2357 = vunpack.c.h.b16 %v2093
          %v2358 = vunpack.c.l.b16 %v2094
          %v2359 = vunpack.c.h.b16 %v2094
          %v2360 = vunpack.c.l.b16 %v2095
          %v2361 = vunpack.c.h.b16 %v2095
          %v2362 = vunpack.c.l.b16 %v2096
          %v2363 = vunpack.c.h.b16 %v2096
          %v2364 = vunpack.c.l.b16 %v2097
          %v2365 = vunpack.c.h.b16 %v2097
          %v2366 = vunpack.c.l.b16 %v2098
          %v2367 = vunpack.c.h.b16 %v2098
          %v2368 = vunpack.c.l.b16 %v2099
          %v2369 = vunpack.c.h.b16 %v2099
          %v2370 = vunpack.c.l.b16 %v2100
          %v2371 = vunpack.c.h.b16 %v2100
          %v2372 = vunpack.c.l.b16 %v2101
          %v2373 = vunpack.c.h.b16 %v2101
          %v2374 = vunpack.c.l.b16 %v2102
          %v2375 = vunpack.c.h.b16 %v2102
          %v2376 = vunpack.c.l.b16 %v2103
          %v2377 = vunpack.c.h.b16 %v2103
          %v2378 = vunpack.c.l.b16 %v2104
          %v2379 = vunpack.c.h.b16 %v2104
          %v2380 = vunpack.c.l.b16 %v2105
          %v2381 = vunpack.c.h.b16 %v2105
          %v2382 = vunpack.c.l.b16 %v2106
          %v2383 = vunpack.c.h.b16 %v2106
          %v2384 = vunpack.c.l.b16 %v2107
          %v2385 = vunpack.c.h.b16 %v2107
          %v2386 = vunpack.c.l.b16 %v2108
          %v2387 = vunpack.c.h.b16 %v2108
          %v2388 = vunpack.c.l.b16 %v2109
          %v2389 = vunpack.c.h.b16 %v2109
          %v2390 = vunpack.c.l.b16 %v2110
          %v2391 = vunpack.c.h.b16 %v2110
          %v2392 = vunpack.c.l.b16 %v2111
          %v2393 = vunpack.c.h.b16 %v2111
          %v2394 = vunpack.c.l.b16 %v2112
          %v2395 = vunpack.c.h.b16 %v2112
          %v2396 = vunpack.c.l.b16 %v2113
          %v2397 = vunpack.c.h.b16 %v2113
          %v2398 = vunpack.c.l.b16 %v2114
          %v2399 = vunpack.c.h.b16 %v2114
          %v2400 = vunpack.c.l.b16 %v2115
          %v2401 = vunpack.c.h.b16 %v2115
          %v2402 = vunpack.c.l.b16 %v2116
          %v2403 = vunpack.c.h.b16 %v2116
          %v2404 = vunpack.c.l.b16 %v2117
          %v2405 = vunpack.c.h.b16 %v2117
          %v2406 = vpack.c.b16 %v2216, %v2214
          %v2407 = vpack.c.b16 %v2217, %v2215
          %v2408 = vpack.c.b16 %v2220, %v2218
          %v2409 = vpack.c.b16 %v2221, %v2219
          %v2410 = vpack.c.b16 %v2224, %v2222
          %v2411 = vpack.c.b16 %v2225, %v2223
          %v2412 = vpack.c.b16 %v2228, %v2226
          %v2413 = vpack.c.b16 %v2229, %v2227
          %v2414 = vpack.c.b16 %v2232, %v2230
          %v2415 = vpack.c.b16 %v2233, %v2231
          %v2416 = vpack.c.b16 %v2236, %v2234
          %v2417 = vpack.c.b16 %v2237, %v2235
          %v2418 = vpack.c.b16 %v2240, %v2238
          %v2419 = vpack.c.b16 %v2241, %v2239
          %v2420 = vpack.c.b16 %v2244, %v2242
          %v2421 = vpack.c.b16 %v2245, %v2243
          %v2422 = vpack.c.b16 %v2248, %v2246
          %v2423 = vpack.c.b16 %v2249, %v2247
          %v2424 = vpack.c.b16 %v2252, %v2250
          %v2425 = vpack.c.b16 %v2253, %v2251
          %v2426 = vpack.c.b16 %v2256, %v2254
          %v2427 = vpack.c.b16 %v2257, %v2255
          %v2428 = vpack.c.b16 %v2260, %v2258
          %v2429 = vpack.c.b16 %v2261, %v2259
          %v2430 = vpack.c.b16 %v2264, %v2262
          %v2431 = vpack.c.b16 %v2265, %v2263
          %v2432 = vpack.c.b16 %v2268, %v2266
          %v2433 = vpack.c.b16 %v2269, %v2267
          %v2434 = vpack.c.b16 %v2272, %v2270
          %v2435 = vpack.c.b16 %v2273, %v2271
          %v2436 = vpack.c.b16 %v2276, %v2274
          %v2437 = vpack.c.b16 %v2277, %v2275
          %v2438 = vpack.c.b16 %v2280, %v2278
          %v2439 = vpack.c.b16 %v2281, %v2279
          %v2440 = vpack.c.b16 %v2284, %v2282
          %v2441 = vpack.c.b16 %v2285, %v2283
          %v2442 = vpack.c.b16 %v2288, %v2286
          %v2443 = vpack.c.b16 %v2289, %v2287
          %v2444 = vpack.c.b16 %v2292, %v2290
          %v2445 = vpack.c.b16 %v2293, %v2291
          %v2446 = vpack.c.b16 %v2296, %v2294
          %v2447 = vpack.c.b16 %v2297, %v2295
          %v2448 = vpack.c.b16 %v2300, %v2298
          %v2449 = vpack.c.b16 %v2301, %v2299
          %v2450 = vpack.c.b16 %v2304, %v2302
          %v2451 = vpack.c.b16 %v2305, %v2303
          %v2452 = vpack.c.b16 %v2308, %v2306
          %v2453 = vpack.c.b16 %v2309, %v2307
          %v2454 = vpack.c.b16 %v2312, %v2310
          %v2455 = vpack.c.b16 %v2313, %v2311
          %v2456 = vpack.c.b16 %v2316, %v2314
          %v2457 = vpack.c.b16 %v2317, %v2315
          %v2458 = vpack.c.b16 %v2320, %v2318
          %v2459 = vpack.c.b16 %v2321, %v2319
          %v2460 = vpack.c.b16 %v2324, %v2322
          %v2461 = vpack.c.b16 %v2325, %v2323
          %v2462 = vpack.c.b16 %v2328, %v2326
          %v2463 = vpack.c.b16 %v2329, %v2327
          %v2464 = vpack.c.b16 %v2332, %v2330
          %v2465 = vpack.c.b16 %v2333, %v2331
          %v2466 = vpack.c.b16 %v2336, %v2334
          %v2467 = vpack.c.b16 %v2337, %v2335
          %v2468 = vpack.c.b16 %v2340, %v2338
          %v2469 = vpack.c.b16 %v2341, %v2339
          %v2470 = vpack.c.b16 %v2344, %v2342
          %v2471 = vpack.c.b16 %v2345, %v2343
          %v2472 = vpack.c.b16 %v2348, %v2346
          %v2473 = vpack.c.b16 %v2349, %v2347
          %v2474 = vpack.c.b16 %v2352, %v2350
          %v2475 = vpack.c.b16 %v2353, %v2351
          %v2476 = vpack.c.b16 %v2356, %v2354
          %v2477 = vpack.c.b16 %v2357, %v2355
          %v2478 = vpack.c.b16 %v2360, %v2358
          %v2479 = vpack.c.b16 %v2361, %v2359
          %v2480 = vpack.c.b16 %v2364, %v2362
          %v2481 = vpack.c.b16 %v2365, %v2363
          %v2482 = vpack.c.b16 %v2368, %v2366
          %v2483 = vpack.c.b16 %v2369, %v2367
          %v2484 = vpack.c.b16 %v2372, %v2370
          %v2485 = vpack.c.b16 %v2373, %v2371
          %v2486 = vpack.c.b16 %v2376, %v2374
          %v2487 = vpack.c.b16 %v2377, %v2375
          %v2488 = vpack.c.b16 %v2380, %v2378
          %v2489 = vpack.c.b16 %v2381, %v2379
          %v2490 = vpack.c.b16 %v2384, %v2382
          %v2491 = vpack.c.b16 %v2385, %v2383
          %v2492 = vpack.c.b16 %v2388, %v2386
          %v2493 = vpack.c.b16 %v2389, %v2387
          %v2494 = vpack.c.b16 %v2392, %v2390
          %v2495 = vpack.c.b16 %v2393, %v2391
          %v2496 = vpack.c.b16 %v2396, %v2394
          %v2497 = vpack.c.b16 %v2397, %v2395
          %v2498 = vpack.c.b16 %v2400, %v2398
          %v2499 = vpack.c.b16 %v2401, %v2399
          %v2500 = vpack.c.b16 %v2404, %v2402
          %v2501 = vpack.c.b16 %v2405, %v2403
          %2598 = vmatpush.bf16.msra.mxu0 %v2420
          %2599 = vmatpush.bf16.msra.mxu0 %v2418
          %2600 = vmatpush.bf16.msra.mxu0 %v2416
          %2601 = vmatpush.bf16.msra.mxu0 %v2414
          %2602 = vmatpush.bf16.msra.mxu0 %v2412
          %2603 = vmatpush.bf16.msra.mxu0 %v2410
          %2604 = vmatpush.bf16.msra.mxu0 %v2408
          %2605 = vmatpush.bf16.msra.mxu0 %v2406
          %2606 = vmatmul.bf16.gmra.mxu0 %v690
          %v2607 = vpop.f32.mrf.mxu0
          %v2608 = vadd.f32 0.0, %v2607
          %v2609 = vpop.f32.mrf.mxu0
          %v2610 = vadd.f32 0.0, %v2609
          %2611 = vmatmul.bf16.gmra.mxu0 %v696
          %v2612 = vpop.f32.mrf.mxu0
          %v2613 = vadd.f32 0.0, %v2612
          %v2614 = vpop.f32.mrf.mxu0
          %v2615 = vadd.f32 0.0, %v2614
          %2616 = vmatmul.bf16.gmra.mxu0 %v702
          %v2617 = vpop.f32.mrf.mxu0
          %v2618 = vadd.f32 0.0, %v2617
          %v2619 = vpop.f32.mrf.mxu0
          %v2620 = vadd.f32 0.0, %v2619
          %2621 = vmatmul.bf16.gmra.mxu0 %v708
          %v2622 = vpop.f32.mrf.mxu0
          %v2623 = vadd.f32 0.0, %v2622
          %v2624 = vpop.f32.mrf.mxu0
          %v2625 = vadd.f32 0.0, %v2624
          %2626 = vmatmul.bf16.gmra.mxu0 %v714
          %v2627 = vpop.f32.mrf.mxu0
          %v2628 = vadd.f32 0.0, %v2627
          %v2629 = vpop.f32.mrf.mxu0
          %v2630 = vadd.f32 0.0, %v2629
          %2631 = vmatmul.bf16.gmra.mxu0 %v720
          %v2632 = vpop.f32.mrf.mxu0
          %v2633 = vadd.f32 0.0, %v2632
          %v2634 = vpop.f32.mrf.mxu0
          %v2635 = vadd.f32 0.0, %v2634
          %2636 = vmatmul.bf16.gmra.mxu0 %v726
          %v2637 = vpop.f32.mrf.mxu0
          %v2638 = vadd.f32 0.0, %v2637
          %v2639 = vpop.f32.mrf.mxu0
          %v2640 = vadd.f32 0.0, %v2639
          %2641 = vmatmul.bf16.gmra.mxu0 %v732
          %v2642 = vpop.f32.mrf.mxu0
          %v2643 = vadd.f32 0.0, %v2642
          %v2644 = vpop.f32.mrf.mxu0
          %v2645 = vadd.f32 0.0, %v2644
          %2646 = vdwg.mxu0
          %2647 = vmatpush.bf16.msra.mxu0 %v2436
          %2648 = vmatpush.bf16.msra.mxu0 %v2434
          %2649 = vmatpush.bf16.msra.mxu0 %v2432
          %2650 = vmatpush.bf16.msra.mxu0 %v2430
          %2651 = vmatpush.bf16.msra.mxu0 %v2428
          %2652 = vmatpush.bf16.msra.mxu0 %v2426
          %2653 = vmatpush.bf16.msra.mxu0 %v2424
          %2654 = vmatpush.bf16.msra.mxu0 %v2422
          %2655 = vmatmul.bf16.gmra.mxu0 %v691
          %v2656 = vpop.f32.mrf.mxu0
          %v2657 = vadd.f32 %v2608, %v2656
          %v2658 = vpop.f32.mrf.mxu0
          %v2659 = vadd.f32 %v2610, %v2658
          %2660 = vmatmul.bf16.gmra.mxu0 %v697
          %v2661 = vpop.f32.mrf.mxu0
          %v2662 = vadd.f32 %v2613, %v2661
          %v2663 = vpop.f32.mrf.mxu0
          %v2664 = vadd.f32 %v2615, %v2663
          %2665 = vmatmul.bf16.gmra.mxu0 %v703
          %v2666 = vpop.f32.mrf.mxu0
          %v2667 = vadd.f32 %v2618, %v2666
          %v2668 = vpop.f32.mrf.mxu0
          %v2669 = vadd.f32 %v2620, %v2668
          %2670 = vmatmul.bf16.gmra.mxu0 %v709
          %v2671 = vpop.f32.mrf.mxu0
          %v2672 = vadd.f32 %v2623, %v2671
          %v2673 = vpop.f32.mrf.mxu0
          %v2674 = vadd.f32 %v2625, %v2673
          %2675 = vmatmul.bf16.gmra.mxu0 %v715
          %v2676 = vpop.f32.mrf.mxu0
          %v2677 = vadd.f32 %v2628, %v2676
          %v2678 = vpop.f32.mrf.mxu0
          %v2679 = vadd.f32 %v2630, %v2678
          %2680 = vmatmul.bf16.gmra.mxu0 %v721
          %v2681 = vpop.f32.mrf.mxu0
          %v2682 = vadd.f32 %v2633, %v2681
          %v2683 = vpop.f32.mrf.mxu0
          %v2684 = vadd.f32 %v2635, %v2683
          %2685 = vmatmul.bf16.gmra.mxu0 %v727
          %v2686 = vpop.f32.mrf.mxu0
          %v2687 = vadd.f32 %v2638, %v2686
          %v2688 = vpop.f32.mrf.mxu0
          %v2689 = vadd.f32 %v2640, %v2688
          %2690 = vmatmul.bf16.gmra.mxu0 %v733
          %v2691 = vpop.f32.mrf.mxu0
          %v2692 = vadd.f32 %v2643, %v2691
          %v2693 = vpop.f32.mrf.mxu0
          %v2694 = vadd.f32 %v2645, %v2693
          %2695 = vdwg.mxu0
          %2696 = vmatpush.bf16.msra.mxu0 %v2452
          %2697 = vmatpush.bf16.msra.mxu0 %v2450
          %2698 = vmatpush.bf16.msra.mxu0 %v2448
          %2699 = vmatpush.bf16.msra.mxu0 %v2446
          %2700 = vmatpush.bf16.msra.mxu0 %v2444
          %2701 = vmatpush.bf16.msra.mxu0 %v2442
          %2702 = vmatpush.bf16.msra.mxu0 %v2440
          %2703 = vmatpush.bf16.msra.mxu0 %v2438
          %2704 = vmatmul.bf16.gmra.mxu0 %v692
          %v2705 = vpop.f32.mrf.mxu0
          %v2706 = vadd.f32 %v2657, %v2705
          %v2707 = vpop.f32.mrf.mxu0
          %v2708 = vadd.f32 %v2659, %v2707
          %2709 = vmatmul.bf16.gmra.mxu0 %v698
          %v2710 = vpop.f32.mrf.mxu0
          %v2711 = vadd.f32 %v2662, %v2710
          %v2712 = vpop.f32.mrf.mxu0
          %v2713 = vadd.f32 %v2664, %v2712
          %2714 = vmatmul.bf16.gmra.mxu0 %v704
          %v2715 = vpop.f32.mrf.mxu0
          %v2716 = vadd.f32 %v2667, %v2715
          %v2717 = vpop.f32.mrf.mxu0
          %v2718 = vadd.f32 %v2669, %v2717
          %2719 = vmatmul.bf16.gmra.mxu0 %v710
          %v2720 = vpop.f32.mrf.mxu0
          %v2721 = vadd.f32 %v2672, %v2720
          %v2722 = vpop.f32.mrf.mxu0
          %v2723 = vadd.f32 %v2674, %v2722
          %2724 = vmatmul.bf16.gmra.mxu0 %v716
          %v2725 = vpop.f32.mrf.mxu0
          %v2726 = vadd.f32 %v2677, %v2725
          %v2727 = vpop.f32.mrf.mxu0
          %v2728 = vadd.f32 %v2679, %v2727
          %2729 = vmatmul.bf16.gmra.mxu0 %v722
          %v2730 = vpop.f32.mrf.mxu0
          %v2731 = vadd.f32 %v2682, %v2730
          %v2732 = vpop.f32.mrf.mxu0
          %v2733 = vadd.f32 %v2684, %v2732
          %2734 = vmatmul.bf16.gmra.mxu0 %v728
          %v2735 = vpop.f32.mrf.mxu0
          %v2736 = vadd.f32 %v2687, %v2735
          %v2737 = vpop.f32.mrf.mxu0
          %v2738 = vadd.f32 %v2689, %v2737
          %2739 = vmatmul.bf16.gmra.mxu0 %v734
          %v2740 = vpop.f32.mrf.mxu0
          %v2741 = vadd.f32 %v2692, %v2740
          %v2742 = vpop.f32.mrf.mxu0
          %v2743 = vadd.f32 %v2694, %v2742
          %2744 = vdwg.mxu0
          %2745 = vmatpush.bf16.msra.mxu0 %v2468
          %2746 = vmatpush.bf16.msra.mxu0 %v2466
          %2747 = vmatpush.bf16.msra.mxu0 %v2464
          %2748 = vmatpush.bf16.msra.mxu0 %v2462
          %2749 = vmatpush.bf16.msra.mxu0 %v2460
          %2750 = vmatpush.bf16.msra.mxu0 %v2458
          %2751 = vmatpush.bf16.msra.mxu0 %v2456
          %2752 = vmatpush.bf16.msra.mxu0 %v2454
          %2753 = vmatmul.bf16.gmra.mxu0 %v693
          %v2754 = vpop.f32.mrf.mxu0
          %v2755 = vadd.f32 %v2706, %v2754
          %v2756 = vpop.f32.mrf.mxu0
          %v2757 = vadd.f32 %v2708, %v2756
          %2758 = vmatmul.bf16.gmra.mxu0 %v699
          %v2759 = vpop.f32.mrf.mxu0
          %v2760 = vadd.f32 %v2711, %v2759
          %v2761 = vpop.f32.mrf.mxu0
          %v2762 = vadd.f32 %v2713, %v2761
          %2763 = vmatmul.bf16.gmra.mxu0 %v705
          %v2764 = vpop.f32.mrf.mxu0
          %v2765 = vadd.f32 %v2716, %v2764
          %v2766 = vpop.f32.mrf.mxu0
          %v2767 = vadd.f32 %v2718, %v2766
          %2768 = vmatmul.bf16.gmra.mxu0 %v711
          %v2769 = vpop.f32.mrf.mxu0
          %v2770 = vadd.f32 %v2721, %v2769
          %v2771 = vpop.f32.mrf.mxu0
          %v2772 = vadd.f32 %v2723, %v2771
          %2773 = vmatmul.bf16.gmra.mxu0 %v717
          %v2774 = vpop.f32.mrf.mxu0
          %v2775 = vadd.f32 %v2726, %v2774
          %v2776 = vpop.f32.mrf.mxu0
          %v2777 = vadd.f32 %v2728, %v2776
          %2778 = vmatmul.bf16.gmra.mxu0 %v723
          %v2779 = vpop.f32.mrf.mxu0
          %v2780 = vadd.f32 %v2731, %v2779
          %v2781 = vpop.f32.mrf.mxu0
          %v2782 = vadd.f32 %v2733, %v2781
          %2783 = vmatmul.bf16.gmra.mxu0 %v729
          %v2784 = vpop.f32.mrf.mxu0
          %v2785 = vadd.f32 %v2736, %v2784
          %v2786 = vpop.f32.mrf.mxu0
          %v2787 = vadd.f32 %v2738, %v2786
          %2788 = vmatmul.bf16.gmra.mxu0 %v735
          %v2789 = vpop.f32.mrf.mxu0
          %v2790 = vadd.f32 %v2741, %v2789
          %v2791 = vpop.f32.mrf.mxu0
          %v2792 = vadd.f32 %v2743, %v2791
          %2793 = vdwg.mxu0
          %2794 = vmatpush.bf16.msra.mxu0 %v2484
          %2795 = vmatpush.bf16.msra.mxu0 %v2482
          %2796 = vmatpush.bf16.msra.mxu0 %v2480
          %2797 = vmatpush.bf16.msra.mxu0 %v2478
          %2798 = vmatpush.bf16.msra.mxu0 %v2476
          %2799 = vmatpush.bf16.msra.mxu0 %v2474
          %2800 = vmatpush.bf16.msra.mxu0 %v2472
          %2801 = vmatpush.bf16.msra.mxu0 %v2470
          %2802 = vmatmul.bf16.gmra.mxu0 %v694
          %v2803 = vpop.f32.mrf.mxu0
          %v2804 = vadd.f32 %v2755, %v2803
          %v2805 = vpop.f32.mrf.mxu0
          %v2806 = vadd.f32 %v2757, %v2805
          %2807 = vmatmul.bf16.gmra.mxu0 %v700
          %v2808 = vpop.f32.mrf.mxu0
          %v2809 = vadd.f32 %v2760, %v2808
          %v2810 = vpop.f32.mrf.mxu0
          %v2811 = vadd.f32 %v2762, %v2810
          %2812 = vmatmul.bf16.gmra.mxu0 %v706
          %v2813 = vpop.f32.mrf.mxu0
          %v2814 = vadd.f32 %v2765, %v2813
          %v2815 = vpop.f32.mrf.mxu0
          %v2816 = vadd.f32 %v2767, %v2815
          %2817 = vmatmul.bf16.gmra.mxu0 %v712
          %v2818 = vpop.f32.mrf.mxu0
          %v2819 = vadd.f32 %v2770, %v2818
          %v2820 = vpop.f32.mrf.mxu0
          %v2821 = vadd.f32 %v2772, %v2820
          %2822 = vmatmul.bf16.gmra.mxu0 %v718
          %v2823 = vpop.f32.mrf.mxu0
          %v2824 = vadd.f32 %v2775, %v2823
          %v2825 = vpop.f32.mrf.mxu0
          %v2826 = vadd.f32 %v2777, %v2825
          %2827 = vmatmul.bf16.gmra.mxu0 %v724
          %v2828 = vpop.f32.mrf.mxu0
          %v2829 = vadd.f32 %v2780, %v2828
          %v2830 = vpop.f32.mrf.mxu0
          %v2831 = vadd.f32 %v2782, %v2830
          %2832 = vmatmul.bf16.gmra.mxu0 %v730
          %v2833 = vpop.f32.mrf.mxu0
          %v2834 = vadd.f32 %v2785, %v2833
          %v2835 = vpop.f32.mrf.mxu0
          %v2836 = vadd.f32 %v2787, %v2835
          %2837 = vmatmul.bf16.gmra.mxu0 %v736
          %v2838 = vpop.f32.mrf.mxu0
          %v2839 = vadd.f32 %v2790, %v2838
          %v2840 = vpop.f32.mrf.mxu0
          %v2841 = vadd.f32 %v2792, %v2840
          %2842 = vdwg.mxu0
          %2843 = vmatpush.bf16.msra.mxu0 %v2500
          %2844 = vmatpush.bf16.msra.mxu0 %v2498
          %2845 = vmatpush.bf16.msra.mxu0 %v2496
          %2846 = vmatpush.bf16.msra.mxu0 %v2494
          %2847 = vmatpush.bf16.msra.mxu0 %v2492
          %2848 = vmatpush.bf16.msra.mxu0 %v2490
          %2849 = vmatpush.bf16.msra.mxu0 %v2488
          %2850 = vmatpush.bf16.msra.mxu0 %v2486
          %2851 = vmatmul.bf16.gmra.mxu0 %v695
          %v2852 = vpop.f32.mrf.mxu0
          %v2853 = vadd.f32 %v2804, %v2852
          %v2854 = vpop.f32.mrf.mxu0
          %v2855 = vadd.f32 %v2806, %v2854
          %2856 = vmatmul.bf16.gmra.mxu0 %v701
          %v2857 = vpop.f32.mrf.mxu0
          %v2858 = vadd.f32 %v2809, %v2857
          %v2859 = vpop.f32.mrf.mxu0
          %v2860 = vadd.f32 %v2811, %v2859
          %2861 = vmatmul.bf16.gmra.mxu0 %v707
          %v2862 = vpop.f32.mrf.mxu0
          %v2863 = vadd.f32 %v2814, %v2862
          %v2864 = vpop.f32.mrf.mxu0
          %v2865 = vadd.f32 %v2816, %v2864
          %2866 = vmatmul.bf16.gmra.mxu0 %v713
          %v2867 = vpop.f32.mrf.mxu0
          %v2868 = vadd.f32 %v2819, %v2867
          %v2869 = vpop.f32.mrf.mxu0
          %v2870 = vadd.f32 %v2821, %v2869
          %2871 = vmatmul.bf16.gmra.mxu0 %v719
          %v2872 = vpop.f32.mrf.mxu0
          %v2873 = vadd.f32 %v2824, %v2872
          %v2874 = vpop.f32.mrf.mxu0
          %v2875 = vadd.f32 %v2826, %v2874
          %2876 = vmatmul.bf16.gmra.mxu0 %v725
          %v2877 = vpop.f32.mrf.mxu0
          %v2878 = vadd.f32 %v2829, %v2877
          %v2879 = vpop.f32.mrf.mxu0
          %v2880 = vadd.f32 %v2831, %v2879
          %2881 = vmatmul.bf16.gmra.mxu0 %v731
          %v2882 = vpop.f32.mrf.mxu0
          %v2883 = vadd.f32 %v2834, %v2882
          %v2884 = vpop.f32.mrf.mxu0
          %v2885 = vadd.f32 %v2836, %v2884
          %2886 = vmatmul.bf16.gmra.mxu0 %v737
          %v2887 = vpop.f32.mrf.mxu0
          %v2888 = vadd.f32 %v2839, %v2887
          %v2889 = vpop.f32.mrf.mxu0
          %v2890 = vadd.f32 %v2841, %v2889
          %2891 = vdwg.mxu0
          %2892 = vmatpush.bf16.msra.mxu0 %v2421
          %2893 = vmatpush.bf16.msra.mxu0 %v2419
          %2894 = vmatpush.bf16.msra.mxu0 %v2417
          %2895 = vmatpush.bf16.msra.mxu0 %v2415
          %2896 = vmatpush.bf16.msra.mxu0 %v2413
          %2897 = vmatpush.bf16.msra.mxu0 %v2411
          %2898 = vmatpush.bf16.msra.mxu0 %v2409
          %2899 = vmatpush.bf16.msra.mxu0 %v2407
          %2900 = vmatmul.bf16.gmra.mxu0 %v690
          %v2901 = vpop.f32.mrf.mxu0
          %v2902 = vadd.f32 0.0, %v2901
          %v2903 = vpop.f32.mrf.mxu0
          %v2904 = vadd.f32 0.0, %v2903
          %2905 = vmatmul.bf16.gmra.mxu0 %v696
          %v2906 = vpop.f32.mrf.mxu0
          %v2907 = vadd.f32 0.0, %v2906
          %v2908 = vpop.f32.mrf.mxu0
          %v2909 = vadd.f32 0.0, %v2908
          %2910 = vmatmul.bf16.gmra.mxu0 %v702
          %v2911 = vpop.f32.mrf.mxu0
          %v2912 = vadd.f32 0.0, %v2911
          %v2913 = vpop.f32.mrf.mxu0
          %v2914 = vadd.f32 0.0, %v2913
          %2915 = vmatmul.bf16.gmra.mxu0 %v708
          %v2916 = vpop.f32.mrf.mxu0
          %v2917 = vadd.f32 0.0, %v2916
          %v2918 = vpop.f32.mrf.mxu0
          %v2919 = vadd.f32 0.0, %v2918
          %2920 = vmatmul.bf16.gmra.mxu0 %v714
          %v2921 = vpop.f32.mrf.mxu0
          %v2922 = vadd.f32 0.0, %v2921
          %v2923 = vpop.f32.mrf.mxu0
          %v2924 = vadd.f32 0.0, %v2923
          %2925 = vmatmul.bf16.gmra.mxu0 %v720
          %v2926 = vpop.f32.mrf.mxu0
          %v2927 = vadd.f32 0.0, %v2926
          %v2928 = vpop.f32.mrf.mxu0
          %v2929 = vadd.f32 0.0, %v2928
          %2930 = vmatmul.bf16.gmra.mxu0 %v726
          %v2931 = vpop.f32.mrf.mxu0
          %v2932 = vadd.f32 0.0, %v2931
          %v2933 = vpop.f32.mrf.mxu0
          %v2934 = vadd.f32 0.0, %v2933
          %2935 = vmatmul.bf16.gmra.mxu0 %v732
          %v2936 = vpop.f32.mrf.mxu0
          %v2937 = vadd.f32 0.0, %v2936
          %v2938 = vpop.f32.mrf.mxu0
          %v2939 = vadd.f32 0.0, %v2938
          %2940 = vdwg.mxu0
          %2941 = vmatpush.bf16.msra.mxu0 %v2437
          %2942 = vmatpush.bf16.msra.mxu0 %v2435
          %2943 = vmatpush.bf16.msra.mxu0 %v2433
          %2944 = vmatpush.bf16.msra.mxu0 %v2431
          %2945 = vmatpush.bf16.msra.mxu0 %v2429
          %2946 = vmatpush.bf16.msra.mxu0 %v2427
          %2947 = vmatpush.bf16.msra.mxu0 %v2425
          %2948 = vmatpush.bf16.msra.mxu0 %v2423
          %2949 = vmatmul.bf16.gmra.mxu0 %v691
          %v2950 = vpop.f32.mrf.mxu0
          %v2951 = vadd.f32 %v2902, %v2950
          %v2952 = vpop.f32.mrf.mxu0
          %v2953 = vadd.f32 %v2904, %v2952
          %2954 = vmatmul.bf16.gmra.mxu0 %v697
          %v2955 = vpop.f32.mrf.mxu0
          %v2956 = vadd.f32 %v2907, %v2955
          %v2957 = vpop.f32.mrf.mxu0
          %v2958 = vadd.f32 %v2909, %v2957
          %2959 = vmatmul.bf16.gmra.mxu0 %v703
          %v2960 = vpop.f32.mrf.mxu0
          %v2961 = vadd.f32 %v2912, %v2960
          %v2962 = vpop.f32.mrf.mxu0
          %v2963 = vadd.f32 %v2914, %v2962
          %2964 = vmatmul.bf16.gmra.mxu0 %v709
          %v2965 = vpop.f32.mrf.mxu0
          %v2966 = vadd.f32 %v2917, %v2965
          %v2967 = vpop.f32.mrf.mxu0
          %v2968 = vadd.f32 %v2919, %v2967
          %2969 = vmatmul.bf16.gmra.mxu0 %v715
          %v2970 = vpop.f32.mrf.mxu0
          %v2971 = vadd.f32 %v2922, %v2970
          %v2972 = vpop.f32.mrf.mxu0
          %v2973 = vadd.f32 %v2924, %v2972
          %2974 = vmatmul.bf16.gmra.mxu0 %v721
          %v2975 = vpop.f32.mrf.mxu0
          %v2976 = vadd.f32 %v2927, %v2975
          %v2977 = vpop.f32.mrf.mxu0
          %v2978 = vadd.f32 %v2929, %v2977
          %2979 = vmatmul.bf16.gmra.mxu0 %v727
          %v2980 = vpop.f32.mrf.mxu0
          %v2981 = vadd.f32 %v2932, %v2980
          %v2982 = vpop.f32.mrf.mxu0
          %v2983 = vadd.f32 %v2934, %v2982
          %2984 = vmatmul.bf16.gmra.mxu0 %v733
          %v2985 = vpop.f32.mrf.mxu0
          %v2986 = vadd.f32 %v2937, %v2985
          %v2987 = vpop.f32.mrf.mxu0
          %v2988 = vadd.f32 %v2939, %v2987
          %2989 = vdwg.mxu0
          %2990 = vmatpush.bf16.msra.mxu0 %v2453
          %2991 = vmatpush.bf16.msra.mxu0 %v2451
          %2992 = vmatpush.bf16.msra.mxu0 %v2449
          %2993 = vmatpush.bf16.msra.mxu0 %v2447
          %2994 = vmatpush.bf16.msra.mxu0 %v2445
          %2995 = vmatpush.bf16.msra.mxu0 %v2443
          %2996 = vmatpush.bf16.msra.mxu0 %v2441
          %2997 = vmatpush.bf16.msra.mxu0 %v2439
          %2998 = vmatmul.bf16.gmra.mxu0 %v692
          %v2999 = vpop.f32.mrf.mxu0
          %v3000 = vadd.f32 %v2951, %v2999
          %v3001 = vpop.f32.mrf.mxu0
          %v3002 = vadd.f32 %v2953, %v3001
          %3003 = vmatmul.bf16.gmra.mxu0 %v698
          %v3004 = vpop.f32.mrf.mxu0
          %v3005 = vadd.f32 %v2956, %v3004
          %v3006 = vpop.f32.mrf.mxu0
          %v3007 = vadd.f32 %v2958, %v3006
          %3008 = vmatmul.bf16.gmra.mxu0 %v704
          %v3009 = vpop.f32.mrf.mxu0
          %v3010 = vadd.f32 %v2961, %v3009
          %v3011 = vpop.f32.mrf.mxu0
          %v3012 = vadd.f32 %v2963, %v3011
          %3013 = vmatmul.bf16.gmra.mxu0 %v710
          %v3014 = vpop.f32.mrf.mxu0
          %v3015 = vadd.f32 %v2966, %v3014
          %v3016 = vpop.f32.mrf.mxu0
          %v3017 = vadd.f32 %v2968, %v3016
          %3018 = vmatmul.bf16.gmra.mxu0 %v716
          %v3019 = vpop.f32.mrf.mxu0
          %v3020 = vadd.f32 %v2971, %v3019
          %v3021 = vpop.f32.mrf.mxu0
          %v3022 = vadd.f32 %v2973, %v3021
          %3023 = vmatmul.bf16.gmra.mxu0 %v722
          %v3024 = vpop.f32.mrf.mxu0
          %v3025 = vadd.f32 %v2976, %v3024
          %v3026 = vpop.f32.mrf.mxu0
          %v3027 = vadd.f32 %v2978, %v3026
          %3028 = vmatmul.bf16.gmra.mxu0 %v728
          %v3029 = vpop.f32.mrf.mxu0
          %v3030 = vadd.f32 %v2981, %v3029
          %v3031 = vpop.f32.mrf.mxu0
          %v3032 = vadd.f32 %v2983, %v3031
          %3033 = vmatmul.bf16.gmra.mxu0 %v734
          %v3034 = vpop.f32.mrf.mxu0
          %v3035 = vadd.f32 %v2986, %v3034
          %v3036 = vpop.f32.mrf.mxu0
          %v3037 = vadd.f32 %v2988, %v3036
          %3038 = vdwg.mxu0
          %3039 = vmatpush.bf16.msra.mxu0 %v2469
          %3040 = vmatpush.bf16.msra.mxu0 %v2467
          %3041 = vmatpush.bf16.msra.mxu0 %v2465
          %3042 = vmatpush.bf16.msra.mxu0 %v2463
          %3043 = vmatpush.bf16.msra.mxu0 %v2461
          %3044 = vmatpush.bf16.msra.mxu0 %v2459
          %3045 = vmatpush.bf16.msra.mxu0 %v2457
          %3046 = vmatpush.bf16.msra.mxu0 %v2455
          %3047 = vmatmul.bf16.gmra.mxu0 %v693
          %v3048 = vpop.f32.mrf.mxu0
          %v3049 = vadd.f32 %v3000, %v3048
          %v3050 = vpop.f32.mrf.mxu0
          %v3051 = vadd.f32 %v3002, %v3050
          %3052 = vmatmul.bf16.gmra.mxu0 %v699
          %v3053 = vpop.f32.mrf.mxu0
          %v3054 = vadd.f32 %v3005, %v3053
          %v3055 = vpop.f32.mrf.mxu0
          %v3056 = vadd.f32 %v3007, %v3055
          %3057 = vmatmul.bf16.gmra.mxu0 %v705
          %v3058 = vpop.f32.mrf.mxu0
          %v3059 = vadd.f32 %v3010, %v3058
          %v3060 = vpop.f32.mrf.mxu0
          %v3061 = vadd.f32 %v3012, %v3060
          %3062 = vmatmul.bf16.gmra.mxu0 %v711
          %v3063 = vpop.f32.mrf.mxu0
          %v3064 = vadd.f32 %v3015, %v3063
          %v3065 = vpop.f32.mrf.mxu0
          %v3066 = vadd.f32 %v3017, %v3065
          %3067 = vmatmul.bf16.gmra.mxu0 %v717
          %v3068 = vpop.f32.mrf.mxu0
          %v3069 = vadd.f32 %v3020, %v3068
          %v3070 = vpop.f32.mrf.mxu0
          %v3071 = vadd.f32 %v3022, %v3070
          %3072 = vmatmul.bf16.gmra.mxu0 %v723
          %v3073 = vpop.f32.mrf.mxu0
          %v3074 = vadd.f32 %v3025, %v3073
          %v3075 = vpop.f32.mrf.mxu0
          %v3076 = vadd.f32 %v3027, %v3075
          %3077 = vmatmul.bf16.gmra.mxu0 %v729
          %v3078 = vpop.f32.mrf.mxu0
          %v3079 = vadd.f32 %v3030, %v3078
          %v3080 = vpop.f32.mrf.mxu0
          %v3081 = vadd.f32 %v3032, %v3080
          %3082 = vmatmul.bf16.gmra.mxu0 %v735
          %v3083 = vpop.f32.mrf.mxu0
          %v3084 = vadd.f32 %v3035, %v3083
          %v3085 = vpop.f32.mrf.mxu0
          %v3086 = vadd.f32 %v3037, %v3085
          %3087 = vdwg.mxu0
          %3088 = vmatpush.bf16.msra.mxu0 %v2485
          %3089 = vmatpush.bf16.msra.mxu0 %v2483
          %3090 = vmatpush.bf16.msra.mxu0 %v2481
          %3091 = vmatpush.bf16.msra.mxu0 %v2479
          %3092 = vmatpush.bf16.msra.mxu0 %v2477
          %3093 = vmatpush.bf16.msra.mxu0 %v2475
          %3094 = vmatpush.bf16.msra.mxu0 %v2473
          %3095 = vmatpush.bf16.msra.mxu0 %v2471
          %3096 = vmatmul.bf16.gmra.mxu0 %v694
          %v3097 = vpop.f32.mrf.mxu0
          %v3098 = vadd.f32 %v3049, %v3097
          %v3099 = vpop.f32.mrf.mxu0
          %v3100 = vadd.f32 %v3051, %v3099
          %3101 = vmatmul.bf16.gmra.mxu0 %v700
          %v3102 = vpop.f32.mrf.mxu0
          %v3103 = vadd.f32 %v3054, %v3102
          %v3104 = vpop.f32.mrf.mxu0
          %v3105 = vadd.f32 %v3056, %v3104
          %3106 = vmatmul.bf16.gmra.mxu0 %v706
          %v3107 = vpop.f32.mrf.mxu0
          %v3108 = vadd.f32 %v3059, %v3107
          %v3109 = vpop.f32.mrf.mxu0
          %v3110 = vadd.f32 %v3061, %v3109
          %3111 = vmatmul.bf16.gmra.mxu0 %v712
          %v3112 = vpop.f32.mrf.mxu0
          %v3113 = vadd.f32 %v3064, %v3112
          %v3114 = vpop.f32.mrf.mxu0
          %v3115 = vadd.f32 %v3066, %v3114
          %3116 = vmatmul.bf16.gmra.mxu0 %v718
          %v3117 = vpop.f32.mrf.mxu0
          %v3118 = vadd.f32 %v3069, %v3117
          %v3119 = vpop.f32.mrf.mxu0
          %v3120 = vadd.f32 %v3071, %v3119
          %3121 = vmatmul.bf16.gmra.mxu0 %v724
          %v3122 = vpop.f32.mrf.mxu0
          %v3123 = vadd.f32 %v3074, %v3122
          %v3124 = vpop.f32.mrf.mxu0
          %v3125 = vadd.f32 %v3076, %v3124
          %3126 = vmatmul.bf16.gmra.mxu0 %v730
          %v3127 = vpop.f32.mrf.mxu0
          %v3128 = vadd.f32 %v3079, %v3127
          %v3129 = vpop.f32.mrf.mxu0
          %v3130 = vadd.f32 %v3081, %v3129
          %3131 = vmatmul.bf16.gmra.mxu0 %v736
          %v3132 = vpop.f32.mrf.mxu0
          %v3133 = vadd.f32 %v3084, %v3132
          %v3134 = vpop.f32.mrf.mxu0
          %v3135 = vadd.f32 %v3086, %v3134
          %3136 = vdwg.mxu0
          %3137 = vmatpush.bf16.msra.mxu0 %v2501
          %3138 = vmatpush.bf16.msra.mxu0 %v2499
          %3139 = vmatpush.bf16.msra.mxu0 %v2497
          %3140 = vmatpush.bf16.msra.mxu0 %v2495
          %3141 = vmatpush.bf16.msra.mxu0 %v2493
          %3142 = vmatpush.bf16.msra.mxu0 %v2491
          %3143 = vmatpush.bf16.msra.mxu0 %v2489
          %3144 = vmatpush.bf16.msra.mxu0 %v2487
          %3145 = vmatmul.bf16.gmra.mxu0 %v695
          %v3146 = vpop.f32.mrf.mxu0
          %v3147 = vadd.f32 %v3098, %v3146
          %v3148 = vpop.f32.mrf.mxu0
          %v3149 = vadd.f32 %v3100, %v3148
          %3150 = vmatmul.bf16.gmra.mxu0 %v701
          %v3151 = vpop.f32.mrf.mxu0
          %v3152 = vadd.f32 %v3103, %v3151
          %v3153 = vpop.f32.mrf.mxu0
          %v3154 = vadd.f32 %v3105, %v3153
          %3155 = vmatmul.bf16.gmra.mxu0 %v707
          %v3156 = vpop.f32.mrf.mxu0
          %v3157 = vadd.f32 %v3108, %v3156
          %v3158 = vpop.f32.mrf.mxu0
          %v3159 = vadd.f32 %v3110, %v3158
          %3160 = vmatmul.bf16.gmra.mxu0 %v713
          %v3161 = vpop.f32.mrf.mxu0
          %v3162 = vadd.f32 %v3113, %v3161
          %v3163 = vpop.f32.mrf.mxu0
          %v3164 = vadd.f32 %v3115, %v3163
          %3165 = vmatmul.bf16.gmra.mxu0 %v719
          %v3166 = vpop.f32.mrf.mxu0
          %v3167 = vadd.f32 %v3118, %v3166
          %v3168 = vpop.f32.mrf.mxu0
          %v3169 = vadd.f32 %v3120, %v3168
          %3170 = vmatmul.bf16.gmra.mxu0 %v725
          %v3171 = vpop.f32.mrf.mxu0
          %v3172 = vadd.f32 %v3123, %v3171
          %v3173 = vpop.f32.mrf.mxu0
          %v3174 = vadd.f32 %v3125, %v3173
          %3175 = vmatmul.bf16.gmra.mxu0 %v731
          %v3176 = vpop.f32.mrf.mxu0
          %v3177 = vadd.f32 %v3128, %v3176
          %v3178 = vpop.f32.mrf.mxu0
          %v3179 = vadd.f32 %v3130, %v3178
          %3180 = vmatmul.bf16.gmra.mxu0 %v737
          %v3181 = vpop.f32.mrf.mxu0
          %v3182 = vadd.f32 %v3133, %v3181
          %v3183 = vpop.f32.mrf.mxu0
          %v3184 = vadd.f32 %v3135, %v3183
          %3185 = vdwg.mxu0
          %v3186 = vadd.f32 %v1934, %v2853
          %v3187 = vadd.f32 %v1983, %v3147
          %v3188 = vadd.f32 %v1936, %v2855
          %v3189 = vadd.f32 %v1985, %v3149
          %v3190 = vadd.f32 %v1939, %v2858
          %v3191 = vadd.f32 %v1988, %v3152
          %v3192 = vadd.f32 %v1941, %v2860
          %v3193 = vadd.f32 %v1990, %v3154
          %v3194 = vadd.f32 %v1944, %v2863
          %v3195 = vadd.f32 %v1993, %v3157
          %v3196 = vadd.f32 %v1946, %v2865
          %v3197 = vadd.f32 %v1995, %v3159
          %v3198 = vadd.f32 %v1949, %v2868
          %v3199 = vadd.f32 %v1998, %v3162
          %v3200 = vadd.f32 %v1951, %v2870
          %v3201 = vadd.f32 %v2000, %v3164
          %v3202 = vadd.f32 %v1954, %v2873
          %v3203 = vadd.f32 %v2003, %v3167
          %v3204 = vadd.f32 %v1956, %v2875
          %v3205 = vadd.f32 %v2005, %v3169
          %v3206 = vadd.f32 %v1959, %v2878
          %v3207 = vadd.f32 %v2008, %v3172
          %v3208 = vadd.f32 %v1961, %v2880
          %v3209 = vadd.f32 %v2010, %v3174
          %v3210 = vadd.f32 %v1964, %v2883
          %v3211 = vadd.f32 %v2013, %v3177
          %v3212 = vadd.f32 %v1966, %v2885
          %v3213 = vadd.f32 %v2015, %v3179
          %v3214 = vadd.f32 %v1969, %v2888
          %v3215 = vadd.f32 %v2018, %v3182
          %v3216 = vadd.f32 %v1971, %v2890
          %v3217 = vadd.f32 %v2020, %v3184
          %v3218 = vmax.f32 %v3186, 0.0
          %v3219 = vmax.f32 %v3187, 0.0
          %v3220 = vmax.f32 %v3188, 0.0
          %v3221 = vmax.f32 %v3189, 0.0
          %v3222 = vmax.f32 %v3190, 0.0
          %v3223 = vmax.f32 %v3191, 0.0
          %v3224 = vmax.f32 %v3192, 0.0
          %v3225 = vmax.f32 %v3193, 0.0
          %v3226 = vmax.f32 %v3194, 0.0
          %v3227 = vmax.f32 %v3195, 0.0
          %v3228 = vmax.f32 %v3196, 0.0
          %v3229 = vmax.f32 %v3197, 0.0
          %v3230 = vmax.f32 %v3198, 0.0
          %v3231 = vmax.f32 %v3199, 0.0
          %v3232 = vmax.f32 %v3200, 0.0
          %v3233 = vmax.f32 %v3201, 0.0
          %v3234 = vmax.f32 %v3202, 0.0
          %v3235 = vmax.f32 %v3203, 0.0
          %v3236 = vmax.f32 %v3204, 0.0
          %v3237 = vmax.f32 %v3205, 0.0
          %v3238 = vmax.f32 %v3206, 0.0
          %v3239 = vmax.f32 %v3207, 0.0
          %v3240 = vmax.f32 %v3208, 0.0
          %v3241 = vmax.f32 %v3209, 0.0
          %v3242 = vmax.f32 %v3210, 0.0
          %v3243 = vmax.f32 %v3211, 0.0
          %v3244 = vmax.f32 %v3212, 0.0
          %v3245 = vmax.f32 %v3213, 0.0
          %v3246 = vmax.f32 %v3214, 0.0
          %v3247 = vmax.f32 %v3215, 0.0
          %v3248 = vmax.f32 %v3216, 0.0
          %v3249 = vmax.f32 %v3217, 0.0
          %s3250 = smul.u32 %s26, 256
          %v3251 = vpack.c.bf16 %v3219, %v3218
          %v3252 = vpack.c.bf16 %v3221, %v3220
          %v3253 = vpack.c.bf16 %v3223, %v3222
          %v3254 = vpack.c.bf16 %v3225, %v3224
          %v3255 = vpack.c.bf16 %v3227, %v3226
          %v3256 = vpack.c.bf16 %v3229, %v3228
          %v3257 = vpack.c.bf16 %v3231, %v3230
          %v3258 = vpack.c.bf16 %v3233, %v3232
          %v3259 = vpack.c.bf16 %v3235, %v3234
          %v3260 = vpack.c.bf16 %v3237, %v3236
          %v3261 = vpack.c.bf16 %v3239, %v3238
          %v3262 = vpack.c.bf16 %v3241, %v3240
          %v3263 = vpack.c.bf16 %v3243, %v3242
          %v3264 = vpack.c.bf16 %v3245, %v3244
          %v3265 = vpack.c.bf16 %v3247, %v3246
          %v3266 = vpack.c.bf16 %v3249, %v3248
          %s3267 = sshra.s32 %s3250, 7
          %s3268 = sand.u32 %s3250, 127
          %s3269 = smul.addr %s3267, 4
          %s3270 = scalar_lea.vmem [#allocation2], %s3269
          %3271 = vst [vmem:[%s3270] sm:$0xff] %v3251
          %3272 = vst [vmem:[%s3270 + $0x18] sm:$0xff] %v3252
          %3273 = vst [vmem:[%s3270 + $0x30] sm:$0xff] %v3253
          %3274 = vst [vmem:[%s3270 + $0x48] sm:$0xff] %v3254
          %3275 = vst [vmem:[%s3270 + $0x60] sm:$0xff] %v3255
          %3276 = vst [vmem:[%s3270 + $0x78] sm:$0xff] %v3256
          %3277 = vst [vmem:[%s3270 + $0x90] sm:$0xff] %v3257
          %3278 = vst [vmem:[%s3270 + $0xa8] sm:$0xff] %v3258
          %3279 = vst [vmem:[%s3270 + $0xc0] sm:$0xff] %v3259
          %3280 = vst [vmem:[%s3270 + $0xd8] sm:$0xff] %v3260
          %3281 = vst [vmem:[%s3270 + $0xf0] sm:$0xff] %v3261
          %3282 = vst [vmem:[%s3270 + $0x108] sm:$0xff] %v3262
          %3283 = vst [vmem:[%s3270 + $0x120] sm:$0xff] %v3263
          %3284 = vst [vmem:[%s3270 + $0x138] sm:$0xff] %v3264
          %3285 = vst [vmem:[%s3270 + $0x150] sm:$0xff] %v3265
          %3286 = vst [vmem:[%s3270 + $0x168] sm:$0xff] %v3266
        $region64: #{tpu_custom_call.1} parent=39 // pred_fallthru
          _
        %p3287 = scmp.eq.s32.totalorder %s25, 1
        // Predicated region
        $region65: #{tpu_custom_call.1} parent=39 // pred_check
          %p3288 = pneg %p3287
        $region66: #{tpu_custom_call.1} parent=39 // pred_check_branch
          %3290 = sbr.rel (%p3288) target = $region68
        $region67: #{tpu_custom_call.1} parent=39 // pred_region
          %v3291 = vld [vmem:[#allocation2] sm:$0xff]
          %v3292 = vld [vmem:[#allocation2 + $0x8] sm:$0xff]
          %v3293 = vld [vmem:[#allocation2 + $0x10] sm:$0xff]
          %v3294 = vld [vmem:[#allocation2 + $0x18] sm:$0xff]
          %v3295 = vld [vmem:[#allocation2 + $0x20] sm:$0xff]
          %v3296 = vld [vmem:[#allocation2 + $0x28] sm:$0xff]
          %v3297 = vld [vmem:[#allocation2 + $0x30] sm:$0xff]
          %v3298 = vld [vmem:[#allocation2 + $0x38] sm:$0xff]
          %v3299 = vld [vmem:[#allocation2 + $0x40] sm:$0xff]
          %v3300 = vld [vmem:[#allocation2 + $0x48] sm:$0xff]
          %v3301 = vld [vmem:[#allocation2 + $0x50] sm:$0xff]
          %v3302 = vld [vmem:[#allocation2 + $0x58] sm:$0xff]
          %v3303 = vld [vmem:[#allocation2 + $0x60] sm:$0xff]
          %v3304 = vld [vmem:[#allocation2 + $0x68] sm:$0xff]
          %v3305 = vld [vmem:[#allocation2 + $0x70] sm:$0xff]
          %v3306 = vld [vmem:[#allocation2 + $0x78] sm:$0xff]
          %v3307 = vld [vmem:[#allocation2 + $0x80] sm:$0xff]
          %v3308 = vld [vmem:[#allocation2 + $0x88] sm:$0xff]
          %v3309 = vld [vmem:[#allocation2 + $0x90] sm:$0xff]
          %v3310 = vld [vmem:[#allocation2 + $0x98] sm:$0xff]
          %v3311 = vld [vmem:[#allocation2 + $0xa0] sm:$0xff]
          %v3312 = vld [vmem:[#allocation2 + $0xa8] sm:$0xff]
          %v3313 = vld [vmem:[#allocation2 + $0xb0] sm:$0xff]
          %v3314 = vld [vmem:[#allocation2 + $0xb8] sm:$0xff]
          %v3315 = vld [vmem:[#allocation2 + $0xc0] sm:$0xff]
          %v3316 = vld [vmem:[#allocation2 + $0xc8] sm:$0xff]
          %v3317 = vld [vmem:[#allocation2 + $0xd0] sm:$0xff]
          %v3318 = vld [vmem:[#allocation2 + $0xd8] sm:$0xff]
          %v3319 = vld [vmem:[#allocation2 + $0xe0] sm:$0xff]
          %v3320 = vld [vmem:[#allocation2 + $0xe8] sm:$0xff]
          %v3321 = vld [vmem:[#allocation2 + $0xf0] sm:$0xff]
          %v3322 = vld [vmem:[#allocation2 + $0xf8] sm:$0xff]
          %v3323 = vld [vmem:[#allocation2 + $0x100] sm:$0xff]
          %v3324 = vld [vmem:[#allocation2 + $0x108] sm:$0xff]
          %v3325 = vld [vmem:[#allocation2 + $0x110] sm:$0xff]
          %v3326 = vld [vmem:[#allocation2 + $0x118] sm:$0xff]
          %v3327 = vld [vmem:[#allocation2 + $0x120] sm:$0xff]
          %v3328 = vld [vmem:[#allocation2 + $0x128] sm:$0xff]
          %v3329 = vld [vmem:[#allocation2 + $0x130] sm:$0xff]
          %v3330 = vld [vmem:[#allocation2 + $0x138] sm:$0xff]
          %v3331 = vld [vmem:[#allocation2 + $0x140] sm:$0xff]
          %v3332 = vld [vmem:[#allocation2 + $0x148] sm:$0xff]
          %v3333 = vld [vmem:[#allocation2 + $0x150] sm:$0xff]
          %v3334 = vld [vmem:[#allocation2 + $0x158] sm:$0xff]
          %v3335 = vld [vmem:[#allocation2 + $0x160] sm:$0xff]
          %v3336 = vld [vmem:[#allocation2 + $0x168] sm:$0xff]
          %v3337 = vld [vmem:[#allocation2 + $0x170] sm:$0xff]
          %v3338 = vld [vmem:[#allocation2 + $0x178] sm:$0xff]
          %v3339 = vld [vmem:[%s319] sm:$0xff]
          %v3340 = vld [vmem:[%s319 + $0x8] sm:$0xff]
          %v3341 = vld [vmem:[%s319 + $0x10] sm:$0xff]
          %v3342 = vld [vmem:[%s319 + $0x18] sm:$0xff]
          %v3343 = vld [vmem:[%s319 + $0x20] sm:$0xff]
          %v3344 = vld [vmem:[%s319 + $0x28] sm:$0xff]
          %v3345 = vld [vmem:[%s319 + $0x30] sm:$0xff]
          %v3346 = vld [vmem:[%s319 + $0x38] sm:$0xff]
          %v3347 = vld [vmem:[%s319 + $0x40] sm:$0xff]
          %v3348 = vld [vmem:[%s319 + $0x48] sm:$0xff]
          %v3349 = vld [vmem:[%s319 + $0x50] sm:$0xff]
          %v3350 = vld [vmem:[%s319 + $0x58] sm:$0xff]
          %v3351 = vld [vmem:[%s319 + $0x60] sm:$0xff]
          %v3352 = vld [vmem:[%s319 + $0x68] sm:$0xff]
          %v3353 = vld [vmem:[%s319 + $0x70] sm:$0xff]
          %v3354 = vld [vmem:[%s319 + $0x78] sm:$0xff]
          %v3355 = vld [vmem:[%s319 + $0x80] sm:$0xff]
          %v3356 = vld [vmem:[%s319 + $0x88] sm:$0xff]
          %v3357 = vld [vmem:[%s319 + $0x90] sm:$0xff]
          %v3358 = vld [vmem:[%s319 + $0x98] sm:$0xff]
          %v3359 = vld [vmem:[%s319 + $0xa0] sm:$0xff]
          %v3360 = vld [vmem:[%s319 + $0xa8] sm:$0xff]
          %v3361 = vld [vmem:[%s319 + $0xb0] sm:$0xff]
          %v3362 = vld [vmem:[%s319 + $0xb8] sm:$0xff]
          %v3363 = vld [vmem:[%s319 + $0xc0] sm:$0xff]
          %v3364 = vld [vmem:[%s319 + $0xc8] sm:$0xff]
          %v3365 = vld [vmem:[%s319 + $0xd0] sm:$0xff]
          %v3366 = vld [vmem:[%s319 + $0xd8] sm:$0xff]
          %v3367 = vld [vmem:[%s319 + $0xe0] sm:$0xff]
          %v3368 = vld [vmem:[%s319 + $0xe8] sm:$0xff]
          %v3369 = vld [vmem:[%s319 + $0xf0] sm:$0xff]
          %v3370 = vld [vmem:[%s319 + $0xf8] sm:$0xff]
          %v3371 = vld [vmem:[%s319 + $0x100] sm:$0xff]
          %v3372 = vld [vmem:[%s319 + $0x108] sm:$0xff]
          %v3373 = vld [vmem:[%s319 + $0x110] sm:$0xff]
          %v3374 = vld [vmem:[%s319 + $0x118] sm:$0xff]
          %v3375 = vld [vmem:[%s319 + $0x120] sm:$0xff]
          %v3376 = vld [vmem:[%s319 + $0x128] sm:$0xff]
          %v3377 = vld [vmem:[%s319 + $0x130] sm:$0xff]
          %v3378 = vld [vmem:[%s319 + $0x138] sm:$0xff]
          %v3379 = vld [vmem:[%s319 + $0x140] sm:$0xff]
          %v3380 = vld [vmem:[%s319 + $0x148] sm:$0xff]
          %v3381 = vld [vmem:[%s319 + $0x150] sm:$0xff]
          %v3382 = vld [vmem:[%s319 + $0x158] sm:$0xff]
          %v3383 = vld [vmem:[%s319 + $0x160] sm:$0xff]
          %v3384 = vld [vmem:[%s319 + $0x168] sm:$0xff]
          %v3385 = vld [vmem:[%s319 + $0x170] sm:$0xff]
          %v3386 = vld [vmem:[%s319 + $0x178] sm:$0xff]
          %v3387 = vld [vmem:[%s319 + $0x180] sm:$0xff]
          %v3388 = vld [vmem:[%s319 + $0x188] sm:$0xff]
          %v3389 = vld [vmem:[%s319 + $0x190] sm:$0xff]
          %v3390 = vld [vmem:[%s319 + $0x198] sm:$0xff]
          %v3391 = vld [vmem:[%s319 + $0x1a0] sm:$0xff]
          %v3392 = vld [vmem:[%s319 + $0x1a8] sm:$0xff]
          %v3393 = vld [vmem:[%s319 + $0x1b0] sm:$0xff]
          %v3394 = vld [vmem:[%s319 + $0x1b8] sm:$0xff]
          %v3395 = vld [vmem:[%s319 + $0x1c0] sm:$0xff]
          %v3396 = vld [vmem:[%s319 + $0x1c8] sm:$0xff]
          %v3397 = vld [vmem:[%s319 + $0x1d0] sm:$0xff]
          %v3398 = vld [vmem:[%s319 + $0x1d8] sm:$0xff]
          %v3399 = vld [vmem:[%s319 + $0x1e0] sm:$0xff]
          %v3400 = vld [vmem:[%s319 + $0x1e8] sm:$0xff]
          %v3401 = vld [vmem:[%s319 + $0x1f0] sm:$0xff]
          %v3402 = vld [vmem:[%s319 + $0x1f8] sm:$0xff]
          %v3403 = vld [vmem:[%s319 + $0x200] sm:$0xff]
          %v3404 = vld [vmem:[%s319 + $0x208] sm:$0xff]
          %v3405 = vld [vmem:[%s319 + $0x210] sm:$0xff]
          %v3406 = vld [vmem:[%s319 + $0x218] sm:$0xff]
          %v3407 = vld [vmem:[%s319 + $0x220] sm:$0xff]
          %v3408 = vld [vmem:[%s319 + $0x228] sm:$0xff]
          %v3409 = vld [vmem:[%s319 + $0x230] sm:$0xff]
          %v3410 = vld [vmem:[%s319 + $0x238] sm:$0xff]
          %v3411 = vld [vmem:[%s319 + $0x240] sm:$0xff]
          %v3412 = vld [vmem:[%s319 + $0x248] sm:$0xff]
          %v3413 = vld [vmem:[%s319 + $0x250] sm:$0xff]
          %v3414 = vld [vmem:[%s319 + $0x258] sm:$0xff]
          %v3415 = vld [vmem:[%s319 + $0x260] sm:$0xff]
          %v3416 = vld [vmem:[%s319 + $0x268] sm:$0xff]
          %v3417 = vld [vmem:[%s319 + $0x270] sm:$0xff]
          %v3418 = vld [vmem:[%s319 + $0x278] sm:$0xff]
          %v3419 = vld [vmem:[%s319 + $0x280] sm:$0xff]
          %v3420 = vld [vmem:[%s319 + $0x288] sm:$0xff]
          %v3421 = vld [vmem:[%s319 + $0x290] sm:$0xff]
          %v3422 = vld [vmem:[%s319 + $0x298] sm:$0xff]
          %v3423 = vld [vmem:[%s319 + $0x2a0] sm:$0xff]
          %v3424 = vld [vmem:[%s319 + $0x2a8] sm:$0xff]
          %v3425 = vld [vmem:[%s319 + $0x2b0] sm:$0xff]
          %v3426 = vld [vmem:[%s319 + $0x2b8] sm:$0xff]
          %v3427 = vld [vmem:[%s319 + $0x2c0] sm:$0xff]
          %v3428 = vld [vmem:[%s319 + $0x2c8] sm:$0xff]
          %v3429 = vld [vmem:[%s319 + $0x2d0] sm:$0xff]
          %v3430 = vld [vmem:[%s319 + $0x2d8] sm:$0xff]
          %v3431 = vld [vmem:[%s319 + $0x2e0] sm:$0xff]
          %v3432 = vld [vmem:[%s319 + $0x2e8] sm:$0xff]
          %v3433 = vld [vmem:[%s319 + $0x2f0] sm:$0xff]
          %v3434 = vld [vmem:[%s319 + $0x2f8] sm:$0xff]
          %v3483 = vunpack.c.l.b16 %v3291
          %v3484 = vunpack.c.h.b16 %v3291
          %v3485 = vunpack.c.l.b16 %v3292
          %v3486 = vunpack.c.h.b16 %v3292
          %v3487 = vunpack.c.l.b16 %v3293
          %v3488 = vunpack.c.h.b16 %v3293
          %v3489 = vunpack.c.l.b16 %v3294
          %v3490 = vunpack.c.h.b16 %v3294
          %v3491 = vunpack.c.l.b16 %v3295
          %v3492 = vunpack.c.h.b16 %v3295
          %v3493 = vunpack.c.l.b16 %v3296
          %v3494 = vunpack.c.h.b16 %v3296
          %v3495 = vunpack.c.l.b16 %v3297
          %v3496 = vunpack.c.h.b16 %v3297
          %v3497 = vunpack.c.l.b16 %v3298
          %v3498 = vunpack.c.h.b16 %v3298
          %v3499 = vunpack.c.l.b16 %v3299
          %v3500 = vunpack.c.h.b16 %v3299
          %v3501 = vunpack.c.l.b16 %v3300
          %v3502 = vunpack.c.h.b16 %v3300
          %v3503 = vunpack.c.l.b16 %v3301
          %v3504 = vunpack.c.h.b16 %v3301
          %v3505 = vunpack.c.l.b16 %v3302
          %v3506 = vunpack.c.h.b16 %v3302
          %v3507 = vunpack.c.l.b16 %v3303
          %v3508 = vunpack.c.h.b16 %v3303
          %v3509 = vunpack.c.l.b16 %v3304
          %v3510 = vunpack.c.h.b16 %v3304
          %v3511 = vunpack.c.l.b16 %v3305
          %v3512 = vunpack.c.h.b16 %v3305
          %v3513 = vunpack.c.l.b16 %v3306
          %v3514 = vunpack.c.h.b16 %v3306
          %v3515 = vunpack.c.l.b16 %v3307
          %v3516 = vunpack.c.h.b16 %v3307
          %v3517 = vunpack.c.l.b16 %v3308
          %v3518 = vunpack.c.h.b16 %v3308
          %v3519 = vunpack.c.l.b16 %v3309
          %v3520 = vunpack.c.h.b16 %v3309
          %v3521 = vunpack.c.l.b16 %v3310
          %v3522 = vunpack.c.h.b16 %v3310
          %v3523 = vunpack.c.l.b16 %v3311
          %v3524 = vunpack.c.h.b16 %v3311
          %v3525 = vunpack.c.l.b16 %v3312
          %v3526 = vunpack.c.h.b16 %v3312
          %v3527 = vunpack.c.l.b16 %v3313
          %v3528 = vunpack.c.h.b16 %v3313
          %v3529 = vunpack.c.l.b16 %v3314
          %v3530 = vunpack.c.h.b16 %v3314
          %v3531 = vunpack.c.l.b16 %v3315
          %v3532 = vunpack.c.h.b16 %v3315
          %v3533 = vunpack.c.l.b16 %v3316
          %v3534 = vunpack.c.h.b16 %v3316
          %v3535 = vunpack.c.l.b16 %v3317
          %v3536 = vunpack.c.h.b16 %v3317
          %v3537 = vunpack.c.l.b16 %v3318
          %v3538 = vunpack.c.h.b16 %v3318
          %v3539 = vunpack.c.l.b16 %v3319
          %v3540 = vunpack.c.h.b16 %v3319
          %v3541 = vunpack.c.l.b16 %v3320
          %v3542 = vunpack.c.h.b16 %v3320
          %v3543 = vunpack.c.l.b16 %v3321
          %v3544 = vunpack.c.h.b16 %v3321
          %v3545 = vunpack.c.l.b16 %v3322
          %v3546 = vunpack.c.h.b16 %v3322
          %v3547 = vunpack.c.l.b16 %v3323
          %v3548 = vunpack.c.h.b16 %v3323
          %v3549 = vunpack.c.l.b16 %v3324
          %v3550 = vunpack.c.h.b16 %v3324
          %v3551 = vunpack.c.l.b16 %v3325
          %v3552 = vunpack.c.h.b16 %v3325
          %v3553 = vunpack.c.l.b16 %v3326
          %v3554 = vunpack.c.h.b16 %v3326
          %v3555 = vunpack.c.l.b16 %v3327
          %v3556 = vunpack.c.h.b16 %v3327
          %v3557 = vunpack.c.l.b16 %v3328
          %v3558 = vunpack.c.h.b16 %v3328
          %v3559 = vunpack.c.l.b16 %v3329
          %v3560 = vunpack.c.h.b16 %v3329
          %v3561 = vunpack.c.l.b16 %v3330
          %v3562 = vunpack.c.h.b16 %v3330
          %v3563 = vunpack.c.l.b16 %v3331
          %v3564 = vunpack.c.h.b16 %v3331
          %v3565 = vunpack.c.l.b16 %v3332
          %v3566 = vunpack.c.h.b16 %v3332
          %v3567 = vunpack.c.l.b16 %v3333
          %v3568 = vunpack.c.h.b16 %v3333
          %v3569 = vunpack.c.l.b16 %v3334
          %v3570 = vunpack.c.h.b16 %v3334
          %v3571 = vunpack.c.l.b16 %v3335
          %v3572 = vunpack.c.h.b16 %v3335
          %v3573 = vunpack.c.l.b16 %v3336
          %v3574 = vunpack.c.h.b16 %v3336
          %v3575 = vunpack.c.l.b16 %v3337
          %v3576 = vunpack.c.h.b16 %v3337
          %v3577 = vunpack.c.l.b16 %v3338
          %v3578 = vunpack.c.h.b16 %v3338
          %v3579 = vpack.c.b16 %v3489, %v3483
          %v3580 = vpack.c.b16 %v3490, %v3484
          %v3581 = vpack.c.b16 %v3491, %v3485
          %v3582 = vpack.c.b16 %v3492, %v3486
          %v3583 = vpack.c.b16 %v3493, %v3487
          %v3584 = vpack.c.b16 %v3494, %v3488
          %v3585 = vpack.c.b16 %v3501, %v3495
          %v3586 = vpack.c.b16 %v3502, %v3496
          %v3587 = vpack.c.b16 %v3503, %v3497
          %v3588 = vpack.c.b16 %v3504, %v3498
          %v3589 = vpack.c.b16 %v3505, %v3499
          %v3590 = vpack.c.b16 %v3506, %v3500
          %v3591 = vpack.c.b16 %v3513, %v3507
          %v3592 = vpack.c.b16 %v3514, %v3508
          %v3593 = vpack.c.b16 %v3515, %v3509
          %v3594 = vpack.c.b16 %v3516, %v3510
          %v3595 = vpack.c.b16 %v3517, %v3511
          %v3596 = vpack.c.b16 %v3518, %v3512
          %v3597 = vpack.c.b16 %v3525, %v3519
          %v3598 = vpack.c.b16 %v3526, %v3520
          %v3599 = vpack.c.b16 %v3527, %v3521
          %v3600 = vpack.c.b16 %v3528, %v3522
          %v3601 = vpack.c.b16 %v3529, %v3523
          %v3602 = vpack.c.b16 %v3530, %v3524
          %v3603 = vpack.c.b16 %v3537, %v3531
          %v3604 = vpack.c.b16 %v3538, %v3532
          %v3605 = vpack.c.b16 %v3539, %v3533
          %v3606 = vpack.c.b16 %v3540, %v3534
          %v3607 = vpack.c.b16 %v3541, %v3535
          %v3608 = vpack.c.b16 %v3542, %v3536
          %v3609 = vpack.c.b16 %v3549, %v3543
          %v3610 = vpack.c.b16 %v3550, %v3544
          %v3611 = vpack.c.b16 %v3551, %v3545
          %v3612 = vpack.c.b16 %v3552, %v3546
          %v3613 = vpack.c.b16 %v3553, %v3547
          %v3614 = vpack.c.b16 %v3554, %v3548
          %v3615 = vpack.c.b16 %v3561, %v3555
          %v3616 = vpack.c.b16 %v3562, %v3556
          %v3617 = vpack.c.b16 %v3563, %v3557
          %v3618 = vpack.c.b16 %v3564, %v3558
          %v3619 = vpack.c.b16 %v3565, %v3559
          %v3620 = vpack.c.b16 %v3566, %v3560
          %v3621 = vpack.c.b16 %v3573, %v3567
          %v3622 = vpack.c.b16 %v3574, %v3568
          %v3623 = vpack.c.b16 %v3575, %v3569
          %v3624 = vpack.c.b16 %v3576, %v3570
          %v3625 = vpack.c.b16 %v3577, %v3571
          %v3626 = vpack.c.b16 %v3578, %v3572
          %v3771 = vunpack.c.l.b16 %v3339
          %v3772 = vunpack.c.h.b16 %v3339
          %v3773 = vunpack.c.l.b16 %v3340
          %v3774 = vunpack.c.h.b16 %v3340
          %v3775 = vunpack.c.l.b16 %v3341
          %v3776 = vunpack.c.h.b16 %v3341
          %v3777 = vunpack.c.l.b16 %v3342
          %v3778 = vunpack.c.h.b16 %v3342
          %v3779 = vunpack.c.l.b16 %v3343
          %v3780 = vunpack.c.h.b16 %v3343
          %v3781 = vunpack.c.l.b16 %v3344
          %v3782 = vunpack.c.h.b16 %v3344
          %v3783 = vunpack.c.l.b16 %v3345
          %v3784 = vunpack.c.h.b16 %v3345
          %v3785 = vunpack.c.l.b16 %v3346
          %v3786 = vunpack.c.h.b16 %v3346
          %v3787 = vunpack.c.l.b16 %v3347
          %v3788 = vunpack.c.h.b16 %v3347
          %v3789 = vunpack.c.l.b16 %v3348
          %v3790 = vunpack.c.h.b16 %v3348
          %v3791 = vunpack.c.l.b16 %v3349
          %v3792 = vunpack.c.h.b16 %v3349
          %v3793 = vunpack.c.l.b16 %v3350
          %v3794 = vunpack.c.h.b16 %v3350
          %v3795 = vunpack.c.l.b16 %v3351
          %v3796 = vunpack.c.h.b16 %v3351
          %v3797 = vunpack.c.l.b16 %v3352
          %v3798 = vunpack.c.h.b16 %v3352
          %v3799 = vunpack.c.l.b16 %v3353
          %v3800 = vunpack.c.h.b16 %v3353
          %v3801 = vunpack.c.l.b16 %v3354
          %v3802 = vunpack.c.h.b16 %v3354
          %v3803 = vunpack.c.l.b16 %v3355
          %v3804 = vunpack.c.h.b16 %v3355
          %v3805 = vunpack.c.l.b16 %v3356
          %v3806 = vunpack.c.h.b16 %v3356
          %v3807 = vunpack.c.l.b16 %v3357
          %v3808 = vunpack.c.h.b16 %v3357
          %v3809 = vunpack.c.l.b16 %v3358
          %v3810 = vunpack.c.h.b16 %v3358
          %v3811 = vunpack.c.l.b16 %v3359
          %v3812 = vunpack.c.h.b16 %v3359
          %v3813 = vunpack.c.l.b16 %v3360
          %v3814 = vunpack.c.h.b16 %v3360
          %v3815 = vunpack.c.l.b16 %v3361
          %v3816 = vunpack.c.h.b16 %v3361
          %v3817 = vunpack.c.l.b16 %v3362
          %v3818 = vunpack.c.h.b16 %v3362
          %v3819 = vunpack.c.l.b16 %v3363
          %v3820 = vunpack.c.h.b16 %v3363
          %v3821 = vunpack.c.l.b16 %v3364
          %v3822 = vunpack.c.h.b16 %v3364
          %v3823 = vunpack.c.l.b16 %v3365
          %v3824 = vunpack.c.h.b16 %v3365
          %v3825 = vunpack.c.l.b16 %v3366
          %v3826 = vunpack.c.h.b16 %v3366
          %v3827 = vunpack.c.l.b16 %v3367
          %v3828 = vunpack.c.h.b16 %v3367
          %v3829 = vunpack.c.l.b16 %v3368
          %v3830 = vunpack.c.h.b16 %v3368
          %v3831 = vunpack.c.l.b16 %v3369
          %v3832 = vunpack.c.h.b16 %v3369
          %v3833 = vunpack.c.l.b16 %v3370
          %v3834 = vunpack.c.h.b16 %v3370
          %v3835 = vunpack.c.l.b16 %v3371
          %v3836 = vunpack.c.h.b16 %v3371
          %v3837 = vunpack.c.l.b16 %v3372
          %v3838 = vunpack.c.h.b16 %v3372
          %v3839 = vunpack.c.l.b16 %v3373
          %v3840 = vunpack.c.h.b16 %v3373
          %v3841 = vunpack.c.l.b16 %v3374
          %v3842 = vunpack.c.h.b16 %v3374
          %v3843 = vunpack.c.l.b16 %v3375
          %v3844 = vunpack.c.h.b16 %v3375
          %v3845 = vunpack.c.l.b16 %v3376
          %v3846 = vunpack.c.h.b16 %v3376
          %v3847 = vunpack.c.l.b16 %v3377
          %v3848 = vunpack.c.h.b16 %v3377
          %v3849 = vunpack.c.l.b16 %v3378
          %v3850 = vunpack.c.h.b16 %v3378
          %v3851 = vunpack.c.l.b16 %v3379
          %v3852 = vunpack.c.h.b16 %v3379
          %v3853 = vunpack.c.l.b16 %v3380
          %v3854 = vunpack.c.h.b16 %v3380
          %v3855 = vunpack.c.l.b16 %v3381
          %v3856 = vunpack.c.h.b16 %v3381
          %v3857 = vunpack.c.l.b16 %v3382
          %v3858 = vunpack.c.h.b16 %v3382
          %v3859 = vunpack.c.l.b16 %v3383
          %v3860 = vunpack.c.h.b16 %v3383
          %v3861 = vunpack.c.l.b16 %v3384
          %v3862 = vunpack.c.h.b16 %v3384
          %v3863 = vunpack.c.l.b16 %v3385
          %v3864 = vunpack.c.h.b16 %v3385
          %v3865 = vunpack.c.l.b16 %v3386
          %v3866 = vunpack.c.h.b16 %v3386
          %v3867 = vunpack.c.l.b16 %v3387
          %v3868 = vunpack.c.h.b16 %v3387
          %v3869 = vunpack.c.l.b16 %v3388
          %v3870 = vunpack.c.h.b16 %v3388
          %v3871 = vunpack.c.l.b16 %v3389
          %v3872 = vunpack.c.h.b16 %v3389
          %v3873 = vunpack.c.l.b16 %v3390
          %v3874 = vunpack.c.h.b16 %v3390
          %v3875 = vunpack.c.l.b16 %v3391
          %v3876 = vunpack.c.h.b16 %v3391
          %v3877 = vunpack.c.l.b16 %v3392
          %v3878 = vunpack.c.h.b16 %v3392
          %v3879 = vunpack.c.l.b16 %v3393
          %v3880 = vunpack.c.h.b16 %v3393
          %v3881 = vunpack.c.l.b16 %v3394
          %v3882 = vunpack.c.h.b16 %v3394
          %v3883 = vunpack.c.l.b16 %v3395
          %v3884 = vunpack.c.h.b16 %v3395
          %v3885 = vunpack.c.l.b16 %v3396
          %v3886 = vunpack.c.h.b16 %v3396
          %v3887 = vunpack.c.l.b16 %v3397
          %v3888 = vunpack.c.h.b16 %v3397
          %v3889 = vunpack.c.l.b16 %v3398
          %v3890 = vunpack.c.h.b16 %v3398
          %v3891 = vunpack.c.l.b16 %v3399
          %v3892 = vunpack.c.h.b16 %v3399
          %v3893 = vunpack.c.l.b16 %v3400
          %v3894 = vunpack.c.h.b16 %v3400
          %v3895 = vunpack.c.l.b16 %v3401
          %v3896 = vunpack.c.h.b16 %v3401
          %v3897 = vunpack.c.l.b16 %v3402
          %v3898 = vunpack.c.h.b16 %v3402
          %v3899 = vunpack.c.l.b16 %v3403
          %v3900 = vunpack.c.h.b16 %v3403
          %v3901 = vunpack.c.l.b16 %v3404
          %v3902 = vunpack.c.h.b16 %v3404
          %v3903 = vunpack.c.l.b16 %v3405
          %v3904 = vunpack.c.h.b16 %v3405
          %v3905 = vunpack.c.l.b16 %v3406
          %v3906 = vunpack.c.h.b16 %v3406
          %v3907 = vunpack.c.l.b16 %v3407
          %v3908 = vunpack.c.h.b16 %v3407
          %v3909 = vunpack.c.l.b16 %v3408
          %v3910 = vunpack.c.h.b16 %v3408
          %v3911 = vunpack.c.l.b16 %v3409
          %v3912 = vunpack.c.h.b16 %v3409
          %v3913 = vunpack.c.l.b16 %v3410
          %v3914 = vunpack.c.h.b16 %v3410
          %v3915 = vunpack.c.l.b16 %v3411
          %v3916 = vunpack.c.h.b16 %v3411
          %v3917 = vunpack.c.l.b16 %v3412
          %v3918 = vunpack.c.h.b16 %v3412
          %v3919 = vunpack.c.l.b16 %v3413
          %v3920 = vunpack.c.h.b16 %v3413
          %v3921 = vunpack.c.l.b16 %v3414
          %v3922 = vunpack.c.h.b16 %v3414
          %v3923 = vunpack.c.l.b16 %v3415
          %v3924 = vunpack.c.h.b16 %v3415
          %v3925 = vunpack.c.l.b16 %v3416
          %v3926 = vunpack.c.h.b16 %v3416
          %v3927 = vunpack.c.l.b16 %v3417
          %v3928 = vunpack.c.h.b16 %v3417
          %v3929 = vunpack.c.l.b16 %v3418
          %v3930 = vunpack.c.h.b16 %v3418
          %v3931 = vunpack.c.l.b16 %v3419
          %v3932 = vunpack.c.h.b16 %v3419
          %v3933 = vunpack.c.l.b16 %v3420
          %v3934 = vunpack.c.h.b16 %v3420
          %v3935 = vunpack.c.l.b16 %v3421
          %v3936 = vunpack.c.h.b16 %v3421
          %v3937 = vunpack.c.l.b16 %v3422
          %v3938 = vunpack.c.h.b16 %v3422
          %v3939 = vunpack.c.l.b16 %v3423
          %v3940 = vunpack.c.h.b16 %v3423
          %v3941 = vunpack.c.l.b16 %v3424
          %v3942 = vunpack.c.h.b16 %v3424
          %v3943 = vunpack.c.l.b16 %v3425
          %v3944 = vunpack.c.h.b16 %v3425
          %v3945 = vunpack.c.l.b16 %v3426
          %v3946 = vunpack.c.h.b16 %v3426
          %v3947 = vunpack.c.l.b16 %v3427
          %v3948 = vunpack.c.h.b16 %v3427
          %v3949 = vunpack.c.l.b16 %v3428
          %v3950 = vunpack.c.h.b16 %v3428
          %v3951 = vunpack.c.l.b16 %v3429
          %v3952 = vunpack.c.h.b16 %v3429
          %v3953 = vunpack.c.l.b16 %v3430
          %v3954 = vunpack.c.h.b16 %v3430
          %v3955 = vunpack.c.l.b16 %v3431
          %v3956 = vunpack.c.h.b16 %v3431
          %v3957 = vunpack.c.l.b16 %v3432
          %v3958 = vunpack.c.h.b16 %v3432
          %v3959 = vunpack.c.l.b16 %v3433
          %v3960 = vunpack.c.h.b16 %v3433
          %v3961 = vunpack.c.l.b16 %v3434
          %v3962 = vunpack.c.h.b16 %v3434
          %v3963 = vpack.c.b16 %v3773, %v3771
          %v3964 = vpack.c.b16 %v3774, %v3772
          %v3965 = vpack.c.b16 %v3777, %v3775
          %v3966 = vpack.c.b16 %v3778, %v3776
          %v3967 = vpack.c.b16 %v3781, %v3779
          %v3968 = vpack.c.b16 %v3782, %v3780
          %v3969 = vpack.c.b16 %v3785, %v3783
          %v3970 = vpack.c.b16 %v3786, %v3784
          %v3971 = vpack.c.b16 %v3789, %v3787
          %v3972 = vpack.c.b16 %v3790, %v3788
          %v3973 = vpack.c.b16 %v3793, %v3791
          %v3974 = vpack.c.b16 %v3794, %v3792
          %v3975 = vpack.c.b16 %v3797, %v3795
          %v3976 = vpack.c.b16 %v3798, %v3796
          %v3977 = vpack.c.b16 %v3801, %v3799
          %v3978 = vpack.c.b16 %v3802, %v3800
          %v3979 = vpack.c.b16 %v3805, %v3803
          %v3980 = vpack.c.b16 %v3806, %v3804
          %v3981 = vpack.c.b16 %v3809, %v3807
          %v3982 = vpack.c.b16 %v3810, %v3808
          %v3983 = vpack.c.b16 %v3813, %v3811
          %v3984 = vpack.c.b16 %v3814, %v3812
          %v3985 = vpack.c.b16 %v3817, %v3815
          %v3986 = vpack.c.b16 %v3818, %v3816
          %v3987 = vpack.c.b16 %v3821, %v3819
          %v3988 = vpack.c.b16 %v3822, %v3820
          %v3989 = vpack.c.b16 %v3825, %v3823
          %v3990 = vpack.c.b16 %v3826, %v3824
          %v3991 = vpack.c.b16 %v3829, %v3827
          %v3992 = vpack.c.b16 %v3830, %v3828
          %v3993 = vpack.c.b16 %v3833, %v3831
          %v3994 = vpack.c.b16 %v3834, %v3832
          %v3995 = vpack.c.b16 %v3837, %v3835
          %v3996 = vpack.c.b16 %v3838, %v3836
          %v3997 = vpack.c.b16 %v3841, %v3839
          %v3998 = vpack.c.b16 %v3842, %v3840
          %v3999 = vpack.c.b16 %v3845, %v3843
          %v4000 = vpack.c.b16 %v3846, %v3844
          %v4001 = vpack.c.b16 %v3849, %v3847
          %v4002 = vpack.c.b16 %v3850, %v3848
          %v4003 = vpack.c.b16 %v3853, %v3851
          %v4004 = vpack.c.b16 %v3854, %v3852
          %v4005 = vpack.c.b16 %v3857, %v3855
          %v4006 = vpack.c.b16 %v3858, %v3856
          %v4007 = vpack.c.b16 %v3861, %v3859
          %v4008 = vpack.c.b16 %v3862, %v3860
          %v4009 = vpack.c.b16 %v3865, %v3863
          %v4010 = vpack.c.b16 %v3866, %v3864
          %v4011 = vpack.c.b16 %v3869, %v3867
          %v4012 = vpack.c.b16 %v3870, %v3868
          %v4013 = vpack.c.b16 %v3873, %v3871
          %v4014 = vpack.c.b16 %v3874, %v3872
          %v4015 = vpack.c.b16 %v3877, %v3875
          %v4016 = vpack.c.b16 %v3878, %v3876
          %v4017 = vpack.c.b16 %v3881, %v3879
          %v4018 = vpack.c.b16 %v3882, %v3880
          %v4019 = vpack.c.b16 %v3885, %v3883
          %v4020 = vpack.c.b16 %v3886, %v3884
          %v4021 = vpack.c.b16 %v3889, %v3887
          %v4022 = vpack.c.b16 %v3890, %v3888
          %v4023 = vpack.c.b16 %v3893, %v3891
          %v4024 = vpack.c.b16 %v3894, %v3892
          %v4025 = vpack.c.b16 %v3897, %v3895
          %v4026 = vpack.c.b16 %v3898, %v3896
          %v4027 = vpack.c.b16 %v3901, %v3899
          %v4028 = vpack.c.b16 %v3902, %v3900
          %v4029 = vpack.c.b16 %v3905, %v3903
          %v4030 = vpack.c.b16 %v3906, %v3904
          %v4031 = vpack.c.b16 %v3909, %v3907
          %v4032 = vpack.c.b16 %v3910, %v3908
          %v4033 = vpack.c.b16 %v3913, %v3911
          %v4034 = vpack.c.b16 %v3914, %v3912
          %v4035 = vpack.c.b16 %v3917, %v3915
          %v4036 = vpack.c.b16 %v3918, %v3916
          %v4037 = vpack.c.b16 %v3921, %v3919
          %v4038 = vpack.c.b16 %v3922, %v3920
          %v4039 = vpack.c.b16 %v3925, %v3923
          %v4040 = vpack.c.b16 %v3926, %v3924
          %v4041 = vpack.c.b16 %v3929, %v3927
          %v4042 = vpack.c.b16 %v3930, %v3928
          %v4043 = vpack.c.b16 %v3933, %v3931
          %v4044 = vpack.c.b16 %v3934, %v3932
          %v4045 = vpack.c.b16 %v3937, %v3935
          %v4046 = vpack.c.b16 %v3938, %v3936
          %v4047 = vpack.c.b16 %v3941, %v3939
          %v4048 = vpack.c.b16 %v3942, %v3940
          %v4049 = vpack.c.b16 %v3945, %v3943
          %v4050 = vpack.c.b16 %v3946, %v3944
          %v4051 = vpack.c.b16 %v3949, %v3947
          %v4052 = vpack.c.b16 %v3950, %v3948
          %v4053 = vpack.c.b16 %v3953, %v3951
          %v4054 = vpack.c.b16 %v3954, %v3952
          %v4055 = vpack.c.b16 %v3957, %v3955
          %v4056 = vpack.c.b16 %v3958, %v3956
          %v4057 = vpack.c.b16 %v3961, %v3959
          %v4058 = vpack.c.b16 %v3962, %v3960
          %4155 = vmatpush.bf16.msra.mxu0 %v3977
          %4156 = vmatpush.bf16.msra.mxu0 %v3975
          %4157 = vmatpush.bf16.msra.mxu0 %v3973
          %4158 = vmatpush.bf16.msra.mxu0 %v3971
          %4159 = vmatpush.bf16.msra.mxu0 %v3969
          %4160 = vmatpush.bf16.msra.mxu0 %v3967
          %4161 = vmatpush.bf16.msra.mxu0 %v3965
          %4162 = vmatpush.bf16.msra.mxu0 %v3963
          %4163 = vmatmul.bf16.gmra.mxu0 %v3579
          %v4164 = vpop.f32.mrf.mxu0
          %v4165 = vadd.f32 0.0, %v4164
          %v4166 = vpop.f32.mrf.mxu0
          %v4167 = vadd.f32 0.0, %v4166
          %4168 = vmatmul.bf16.gmra.mxu0 %v3585
          %v4169 = vpop.f32.mrf.mxu0
          %v4170 = vadd.f32 0.0, %v4169
          %v4171 = vpop.f32.mrf.mxu0
          %v4172 = vadd.f32 0.0, %v4171
          %4173 = vmatmul.bf16.gmra.mxu0 %v3591
          %v4174 = vpop.f32.mrf.mxu0
          %v4175 = vadd.f32 0.0, %v4174
          %v4176 = vpop.f32.mrf.mxu0
          %v4177 = vadd.f32 0.0, %v4176
          %4178 = vmatmul.bf16.gmra.mxu0 %v3597
          %v4179 = vpop.f32.mrf.mxu0
          %v4180 = vadd.f32 0.0, %v4179
          %v4181 = vpop.f32.mrf.mxu0
          %v4182 = vadd.f32 0.0, %v4181
          %4183 = vmatmul.bf16.gmra.mxu0 %v3603
          %v4184 = vpop.f32.mrf.mxu0
          %v4185 = vadd.f32 0.0, %v4184
          %v4186 = vpop.f32.mrf.mxu0
          %v4187 = vadd.f32 0.0, %v4186
          %4188 = vmatmul.bf16.gmra.mxu0 %v3609
          %v4189 = vpop.f32.mrf.mxu0
          %v4190 = vadd.f32 0.0, %v4189
          %v4191 = vpop.f32.mrf.mxu0
          %v4192 = vadd.f32 0.0, %v4191
          %4193 = vmatmul.bf16.gmra.mxu0 %v3615
          %v4194 = vpop.f32.mrf.mxu0
          %v4195 = vadd.f32 0.0, %v4194
          %v4196 = vpop.f32.mrf.mxu0
          %v4197 = vadd.f32 0.0, %v4196
          %4198 = vmatmul.bf16.gmra.mxu0 %v3621
          %v4199 = vpop.f32.mrf.mxu0
          %v4200 = vadd.f32 0.0, %v4199
          %v4201 = vpop.f32.mrf.mxu0
          %v4202 = vadd.f32 0.0, %v4201
          %4203 = vdwg.mxu0
          %4204 = vmatpush.bf16.msra.mxu0 %v3993
          %4205 = vmatpush.bf16.msra.mxu0 %v3991
          %4206 = vmatpush.bf16.msra.mxu0 %v3989
          %4207 = vmatpush.bf16.msra.mxu0 %v3987
          %4208 = vmatpush.bf16.msra.mxu0 %v3985
          %4209 = vmatpush.bf16.msra.mxu0 %v3983
          %4210 = vmatpush.bf16.msra.mxu0 %v3981
          %4211 = vmatpush.bf16.msra.mxu0 %v3979
          %4212 = vmatmul.bf16.gmra.mxu0 %v3580
          %v4213 = vpop.f32.mrf.mxu0
          %v4214 = vadd.f32 %v4165, %v4213
          %v4215 = vpop.f32.mrf.mxu0
          %v4216 = vadd.f32 %v4167, %v4215
          %4217 = vmatmul.bf16.gmra.mxu0 %v3586
          %v4218 = vpop.f32.mrf.mxu0
          %v4219 = vadd.f32 %v4170, %v4218
          %v4220 = vpop.f32.mrf.mxu0
          %v4221 = vadd.f32 %v4172, %v4220
          %4222 = vmatmul.bf16.gmra.mxu0 %v3592
          %v4223 = vpop.f32.mrf.mxu0
          %v4224 = vadd.f32 %v4175, %v4223
          %v4225 = vpop.f32.mrf.mxu0
          %v4226 = vadd.f32 %v4177, %v4225
          %4227 = vmatmul.bf16.gmra.mxu0 %v3598
          %v4228 = vpop.f32.mrf.mxu0
          %v4229 = vadd.f32 %v4180, %v4228
          %v4230 = vpop.f32.mrf.mxu0
          %v4231 = vadd.f32 %v4182, %v4230
          %4232 = vmatmul.bf16.gmra.mxu0 %v3604
          %v4233 = vpop.f32.mrf.mxu0
          %v4234 = vadd.f32 %v4185, %v4233
          %v4235 = vpop.f32.mrf.mxu0
          %v4236 = vadd.f32 %v4187, %v4235
          %4237 = vmatmul.bf16.gmra.mxu0 %v3610
          %v4238 = vpop.f32.mrf.mxu0
          %v4239 = vadd.f32 %v4190, %v4238
          %v4240 = vpop.f32.mrf.mxu0
          %v4241 = vadd.f32 %v4192, %v4240
          %4242 = vmatmul.bf16.gmra.mxu0 %v3616
          %v4243 = vpop.f32.mrf.mxu0
          %v4244 = vadd.f32 %v4195, %v4243
          %v4245 = vpop.f32.mrf.mxu0
          %v4246 = vadd.f32 %v4197, %v4245
          %4247 = vmatmul.bf16.gmra.mxu0 %v3622
          %v4248 = vpop.f32.mrf.mxu0
          %v4249 = vadd.f32 %v4200, %v4248
          %v4250 = vpop.f32.mrf.mxu0
          %v4251 = vadd.f32 %v4202, %v4250
          %4252 = vdwg.mxu0
          %4253 = vmatpush.bf16.msra.mxu0 %v4009
          %4254 = vmatpush.bf16.msra.mxu0 %v4007
          %4255 = vmatpush.bf16.msra.mxu0 %v4005
          %4256 = vmatpush.bf16.msra.mxu0 %v4003
          %4257 = vmatpush.bf16.msra.mxu0 %v4001
          %4258 = vmatpush.bf16.msra.mxu0 %v3999
          %4259 = vmatpush.bf16.msra.mxu0 %v3997
          %4260 = vmatpush.bf16.msra.mxu0 %v3995
          %4261 = vmatmul.bf16.gmra.mxu0 %v3581
          %v4262 = vpop.f32.mrf.mxu0
          %v4263 = vadd.f32 %v4214, %v4262
          %v4264 = vpop.f32.mrf.mxu0
          %v4265 = vadd.f32 %v4216, %v4264
          %4266 = vmatmul.bf16.gmra.mxu0 %v3587
          %v4267 = vpop.f32.mrf.mxu0
          %v4268 = vadd.f32 %v4219, %v4267
          %v4269 = vpop.f32.mrf.mxu0
          %v4270 = vadd.f32 %v4221, %v4269
          %4271 = vmatmul.bf16.gmra.mxu0 %v3593
          %v4272 = vpop.f32.mrf.mxu0
          %v4273 = vadd.f32 %v4224, %v4272
          %v4274 = vpop.f32.mrf.mxu0
          %v4275 = vadd.f32 %v4226, %v4274
          %4276 = vmatmul.bf16.gmra.mxu0 %v3599
          %v4277 = vpop.f32.mrf.mxu0
          %v4278 = vadd.f32 %v4229, %v4277
          %v4279 = vpop.f32.mrf.mxu0
          %v4280 = vadd.f32 %v4231, %v4279
          %4281 = vmatmul.bf16.gmra.mxu0 %v3605
          %v4282 = vpop.f32.mrf.mxu0
          %v4283 = vadd.f32 %v4234, %v4282
          %v4284 = vpop.f32.mrf.mxu0
          %v4285 = vadd.f32 %v4236, %v4284
          %4286 = vmatmul.bf16.gmra.mxu0 %v3611
          %v4287 = vpop.f32.mrf.mxu0
          %v4288 = vadd.f32 %v4239, %v4287
          %v4289 = vpop.f32.mrf.mxu0
          %v4290 = vadd.f32 %v4241, %v4289
          %4291 = vmatmul.bf16.gmra.mxu0 %v3617
          %v4292 = vpop.f32.mrf.mxu0
          %v4293 = vadd.f32 %v4244, %v4292
          %v4294 = vpop.f32.mrf.mxu0
          %v4295 = vadd.f32 %v4246, %v4294
          %4296 = vmatmul.bf16.gmra.mxu0 %v3623
          %v4297 = vpop.f32.mrf.mxu0
          %v4298 = vadd.f32 %v4249, %v4297
          %v4299 = vpop.f32.mrf.mxu0
          %v4300 = vadd.f32 %v4251, %v4299
          %4301 = vdwg.mxu0
          %4302 = vmatpush.bf16.msra.mxu0 %v4025
          %4303 = vmatpush.bf16.msra.mxu0 %v4023
          %4304 = vmatpush.bf16.msra.mxu0 %v4021
          %4305 = vmatpush.bf16.msra.mxu0 %v4019
          %4306 = vmatpush.bf16.msra.mxu0 %v4017
          %4307 = vmatpush.bf16.msra.mxu0 %v4015
          %4308 = vmatpush.bf16.msra.mxu0 %v4013
          %4309 = vmatpush.bf16.msra.mxu0 %v4011
          %4310 = vmatmul.bf16.gmra.mxu0 %v3582
          %v4311 = vpop.f32.mrf.mxu0
          %v4312 = vadd.f32 %v4263, %v4311
          %v4313 = vpop.f32.mrf.mxu0
          %v4314 = vadd.f32 %v4265, %v4313
          %4315 = vmatmul.bf16.gmra.mxu0 %v3588
          %v4316 = vpop.f32.mrf.mxu0
          %v4317 = vadd.f32 %v4268, %v4316
          %v4318 = vpop.f32.mrf.mxu0
          %v4319 = vadd.f32 %v4270, %v4318
          %4320 = vmatmul.bf16.gmra.mxu0 %v3594
          %v4321 = vpop.f32.mrf.mxu0
          %v4322 = vadd.f32 %v4273, %v4321
          %v4323 = vpop.f32.mrf.mxu0
          %v4324 = vadd.f32 %v4275, %v4323
          %4325 = vmatmul.bf16.gmra.mxu0 %v3600
          %v4326 = vpop.f32.mrf.mxu0
          %v4327 = vadd.f32 %v4278, %v4326
          %v4328 = vpop.f32.mrf.mxu0
          %v4329 = vadd.f32 %v4280, %v4328
          %4330 = vmatmul.bf16.gmra.mxu0 %v3606
          %v4331 = vpop.f32.mrf.mxu0
          %v4332 = vadd.f32 %v4283, %v4331
          %v4333 = vpop.f32.mrf.mxu0
          %v4334 = vadd.f32 %v4285, %v4333
          %4335 = vmatmul.bf16.gmra.mxu0 %v3612
          %v4336 = vpop.f32.mrf.mxu0
          %v4337 = vadd.f32 %v4288, %v4336
          %v4338 = vpop.f32.mrf.mxu0
          %v4339 = vadd.f32 %v4290, %v4338
          %4340 = vmatmul.bf16.gmra.mxu0 %v3618
          %v4341 = vpop.f32.mrf.mxu0
          %v4342 = vadd.f32 %v4293, %v4341
          %v4343 = vpop.f32.mrf.mxu0
          %v4344 = vadd.f32 %v4295, %v4343
          %4345 = vmatmul.bf16.gmra.mxu0 %v3624
          %v4346 = vpop.f32.mrf.mxu0
          %v4347 = vadd.f32 %v4298, %v4346
          %v4348 = vpop.f32.mrf.mxu0
          %v4349 = vadd.f32 %v4300, %v4348
          %4350 = vdwg.mxu0
          %4351 = vmatpush.bf16.msra.mxu0 %v4041
          %4352 = vmatpush.bf16.msra.mxu0 %v4039
          %4353 = vmatpush.bf16.msra.mxu0 %v4037
          %4354 = vmatpush.bf16.msra.mxu0 %v4035
          %4355 = vmatpush.bf16.msra.mxu0 %v4033
          %4356 = vmatpush.bf16.msra.mxu0 %v4031
          %4357 = vmatpush.bf16.msra.mxu0 %v4029
          %4358 = vmatpush.bf16.msra.mxu0 %v4027
          %4359 = vmatmul.bf16.gmra.mxu0 %v3583
          %v4360 = vpop.f32.mrf.mxu0
          %v4361 = vadd.f32 %v4312, %v4360
          %v4362 = vpop.f32.mrf.mxu0
          %v4363 = vadd.f32 %v4314, %v4362
          %4364 = vmatmul.bf16.gmra.mxu0 %v3589
          %v4365 = vpop.f32.mrf.mxu0
          %v4366 = vadd.f32 %v4317, %v4365
          %v4367 = vpop.f32.mrf.mxu0
          %v4368 = vadd.f32 %v4319, %v4367
          %4369 = vmatmul.bf16.gmra.mxu0 %v3595
          %v4370 = vpop.f32.mrf.mxu0
          %v4371 = vadd.f32 %v4322, %v4370
          %v4372 = vpop.f32.mrf.mxu0
          %v4373 = vadd.f32 %v4324, %v4372
          %4374 = vmatmul.bf16.gmra.mxu0 %v3601
          %v4375 = vpop.f32.mrf.mxu0
          %v4376 = vadd.f32 %v4327, %v4375
          %v4377 = vpop.f32.mrf.mxu0
          %v4378 = vadd.f32 %v4329, %v4377
          %4379 = vmatmul.bf16.gmra.mxu0 %v3607
          %v4380 = vpop.f32.mrf.mxu0
          %v4381 = vadd.f32 %v4332, %v4380
          %v4382 = vpop.f32.mrf.mxu0
          %v4383 = vadd.f32 %v4334, %v4382
          %4384 = vmatmul.bf16.gmra.mxu0 %v3613
          %v4385 = vpop.f32.mrf.mxu0
          %v4386 = vadd.f32 %v4337, %v4385
          %v4387 = vpop.f32.mrf.mxu0
          %v4388 = vadd.f32 %v4339, %v4387
          %4389 = vmatmul.bf16.gmra.mxu0 %v3619
          %v4390 = vpop.f32.mrf.mxu0
          %v4391 = vadd.f32 %v4342, %v4390
          %v4392 = vpop.f32.mrf.mxu0
          %v4393 = vadd.f32 %v4344, %v4392
          %4394 = vmatmul.bf16.gmra.mxu0 %v3625
          %v4395 = vpop.f32.mrf.mxu0
          %v4396 = vadd.f32 %v4347, %v4395
          %v4397 = vpop.f32.mrf.mxu0
          %v4398 = vadd.f32 %v4349, %v4397
          %4399 = vdwg.mxu0
          %4400 = vmatpush.bf16.msra.mxu0 %v4057
          %4401 = vmatpush.bf16.msra.mxu0 %v4055
          %4402 = vmatpush.bf16.msra.mxu0 %v4053
          %4403 = vmatpush.bf16.msra.mxu0 %v4051
          %4404 = vmatpush.bf16.msra.mxu0 %v4049
          %4405 = vmatpush.bf16.msra.mxu0 %v4047
          %4406 = vmatpush.bf16.msra.mxu0 %v4045
          %4407 = vmatpush.bf16.msra.mxu0 %v4043
          %4408 = vmatmul.bf16.gmra.mxu0 %v3584
          %v4409 = vpop.f32.mrf.mxu0
          %v4410 = vadd.f32 %v4361, %v4409
          %v4411 = vpop.f32.mrf.mxu0
          %v4412 = vadd.f32 %v4363, %v4411
          %4413 = vmatmul.bf16.gmra.mxu0 %v3590
          %v4414 = vpop.f32.mrf.mxu0
          %v4415 = vadd.f32 %v4366, %v4414
          %v4416 = vpop.f32.mrf.mxu0
          %v4417 = vadd.f32 %v4368, %v4416
          %4418 = vmatmul.bf16.gmra.mxu0 %v3596
          %v4419 = vpop.f32.mrf.mxu0
          %v4420 = vadd.f32 %v4371, %v4419
          %v4421 = vpop.f32.mrf.mxu0
          %v4422 = vadd.f32 %v4373, %v4421
          %4423 = vmatmul.bf16.gmra.mxu0 %v3602
          %v4424 = vpop.f32.mrf.mxu0
          %v4425 = vadd.f32 %v4376, %v4424
          %v4426 = vpop.f32.mrf.mxu0
          %v4427 = vadd.f32 %v4378, %v4426
          %4428 = vmatmul.bf16.gmra.mxu0 %v3608
          %v4429 = vpop.f32.mrf.mxu0
          %v4430 = vadd.f32 %v4381, %v4429
          %v4431 = vpop.f32.mrf.mxu0
          %v4432 = vadd.f32 %v4383, %v4431
          %4433 = vmatmul.bf16.gmra.mxu0 %v3614
          %v4434 = vpop.f32.mrf.mxu0
          %v4435 = vadd.f32 %v4386, %v4434
          %v4436 = vpop.f32.mrf.mxu0
          %v4437 = vadd.f32 %v4388, %v4436
          %4438 = vmatmul.bf16.gmra.mxu0 %v3620
          %v4439 = vpop.f32.mrf.mxu0
          %v4440 = vadd.f32 %v4391, %v4439
          %v4441 = vpop.f32.mrf.mxu0
          %v4442 = vadd.f32 %v4393, %v4441
          %4443 = vmatmul.bf16.gmra.mxu0 %v3626
          %v4444 = vpop.f32.mrf.mxu0
          %v4445 = vadd.f32 %v4396, %v4444
          %v4446 = vpop.f32.mrf.mxu0
          %v4447 = vadd.f32 %v4398, %v4446
          %4448 = vdwg.mxu0
          %4449 = vmatpush.bf16.msra.mxu0 %v3978
          %4450 = vmatpush.bf16.msra.mxu0 %v3976
          %4451 = vmatpush.bf16.msra.mxu0 %v3974
          %4452 = vmatpush.bf16.msra.mxu0 %v3972
          %4453 = vmatpush.bf16.msra.mxu0 %v3970
          %4454 = vmatpush.bf16.msra.mxu0 %v3968
          %4455 = vmatpush.bf16.msra.mxu0 %v3966
          %4456 = vmatpush.bf16.msra.mxu0 %v3964
          %4457 = vmatmul.bf16.gmra.mxu0 %v3579
          %v4458 = vpop.f32.mrf.mxu0
          %v4459 = vadd.f32 0.0, %v4458
          %v4460 = vpop.f32.mrf.mxu0
          %v4461 = vadd.f32 0.0, %v4460
          %4462 = vmatmul.bf16.gmra.mxu0 %v3585
          %v4463 = vpop.f32.mrf.mxu0
          %v4464 = vadd.f32 0.0, %v4463
          %v4465 = vpop.f32.mrf.mxu0
          %v4466 = vadd.f32 0.0, %v4465
          %4467 = vmatmul.bf16.gmra.mxu0 %v3591
          %v4468 = vpop.f32.mrf.mxu0
          %v4469 = vadd.f32 0.0, %v4468
          %v4470 = vpop.f32.mrf.mxu0
          %v4471 = vadd.f32 0.0, %v4470
          %4472 = vmatmul.bf16.gmra.mxu0 %v3597
          %v4473 = vpop.f32.mrf.mxu0
          %v4474 = vadd.f32 0.0, %v4473
          %v4475 = vpop.f32.mrf.mxu0
          %v4476 = vadd.f32 0.0, %v4475
          %4477 = vmatmul.bf16.gmra.mxu0 %v3603
          %v4478 = vpop.f32.mrf.mxu0
          %v4479 = vadd.f32 0.0, %v4478
          %v4480 = vpop.f32.mrf.mxu0
          %v4481 = vadd.f32 0.0, %v4480
          %4482 = vmatmul.bf16.gmra.mxu0 %v3609
          %v4483 = vpop.f32.mrf.mxu0
          %v4484 = vadd.f32 0.0, %v4483
          %v4485 = vpop.f32.mrf.mxu0
          %v4486 = vadd.f32 0.0, %v4485
          %4487 = vmatmul.bf16.gmra.mxu0 %v3615
          %v4488 = vpop.f32.mrf.mxu0
          %v4489 = vadd.f32 0.0, %v4488
          %v4490 = vpop.f32.mrf.mxu0
          %v4491 = vadd.f32 0.0, %v4490
          %4492 = vmatmul.bf16.gmra.mxu0 %v3621
          %v4493 = vpop.f32.mrf.mxu0
          %v4494 = vadd.f32 0.0, %v4493
          %v4495 = vpop.f32.mrf.mxu0
          %v4496 = vadd.f32 0.0, %v4495
          %4497 = vdwg.mxu0
          %4498 = vmatpush.bf16.msra.mxu0 %v3994
          %4499 = vmatpush.bf16.msra.mxu0 %v3992
          %4500 = vmatpush.bf16.msra.mxu0 %v3990
          %4501 = vmatpush.bf16.msra.mxu0 %v3988
          %4502 = vmatpush.bf16.msra.mxu0 %v3986
          %4503 = vmatpush.bf16.msra.mxu0 %v3984
          %4504 = vmatpush.bf16.msra.mxu0 %v3982
          %4505 = vmatpush.bf16.msra.mxu0 %v3980
          %4506 = vmatmul.bf16.gmra.mxu0 %v3580
          %v4507 = vpop.f32.mrf.mxu0
          %v4508 = vadd.f32 %v4459, %v4507
          %v4509 = vpop.f32.mrf.mxu0
          %v4510 = vadd.f32 %v4461, %v4509
          %4511 = vmatmul.bf16.gmra.mxu0 %v3586
          %v4512 = vpop.f32.mrf.mxu0
          %v4513 = vadd.f32 %v4464, %v4512
          %v4514 = vpop.f32.mrf.mxu0
          %v4515 = vadd.f32 %v4466, %v4514
          %4516 = vmatmul.bf16.gmra.mxu0 %v3592
          %v4517 = vpop.f32.mrf.mxu0
          %v4518 = vadd.f32 %v4469, %v4517
          %v4519 = vpop.f32.mrf.mxu0
          %v4520 = vadd.f32 %v4471, %v4519
          %4521 = vmatmul.bf16.gmra.mxu0 %v3598
          %v4522 = vpop.f32.mrf.mxu0
          %v4523 = vadd.f32 %v4474, %v4522
          %v4524 = vpop.f32.mrf.mxu0
          %v4525 = vadd.f32 %v4476, %v4524
          %4526 = vmatmul.bf16.gmra.mxu0 %v3604
          %v4527 = vpop.f32.mrf.mxu0
          %v4528 = vadd.f32 %v4479, %v4527
          %v4529 = vpop.f32.mrf.mxu0
          %v4530 = vadd.f32 %v4481, %v4529
          %4531 = vmatmul.bf16.gmra.mxu0 %v3610
          %v4532 = vpop.f32.mrf.mxu0
          %v4533 = vadd.f32 %v4484, %v4532
          %v4534 = vpop.f32.mrf.mxu0
          %v4535 = vadd.f32 %v4486, %v4534
          %4536 = vmatmul.bf16.gmra.mxu0 %v3616
          %v4537 = vpop.f32.mrf.mxu0
          %v4538 = vadd.f32 %v4489, %v4537
          %v4539 = vpop.f32.mrf.mxu0
          %v4540 = vadd.f32 %v4491, %v4539
          %4541 = vmatmul.bf16.gmra.mxu0 %v3622
          %v4542 = vpop.f32.mrf.mxu0
          %v4543 = vadd.f32 %v4494, %v4542
          %v4544 = vpop.f32.mrf.mxu0
          %v4545 = vadd.f32 %v4496, %v4544
          %4546 = vdwg.mxu0
          %4547 = vmatpush.bf16.msra.mxu0 %v4010
          %4548 = vmatpush.bf16.msra.mxu0 %v4008
          %4549 = vmatpush.bf16.msra.mxu0 %v4006
          %4550 = vmatpush.bf16.msra.mxu0 %v4004
          %4551 = vmatpush.bf16.msra.mxu0 %v4002
          %4552 = vmatpush.bf16.msra.mxu0 %v4000
          %4553 = vmatpush.bf16.msra.mxu0 %v3998
          %4554 = vmatpush.bf16.msra.mxu0 %v3996
          %4555 = vmatmul.bf16.gmra.mxu0 %v3581
          %v4556 = vpop.f32.mrf.mxu0
          %v4557 = vadd.f32 %v4508, %v4556
          %v4558 = vpop.f32.mrf.mxu0
          %v4559 = vadd.f32 %v4510, %v4558
          %4560 = vmatmul.bf16.gmra.mxu0 %v3587
          %v4561 = vpop.f32.mrf.mxu0
          %v4562 = vadd.f32 %v4513, %v4561
          %v4563 = vpop.f32.mrf.mxu0
          %v4564 = vadd.f32 %v4515, %v4563
          %4565 = vmatmul.bf16.gmra.mxu0 %v3593
          %v4566 = vpop.f32.mrf.mxu0
          %v4567 = vadd.f32 %v4518, %v4566
          %v4568 = vpop.f32.mrf.mxu0
          %v4569 = vadd.f32 %v4520, %v4568
          %4570 = vmatmul.bf16.gmra.mxu0 %v3599
          %v4571 = vpop.f32.mrf.mxu0
          %v4572 = vadd.f32 %v4523, %v4571
          %v4573 = vpop.f32.mrf.mxu0
          %v4574 = vadd.f32 %v4525, %v4573
          %4575 = vmatmul.bf16.gmra.mxu0 %v3605
          %v4576 = vpop.f32.mrf.mxu0
          %v4577 = vadd.f32 %v4528, %v4576
          %v4578 = vpop.f32.mrf.mxu0
          %v4579 = vadd.f32 %v4530, %v4578
          %4580 = vmatmul.bf16.gmra.mxu0 %v3611
          %v4581 = vpop.f32.mrf.mxu0
          %v4582 = vadd.f32 %v4533, %v4581
          %v4583 = vpop.f32.mrf.mxu0
          %v4584 = vadd.f32 %v4535, %v4583
          %4585 = vmatmul.bf16.gmra.mxu0 %v3617
          %v4586 = vpop.f32.mrf.mxu0
          %v4587 = vadd.f32 %v4538, %v4586
          %v4588 = vpop.f32.mrf.mxu0
          %v4589 = vadd.f32 %v4540, %v4588
          %4590 = vmatmul.bf16.gmra.mxu0 %v3623
          %v4591 = vpop.f32.mrf.mxu0
          %v4592 = vadd.f32 %v4543, %v4591
          %v4593 = vpop.f32.mrf.mxu0
          %v4594 = vadd.f32 %v4545, %v4593
          %4595 = vdwg.mxu0
          %4596 = vmatpush.bf16.msra.mxu0 %v4026
          %4597 = vmatpush.bf16.msra.mxu0 %v4024
          %4598 = vmatpush.bf16.msra.mxu0 %v4022
          %4599 = vmatpush.bf16.msra.mxu0 %v4020
          %4600 = vmatpush.bf16.msra.mxu0 %v4018
          %4601 = vmatpush.bf16.msra.mxu0 %v4016
          %4602 = vmatpush.bf16.msra.mxu0 %v4014
          %4603 = vmatpush.bf16.msra.mxu0 %v4012
          %4604 = vmatmul.bf16.gmra.mxu0 %v3582
          %v4605 = vpop.f32.mrf.mxu0
          %v4606 = vadd.f32 %v4557, %v4605
          %v4607 = vpop.f32.mrf.mxu0
          %v4608 = vadd.f32 %v4559, %v4607
          %4609 = vmatmul.bf16.gmra.mxu0 %v3588
          %v4610 = vpop.f32.mrf.mxu0
          %v4611 = vadd.f32 %v4562, %v4610
          %v4612 = vpop.f32.mrf.mxu0
          %v4613 = vadd.f32 %v4564, %v4612
          %4614 = vmatmul.bf16.gmra.mxu0 %v3594
          %v4615 = vpop.f32.mrf.mxu0
          %v4616 = vadd.f32 %v4567, %v4615
          %v4617 = vpop.f32.mrf.mxu0
          %v4618 = vadd.f32 %v4569, %v4617
          %4619 = vmatmul.bf16.gmra.mxu0 %v3600
          %v4620 = vpop.f32.mrf.mxu0
          %v4621 = vadd.f32 %v4572, %v4620
          %v4622 = vpop.f32.mrf.mxu0
          %v4623 = vadd.f32 %v4574, %v4622
          %4624 = vmatmul.bf16.gmra.mxu0 %v3606
          %v4625 = vpop.f32.mrf.mxu0
          %v4626 = vadd.f32 %v4577, %v4625
          %v4627 = vpop.f32.mrf.mxu0
          %v4628 = vadd.f32 %v4579, %v4627
          %4629 = vmatmul.bf16.gmra.mxu0 %v3612
          %v4630 = vpop.f32.mrf.mxu0
          %v4631 = vadd.f32 %v4582, %v4630
          %v4632 = vpop.f32.mrf.mxu0
          %v4633 = vadd.f32 %v4584, %v4632
          %4634 = vmatmul.bf16.gmra.mxu0 %v3618
          %v4635 = vpop.f32.mrf.mxu0
          %v4636 = vadd.f32 %v4587, %v4635
          %v4637 = vpop.f32.mrf.mxu0
          %v4638 = vadd.f32 %v4589, %v4637
          %4639 = vmatmul.bf16.gmra.mxu0 %v3624
          %v4640 = vpop.f32.mrf.mxu0
          %v4641 = vadd.f32 %v4592, %v4640
          %v4642 = vpop.f32.mrf.mxu0
          %v4643 = vadd.f32 %v4594, %v4642
          %4644 = vdwg.mxu0
          %4645 = vmatpush.bf16.msra.mxu0 %v4042
          %4646 = vmatpush.bf16.msra.mxu0 %v4040
          %4647 = vmatpush.bf16.msra.mxu0 %v4038
          %4648 = vmatpush.bf16.msra.mxu0 %v4036
          %4649 = vmatpush.bf16.msra.mxu0 %v4034
          %4650 = vmatpush.bf16.msra.mxu0 %v4032
          %4651 = vmatpush.bf16.msra.mxu0 %v4030
          %4652 = vmatpush.bf16.msra.mxu0 %v4028
          %4653 = vmatmul.bf16.gmra.mxu0 %v3583
          %v4654 = vpop.f32.mrf.mxu0
          %v4655 = vadd.f32 %v4606, %v4654
          %v4656 = vpop.f32.mrf.mxu0
          %v4657 = vadd.f32 %v4608, %v4656
          %4658 = vmatmul.bf16.gmra.mxu0 %v3589
          %v4659 = vpop.f32.mrf.mxu0
          %v4660 = vadd.f32 %v4611, %v4659
          %v4661 = vpop.f32.mrf.mxu0
          %v4662 = vadd.f32 %v4613, %v4661
          %4663 = vmatmul.bf16.gmra.mxu0 %v3595
          %v4664 = vpop.f32.mrf.mxu0
          %v4665 = vadd.f32 %v4616, %v4664
          %v4666 = vpop.f32.mrf.mxu0
          %v4667 = vadd.f32 %v4618, %v4666
          %4668 = vmatmul.bf16.gmra.mxu0 %v3601
          %v4669 = vpop.f32.mrf.mxu0
          %v4670 = vadd.f32 %v4621, %v4669
          %v4671 = vpop.f32.mrf.mxu0
          %v4672 = vadd.f32 %v4623, %v4671
          %4673 = vmatmul.bf16.gmra.mxu0 %v3607
          %v4674 = vpop.f32.mrf.mxu0
          %v4675 = vadd.f32 %v4626, %v4674
          %v4676 = vpop.f32.mrf.mxu0
          %v4677 = vadd.f32 %v4628, %v4676
          %4678 = vmatmul.bf16.gmra.mxu0 %v3613
          %v4679 = vpop.f32.mrf.mxu0
          %v4680 = vadd.f32 %v4631, %v4679
          %v4681 = vpop.f32.mrf.mxu0
          %v4682 = vadd.f32 %v4633, %v4681
          %4683 = vmatmul.bf16.gmra.mxu0 %v3619
          %v4684 = vpop.f32.mrf.mxu0
          %v4685 = vadd.f32 %v4636, %v4684
          %v4686 = vpop.f32.mrf.mxu0
          %v4687 = vadd.f32 %v4638, %v4686
          %4688 = vmatmul.bf16.gmra.mxu0 %v3625
          %v4689 = vpop.f32.mrf.mxu0
          %v4690 = vadd.f32 %v4641, %v4689
          %v4691 = vpop.f32.mrf.mxu0
          %v4692 = vadd.f32 %v4643, %v4691
          %4693 = vdwg.mxu0
          %4694 = vmatpush.bf16.msra.mxu0 %v4058
          %4695 = vmatpush.bf16.msra.mxu0 %v4056
          %4696 = vmatpush.bf16.msra.mxu0 %v4054
          %4697 = vmatpush.bf16.msra.mxu0 %v4052
          %4698 = vmatpush.bf16.msra.mxu0 %v4050
          %4699 = vmatpush.bf16.msra.mxu0 %v4048
          %4700 = vmatpush.bf16.msra.mxu0 %v4046
          %4701 = vmatpush.bf16.msra.mxu0 %v4044
          %4702 = vmatmul.bf16.gmra.mxu0 %v3584
          %v4703 = vpop.f32.mrf.mxu0
          %v4704 = vadd.f32 %v4655, %v4703
          %v4705 = vpop.f32.mrf.mxu0
          %v4706 = vadd.f32 %v4657, %v4705
          %4707 = vmatmul.bf16.gmra.mxu0 %v3590
          %v4708 = vpop.f32.mrf.mxu0
          %v4709 = vadd.f32 %v4660, %v4708
          %v4710 = vpop.f32.mrf.mxu0
          %v4711 = vadd.f32 %v4662, %v4710
          %4712 = vmatmul.bf16.gmra.mxu0 %v3596
          %v4713 = vpop.f32.mrf.mxu0
          %v4714 = vadd.f32 %v4665, %v4713
          %v4715 = vpop.f32.mrf.mxu0
          %v4716 = vadd.f32 %v4667, %v4715
          %4717 = vmatmul.bf16.gmra.mxu0 %v3602
          %v4718 = vpop.f32.mrf.mxu0
          %v4719 = vadd.f32 %v4670, %v4718
          %v4720 = vpop.f32.mrf.mxu0
          %v4721 = vadd.f32 %v4672, %v4720
          %4722 = vmatmul.bf16.gmra.mxu0 %v3608
          %v4723 = vpop.f32.mrf.mxu0
          %v4724 = vadd.f32 %v4675, %v4723
          %v4725 = vpop.f32.mrf.mxu0
          %v4726 = vadd.f32 %v4677, %v4725
          %4727 = vmatmul.bf16.gmra.mxu0 %v3614
          %v4728 = vpop.f32.mrf.mxu0
          %v4729 = vadd.f32 %v4680, %v4728
          %v4730 = vpop.f32.mrf.mxu0
          %v4731 = vadd.f32 %v4682, %v4730
          %4732 = vmatmul.bf16.gmra.mxu0 %v3620
          %v4733 = vpop.f32.mrf.mxu0
          %v4734 = vadd.f32 %v4685, %v4733
          %v4735 = vpop.f32.mrf.mxu0
          %v4736 = vadd.f32 %v4687, %v4735
          %4737 = vmatmul.bf16.gmra.mxu0 %v3626
          %v4738 = vpop.f32.mrf.mxu0
          %v4739 = vadd.f32 %v4690, %v4738
          %v4740 = vpop.f32.mrf.mxu0
          %v4741 = vadd.f32 %v4692, %v4740
          %4742 = vdwg.mxu0
          %v4743 = vpack.c.bf16 %v4412, %v4410
          %v4744 = vpack.c.bf16 %v4706, %v4704
          %v4745 = vpack.c.bf16 %v4417, %v4415
          %v4746 = vpack.c.bf16 %v4711, %v4709
          %v4747 = vpack.c.bf16 %v4422, %v4420
          %v4748 = vpack.c.bf16 %v4716, %v4714
          %v4749 = vpack.c.bf16 %v4427, %v4425
          %v4750 = vpack.c.bf16 %v4721, %v4719
          %v4751 = vpack.c.bf16 %v4432, %v4430
          %v4752 = vpack.c.bf16 %v4726, %v4724
          %v4753 = vpack.c.bf16 %v4437, %v4435
          %v4754 = vpack.c.bf16 %v4731, %v4729
          %v4755 = vpack.c.bf16 %v4442, %v4440
          %v4756 = vpack.c.bf16 %v4736, %v4734
          %v4757 = vpack.c.bf16 %v4447, %v4445
          %v4758 = vpack.c.bf16 %v4741, %v4739
          %v4759 = vld [vmem:[%s339] sm:$0x3]
          %v4761 = vperm.slane %v4759, 0
          %v4762 = vperm.slane %v4759, 1
          %v4781 = vunpack.c.l.b16 %v382
          %v4782 = vunpack.c.l.b16 %v383
          %v4783 = vunpack.c.l.b16 %v384
          %v4784 = vunpack.c.l.b16 %v385
          %v4785 = vunpack.c.l.b16 %v386
          %v4786 = vunpack.c.l.b16 %v387
          %v4787 = vunpack.c.l.b16 %v388
          %v4788 = vunpack.c.l.b16 %v389
          %v4789 = vunpack.c.l.b16 %v390
          %v4790 = vunpack.c.l.b16 %v391
          %v4791 = vunpack.c.l.b16 %v392
          %v4792 = vunpack.c.l.b16 %v393
          %v4793 = vunpack.c.l.b16 %v394
          %v4794 = vunpack.c.l.b16 %v395
          %v4795 = vunpack.c.l.b16 %v396
          %v4796 = vunpack.c.l.b16 %v397
          %v4797 = vpack.c.b16 %v4782, %v4781
          %v4798 = vpack.c.b16 %v4784, %v4783
          %v4799 = vpack.c.b16 %v4786, %v4785
          %v4800 = vpack.c.b16 %v4788, %v4787
          %v4801 = vpack.c.b16 %v4790, %v4789
          %v4802 = vpack.c.b16 %v4792, %v4791
          %v4803 = vpack.c.b16 %v4794, %v4793
          %v4804 = vpack.c.b16 %v4796, %v4795
          %4813 = vmatpush.bf16.msra.mxu0 %v4757
          %4814 = vmatpush.bf16.msra.mxu0 %v4755
          %4815 = vmatpush.bf16.msra.mxu0 %v4753
          %4816 = vmatpush.bf16.msra.mxu0 %v4751
          %4817 = vmatpush.bf16.msra.mxu0 %v4749
          %4818 = vmatpush.bf16.msra.mxu0 %v4747
          %4819 = vmatpush.bf16.msra.mxu0 %v4745
          %4820 = vmatpush.bf16.msra.mxu0 %v4743
          %4821 = vmatmul.bf16.gmra.mxu0 %v4797
          %v4822 = vpop.f32.mrf.mxu0
          %v4823 = vadd.f32 %v4761, %v4822
          %v4824 = vpop.f32.mrf.mxu0
          %v4825 = vadd.f32 %v4761, %v4824
          %4826 = vmatmul.bf16.gmra.mxu0 %v4798
          %v4827 = vpop.f32.mrf.mxu0
          %v4828 = vadd.f32 %v4761, %v4827
          %v4829 = vpop.f32.mrf.mxu0
          %v4830 = vadd.f32 %v4761, %v4829
          %4831 = vmatmul.bf16.gmra.mxu0 %v4799
          %v4832 = vpop.f32.mrf.mxu0
          %v4833 = vadd.f32 %v4761, %v4832
          %v4834 = vpop.f32.mrf.mxu0
          %v4835 = vadd.f32 %v4761, %v4834
          %4836 = vmatmul.bf16.gmra.mxu0 %v4800
          %v4837 = vpop.f32.mrf.mxu0
          %v4838 = vadd.f32 %v4761, %v4837
          %v4839 = vpop.f32.mrf.mxu0
          %v4840 = vadd.f32 %v4761, %v4839
          %4841 = vmatmul.bf16.gmra.mxu0 %v4801
          %v4842 = vpop.f32.mrf.mxu0
          %v4843 = vadd.f32 %v4761, %v4842
          %v4844 = vpop.f32.mrf.mxu0
          %v4845 = vadd.f32 %v4761, %v4844
          %4846 = vmatmul.bf16.gmra.mxu0 %v4802
          %v4847 = vpop.f32.mrf.mxu0
          %v4848 = vadd.f32 %v4761, %v4847
          %v4849 = vpop.f32.mrf.mxu0
          %v4850 = vadd.f32 %v4761, %v4849
          %4851 = vmatmul.bf16.gmra.mxu0 %v4803
          %v4852 = vpop.f32.mrf.mxu0
          %v4853 = vadd.f32 %v4761, %v4852
          %v4854 = vpop.f32.mrf.mxu0
          %v4855 = vadd.f32 %v4761, %v4854
          %4856 = vmatmul.bf16.gmra.mxu0 %v4804
          %v4857 = vpop.f32.mrf.mxu0
          %v4858 = vadd.f32 %v4761, %v4857
          %v4859 = vpop.f32.mrf.mxu0
          %v4860 = vadd.f32 %v4761, %v4859
          %4861 = vdwg.mxu0
          %4862 = vmatpush.bf16.msra.mxu0 %v4758
          %4863 = vmatpush.bf16.msra.mxu0 %v4756
          %4864 = vmatpush.bf16.msra.mxu0 %v4754
          %4865 = vmatpush.bf16.msra.mxu0 %v4752
          %4866 = vmatpush.bf16.msra.mxu0 %v4750
          %4867 = vmatpush.bf16.msra.mxu0 %v4748
          %4868 = vmatpush.bf16.msra.mxu0 %v4746
          %4869 = vmatpush.bf16.msra.mxu0 %v4744
          %4870 = vmatmul.bf16.gmra.mxu0 %v4797
          %v4871 = vpop.f32.mrf.mxu0
          %v4872 = vadd.f32 %v4762, %v4871
          %v4873 = vpop.f32.mrf.mxu0
          %v4874 = vadd.f32 %v4762, %v4873
          %4875 = vmatmul.bf16.gmra.mxu0 %v4798
          %v4876 = vpop.f32.mrf.mxu0
          %v4877 = vadd.f32 %v4762, %v4876
          %v4878 = vpop.f32.mrf.mxu0
          %v4879 = vadd.f32 %v4762, %v4878
          %4880 = vmatmul.bf16.gmra.mxu0 %v4799
          %v4881 = vpop.f32.mrf.mxu0
          %v4882 = vadd.f32 %v4762, %v4881
          %v4883 = vpop.f32.mrf.mxu0
          %v4884 = vadd.f32 %v4762, %v4883
          %4885 = vmatmul.bf16.gmra.mxu0 %v4800
          %v4886 = vpop.f32.mrf.mxu0
          %v4887 = vadd.f32 %v4762, %v4886
          %v4888 = vpop.f32.mrf.mxu0
          %v4889 = vadd.f32 %v4762, %v4888
          %4890 = vmatmul.bf16.gmra.mxu0 %v4801
          %v4891 = vpop.f32.mrf.mxu0
          %v4892 = vadd.f32 %v4762, %v4891
          %v4893 = vpop.f32.mrf.mxu0
          %v4894 = vadd.f32 %v4762, %v4893
          %4895 = vmatmul.bf16.gmra.mxu0 %v4802
          %v4896 = vpop.f32.mrf.mxu0
          %v4897 = vadd.f32 %v4762, %v4896
          %v4898 = vpop.f32.mrf.mxu0
          %v4899 = vadd.f32 %v4762, %v4898
          %4900 = vmatmul.bf16.gmra.mxu0 %v4803
          %v4901 = vpop.f32.mrf.mxu0
          %v4902 = vadd.f32 %v4762, %v4901
          %v4903 = vpop.f32.mrf.mxu0
          %v4904 = vadd.f32 %v4762, %v4903
          %4905 = vmatmul.bf16.gmra.mxu0 %v4804
          %v4906 = vpop.f32.mrf.mxu0
          %v4907 = vadd.f32 %v4762, %v4906
          %v4908 = vpop.f32.mrf.mxu0
          %v4909 = vadd.f32 %v4762, %v4908
          %4910 = vdwg.mxu0
          %v4911 = vld [vmem:[%s329] sm:$0xff]
          %v4912 = vld [vmem:[%s329 + $0x8] sm:$0xff]
          %v4913 = vld [vmem:[%s329 + $0x10] sm:$0xff]
          %v4914 = vld [vmem:[%s329 + $0x18] sm:$0xff]
          %v4915 = vld [vmem:[%s329 + $0x20] sm:$0xff]
          %v4916 = vld [vmem:[%s329 + $0x28] sm:$0xff]
          %v4917 = vld [vmem:[%s329 + $0x30] sm:$0xff]
          %v4918 = vld [vmem:[%s329 + $0x38] sm:$0xff]
          %v4919 = vld [vmem:[%s329 + $0x40] sm:$0xff]
          %v4920 = vld [vmem:[%s329 + $0x48] sm:$0xff]
          %v4921 = vld [vmem:[%s329 + $0x50] sm:$0xff]
          %v4922 = vld [vmem:[%s329 + $0x58] sm:$0xff]
          %v4923 = vld [vmem:[%s329 + $0x60] sm:$0xff]
          %v4924 = vld [vmem:[%s329 + $0x68] sm:$0xff]
          %v4925 = vld [vmem:[%s329 + $0x70] sm:$0xff]
          %v4926 = vld [vmem:[%s329 + $0x78] sm:$0xff]
          %v4927 = vld [vmem:[%s329 + $0x80] sm:$0xff]
          %v4928 = vld [vmem:[%s329 + $0x88] sm:$0xff]
          %v4929 = vld [vmem:[%s329 + $0x90] sm:$0xff]
          %v4930 = vld [vmem:[%s329 + $0x98] sm:$0xff]
          %v4931 = vld [vmem:[%s329 + $0xa0] sm:$0xff]
          %v4932 = vld [vmem:[%s329 + $0xa8] sm:$0xff]
          %v4933 = vld [vmem:[%s329 + $0xb0] sm:$0xff]
          %v4934 = vld [vmem:[%s329 + $0xb8] sm:$0xff]
          %v4935 = vld [vmem:[%s329 + $0xc0] sm:$0xff]
          %v4936 = vld [vmem:[%s329 + $0xc8] sm:$0xff]
          %v4937 = vld [vmem:[%s329 + $0xd0] sm:$0xff]
          %v4938 = vld [vmem:[%s329 + $0xd8] sm:$0xff]
          %v4939 = vld [vmem:[%s329 + $0xe0] sm:$0xff]
          %v4940 = vld [vmem:[%s329 + $0xe8] sm:$0xff]
          %v4941 = vld [vmem:[%s329 + $0xf0] sm:$0xff]
          %v4942 = vld [vmem:[%s329 + $0xf8] sm:$0xff]
          %v4943 = vld [vmem:[%s329 + $0x100] sm:$0xff]
          %v4944 = vld [vmem:[%s329 + $0x108] sm:$0xff]
          %v4945 = vld [vmem:[%s329 + $0x110] sm:$0xff]
          %v4946 = vld [vmem:[%s329 + $0x118] sm:$0xff]
          %v4947 = vld [vmem:[%s329 + $0x120] sm:$0xff]
          %v4948 = vld [vmem:[%s329 + $0x128] sm:$0xff]
          %v4949 = vld [vmem:[%s329 + $0x130] sm:$0xff]
          %v4950 = vld [vmem:[%s329 + $0x138] sm:$0xff]
          %v4951 = vld [vmem:[%s329 + $0x140] sm:$0xff]
          %v4952 = vld [vmem:[%s329 + $0x148] sm:$0xff]
          %v4953 = vld [vmem:[%s329 + $0x150] sm:$0xff]
          %v4954 = vld [vmem:[%s329 + $0x158] sm:$0xff]
          %v4955 = vld [vmem:[%s329 + $0x160] sm:$0xff]
          %v4956 = vld [vmem:[%s329 + $0x168] sm:$0xff]
          %v4957 = vld [vmem:[%s329 + $0x170] sm:$0xff]
          %v4958 = vld [vmem:[%s329 + $0x178] sm:$0xff]
          %v4959 = vld [vmem:[%s329 + $0x180] sm:$0xff]
          %v4960 = vld [vmem:[%s329 + $0x188] sm:$0xff]
          %v4961 = vld [vmem:[%s329 + $0x190] sm:$0xff]
          %v4962 = vld [vmem:[%s329 + $0x198] sm:$0xff]
          %v4963 = vld [vmem:[%s329 + $0x1a0] sm:$0xff]
          %v4964 = vld [vmem:[%s329 + $0x1a8] sm:$0xff]
          %v4965 = vld [vmem:[%s329 + $0x1b0] sm:$0xff]
          %v4966 = vld [vmem:[%s329 + $0x1b8] sm:$0xff]
          %v4967 = vld [vmem:[%s329 + $0x1c0] sm:$0xff]
          %v4968 = vld [vmem:[%s329 + $0x1c8] sm:$0xff]
          %v4969 = vld [vmem:[%s329 + $0x1d0] sm:$0xff]
          %v4970 = vld [vmem:[%s329 + $0x1d8] sm:$0xff]
          %v4971 = vld [vmem:[%s329 + $0x1e0] sm:$0xff]
          %v4972 = vld [vmem:[%s329 + $0x1e8] sm:$0xff]
          %v4973 = vld [vmem:[%s329 + $0x1f0] sm:$0xff]
          %v4974 = vld [vmem:[%s329 + $0x1f8] sm:$0xff]
          %v4975 = vld [vmem:[%s329 + $0x200] sm:$0xff]
          %v4976 = vld [vmem:[%s329 + $0x208] sm:$0xff]
          %v4977 = vld [vmem:[%s329 + $0x210] sm:$0xff]
          %v4978 = vld [vmem:[%s329 + $0x218] sm:$0xff]
          %v4979 = vld [vmem:[%s329 + $0x220] sm:$0xff]
          %v4980 = vld [vmem:[%s329 + $0x228] sm:$0xff]
          %v4981 = vld [vmem:[%s329 + $0x230] sm:$0xff]
          %v4982 = vld [vmem:[%s329 + $0x238] sm:$0xff]
          %v4983 = vld [vmem:[%s329 + $0x240] sm:$0xff]
          %v4984 = vld [vmem:[%s329 + $0x248] sm:$0xff]
          %v4985 = vld [vmem:[%s329 + $0x250] sm:$0xff]
          %v4986 = vld [vmem:[%s329 + $0x258] sm:$0xff]
          %v4987 = vld [vmem:[%s329 + $0x260] sm:$0xff]
          %v4988 = vld [vmem:[%s329 + $0x268] sm:$0xff]
          %v4989 = vld [vmem:[%s329 + $0x270] sm:$0xff]
          %v4990 = vld [vmem:[%s329 + $0x278] sm:$0xff]
          %v4991 = vld [vmem:[%s329 + $0x280] sm:$0xff]
          %v4992 = vld [vmem:[%s329 + $0x288] sm:$0xff]
          %v4993 = vld [vmem:[%s329 + $0x290] sm:$0xff]
          %v4994 = vld [vmem:[%s329 + $0x298] sm:$0xff]
          %v4995 = vld [vmem:[%s329 + $0x2a0] sm:$0xff]
          %v4996 = vld [vmem:[%s329 + $0x2a8] sm:$0xff]
          %v4997 = vld [vmem:[%s329 + $0x2b0] sm:$0xff]
          %v4998 = vld [vmem:[%s329 + $0x2b8] sm:$0xff]
          %v4999 = vld [vmem:[%s329 + $0x2c0] sm:$0xff]
          %v5000 = vld [vmem:[%s329 + $0x2c8] sm:$0xff]
          %v5001 = vld [vmem:[%s329 + $0x2d0] sm:$0xff]
          %v5002 = vld [vmem:[%s329 + $0x2d8] sm:$0xff]
          %v5003 = vld [vmem:[%s329 + $0x2e0] sm:$0xff]
          %v5004 = vld [vmem:[%s329 + $0x2e8] sm:$0xff]
          %v5005 = vld [vmem:[%s329 + $0x2f0] sm:$0xff]
          %v5006 = vld [vmem:[%s329 + $0x2f8] sm:$0xff]
          %v5103 = vunpack.c.l.b16 %v4911
          %v5104 = vunpack.c.h.b16 %v4911
          %v5105 = vunpack.c.l.b16 %v4912
          %v5106 = vunpack.c.h.b16 %v4912
          %v5107 = vunpack.c.l.b16 %v4913
          %v5108 = vunpack.c.h.b16 %v4913
          %v5109 = vunpack.c.l.b16 %v4914
          %v5110 = vunpack.c.h.b16 %v4914
          %v5111 = vunpack.c.l.b16 %v4915
          %v5112 = vunpack.c.h.b16 %v4915
          %v5113 = vunpack.c.l.b16 %v4916
          %v5114 = vunpack.c.h.b16 %v4916
          %v5115 = vunpack.c.l.b16 %v4917
          %v5116 = vunpack.c.h.b16 %v4917
          %v5117 = vunpack.c.l.b16 %v4918
          %v5118 = vunpack.c.h.b16 %v4918
          %v5119 = vunpack.c.l.b16 %v4919
          %v5120 = vunpack.c.h.b16 %v4919
          %v5121 = vunpack.c.l.b16 %v4920
          %v5122 = vunpack.c.h.b16 %v4920
          %v5123 = vunpack.c.l.b16 %v4921
          %v5124 = vunpack.c.h.b16 %v4921
          %v5125 = vunpack.c.l.b16 %v4922
          %v5126 = vunpack.c.h.b16 %v4922
          %v5127 = vunpack.c.l.b16 %v4923
          %v5128 = vunpack.c.h.b16 %v4923
          %v5129 = vunpack.c.l.b16 %v4924
          %v5130 = vunpack.c.h.b16 %v4924
          %v5131 = vunpack.c.l.b16 %v4925
          %v5132 = vunpack.c.h.b16 %v4925
          %v5133 = vunpack.c.l.b16 %v4926
          %v5134 = vunpack.c.h.b16 %v4926
          %v5135 = vunpack.c.l.b16 %v4927
          %v5136 = vunpack.c.h.b16 %v4927
          %v5137 = vunpack.c.l.b16 %v4928
          %v5138 = vunpack.c.h.b16 %v4928
          %v5139 = vunpack.c.l.b16 %v4929
          %v5140 = vunpack.c.h.b16 %v4929
          %v5141 = vunpack.c.l.b16 %v4930
          %v5142 = vunpack.c.h.b16 %v4930
          %v5143 = vunpack.c.l.b16 %v4931
          %v5144 = vunpack.c.h.b16 %v4931
          %v5145 = vunpack.c.l.b16 %v4932
          %v5146 = vunpack.c.h.b16 %v4932
          %v5147 = vunpack.c.l.b16 %v4933
          %v5148 = vunpack.c.h.b16 %v4933
          %v5149 = vunpack.c.l.b16 %v4934
          %v5150 = vunpack.c.h.b16 %v4934
          %v5151 = vunpack.c.l.b16 %v4935
          %v5152 = vunpack.c.h.b16 %v4935
          %v5153 = vunpack.c.l.b16 %v4936
          %v5154 = vunpack.c.h.b16 %v4936
          %v5155 = vunpack.c.l.b16 %v4937
          %v5156 = vunpack.c.h.b16 %v4937
          %v5157 = vunpack.c.l.b16 %v4938
          %v5158 = vunpack.c.h.b16 %v4938
          %v5159 = vunpack.c.l.b16 %v4939
          %v5160 = vunpack.c.h.b16 %v4939
          %v5161 = vunpack.c.l.b16 %v4940
          %v5162 = vunpack.c.h.b16 %v4940
          %v5163 = vunpack.c.l.b16 %v4941
          %v5164 = vunpack.c.h.b16 %v4941
          %v5165 = vunpack.c.l.b16 %v4942
          %v5166 = vunpack.c.h.b16 %v4942
          %v5167 = vunpack.c.l.b16 %v4943
          %v5168 = vunpack.c.h.b16 %v4943
          %v5169 = vunpack.c.l.b16 %v4944
          %v5170 = vunpack.c.h.b16 %v4944
          %v5171 = vunpack.c.l.b16 %v4945
          %v5172 = vunpack.c.h.b16 %v4945
          %v5173 = vunpack.c.l.b16 %v4946
          %v5174 = vunpack.c.h.b16 %v4946
          %v5175 = vunpack.c.l.b16 %v4947
          %v5176 = vunpack.c.h.b16 %v4947
          %v5177 = vunpack.c.l.b16 %v4948
          %v5178 = vunpack.c.h.b16 %v4948
          %v5179 = vunpack.c.l.b16 %v4949
          %v5180 = vunpack.c.h.b16 %v4949
          %v5181 = vunpack.c.l.b16 %v4950
          %v5182 = vunpack.c.h.b16 %v4950
          %v5183 = vunpack.c.l.b16 %v4951
          %v5184 = vunpack.c.h.b16 %v4951
          %v5185 = vunpack.c.l.b16 %v4952
          %v5186 = vunpack.c.h.b16 %v4952
          %v5187 = vunpack.c.l.b16 %v4953
          %v5188 = vunpack.c.h.b16 %v4953
          %v5189 = vunpack.c.l.b16 %v4954
          %v5190 = vunpack.c.h.b16 %v4954
          %v5191 = vunpack.c.l.b16 %v4955
          %v5192 = vunpack.c.h.b16 %v4955
          %v5193 = vunpack.c.l.b16 %v4956
          %v5194 = vunpack.c.h.b16 %v4956
          %v5195 = vunpack.c.l.b16 %v4957
          %v5196 = vunpack.c.h.b16 %v4957
          %v5197 = vunpack.c.l.b16 %v4958
          %v5198 = vunpack.c.h.b16 %v4958
          %v5199 = vunpack.c.l.b16 %v4959
          %v5200 = vunpack.c.h.b16 %v4959
          %v5201 = vunpack.c.l.b16 %v4960
          %v5202 = vunpack.c.h.b16 %v4960
          %v5203 = vunpack.c.l.b16 %v4961
          %v5204 = vunpack.c.h.b16 %v4961
          %v5205 = vunpack.c.l.b16 %v4962
          %v5206 = vunpack.c.h.b16 %v4962
          %v5207 = vunpack.c.l.b16 %v4963
          %v5208 = vunpack.c.h.b16 %v4963
          %v5209 = vunpack.c.l.b16 %v4964
          %v5210 = vunpack.c.h.b16 %v4964
          %v5211 = vunpack.c.l.b16 %v4965
          %v5212 = vunpack.c.h.b16 %v4965
          %v5213 = vunpack.c.l.b16 %v4966
          %v5214 = vunpack.c.h.b16 %v4966
          %v5215 = vunpack.c.l.b16 %v4967
          %v5216 = vunpack.c.h.b16 %v4967
          %v5217 = vunpack.c.l.b16 %v4968
          %v5218 = vunpack.c.h.b16 %v4968
          %v5219 = vunpack.c.l.b16 %v4969
          %v5220 = vunpack.c.h.b16 %v4969
          %v5221 = vunpack.c.l.b16 %v4970
          %v5222 = vunpack.c.h.b16 %v4970
          %v5223 = vunpack.c.l.b16 %v4971
          %v5224 = vunpack.c.h.b16 %v4971
          %v5225 = vunpack.c.l.b16 %v4972
          %v5226 = vunpack.c.h.b16 %v4972
          %v5227 = vunpack.c.l.b16 %v4973
          %v5228 = vunpack.c.h.b16 %v4973
          %v5229 = vunpack.c.l.b16 %v4974
          %v5230 = vunpack.c.h.b16 %v4974
          %v5231 = vunpack.c.l.b16 %v4975
          %v5232 = vunpack.c.h.b16 %v4975
          %v5233 = vunpack.c.l.b16 %v4976
          %v5234 = vunpack.c.h.b16 %v4976
          %v5235 = vunpack.c.l.b16 %v4977
          %v5236 = vunpack.c.h.b16 %v4977
          %v5237 = vunpack.c.l.b16 %v4978
          %v5238 = vunpack.c.h.b16 %v4978
          %v5239 = vunpack.c.l.b16 %v4979
          %v5240 = vunpack.c.h.b16 %v4979
          %v5241 = vunpack.c.l.b16 %v4980
          %v5242 = vunpack.c.h.b16 %v4980
          %v5243 = vunpack.c.l.b16 %v4981
          %v5244 = vunpack.c.h.b16 %v4981
          %v5245 = vunpack.c.l.b16 %v4982
          %v5246 = vunpack.c.h.b16 %v4982
          %v5247 = vunpack.c.l.b16 %v4983
          %v5248 = vunpack.c.h.b16 %v4983
          %v5249 = vunpack.c.l.b16 %v4984
          %v5250 = vunpack.c.h.b16 %v4984
          %v5251 = vunpack.c.l.b16 %v4985
          %v5252 = vunpack.c.h.b16 %v4985
          %v5253 = vunpack.c.l.b16 %v4986
          %v5254 = vunpack.c.h.b16 %v4986
          %v5255 = vunpack.c.l.b16 %v4987
          %v5256 = vunpack.c.h.b16 %v4987
          %v5257 = vunpack.c.l.b16 %v4988
          %v5258 = vunpack.c.h.b16 %v4988
          %v5259 = vunpack.c.l.b16 %v4989
          %v5260 = vunpack.c.h.b16 %v4989
          %v5261 = vunpack.c.l.b16 %v4990
          %v5262 = vunpack.c.h.b16 %v4990
          %v5263 = vunpack.c.l.b16 %v4991
          %v5264 = vunpack.c.h.b16 %v4991
          %v5265 = vunpack.c.l.b16 %v4992
          %v5266 = vunpack.c.h.b16 %v4992
          %v5267 = vunpack.c.l.b16 %v4993
          %v5268 = vunpack.c.h.b16 %v4993
          %v5269 = vunpack.c.l.b16 %v4994
          %v5270 = vunpack.c.h.b16 %v4994
          %v5271 = vunpack.c.l.b16 %v4995
          %v5272 = vunpack.c.h.b16 %v4995
          %v5273 = vunpack.c.l.b16 %v4996
          %v5274 = vunpack.c.h.b16 %v4996
          %v5275 = vunpack.c.l.b16 %v4997
          %v5276 = vunpack.c.h.b16 %v4997
          %v5277 = vunpack.c.l.b16 %v4998
          %v5278 = vunpack.c.h.b16 %v4998
          %v5279 = vunpack.c.l.b16 %v4999
          %v5280 = vunpack.c.h.b16 %v4999
          %v5281 = vunpack.c.l.b16 %v5000
          %v5282 = vunpack.c.h.b16 %v5000
          %v5283 = vunpack.c.l.b16 %v5001
          %v5284 = vunpack.c.h.b16 %v5001
          %v5285 = vunpack.c.l.b16 %v5002
          %v5286 = vunpack.c.h.b16 %v5002
          %v5287 = vunpack.c.l.b16 %v5003
          %v5288 = vunpack.c.h.b16 %v5003
          %v5289 = vunpack.c.l.b16 %v5004
          %v5290 = vunpack.c.h.b16 %v5004
          %v5291 = vunpack.c.l.b16 %v5005
          %v5292 = vunpack.c.h.b16 %v5005
          %v5293 = vunpack.c.l.b16 %v5006
          %v5294 = vunpack.c.h.b16 %v5006
          %v5295 = vpack.c.b16 %v5105, %v5103
          %v5296 = vpack.c.b16 %v5106, %v5104
          %v5297 = vpack.c.b16 %v5109, %v5107
          %v5298 = vpack.c.b16 %v5110, %v5108
          %v5299 = vpack.c.b16 %v5113, %v5111
          %v5300 = vpack.c.b16 %v5114, %v5112
          %v5301 = vpack.c.b16 %v5117, %v5115
          %v5302 = vpack.c.b16 %v5118, %v5116
          %v5303 = vpack.c.b16 %v5121, %v5119
          %v5304 = vpack.c.b16 %v5122, %v5120
          %v5305 = vpack.c.b16 %v5125, %v5123
          %v5306 = vpack.c.b16 %v5126, %v5124
          %v5307 = vpack.c.b16 %v5129, %v5127
          %v5308 = vpack.c.b16 %v5130, %v5128
          %v5309 = vpack.c.b16 %v5133, %v5131
          %v5310 = vpack.c.b16 %v5134, %v5132
          %v5311 = vpack.c.b16 %v5137, %v5135
          %v5312 = vpack.c.b16 %v5138, %v5136
          %v5313 = vpack.c.b16 %v5141, %v5139
          %v5314 = vpack.c.b16 %v5142, %v5140
          %v5315 = vpack.c.b16 %v5145, %v5143
          %v5316 = vpack.c.b16 %v5146, %v5144
          %v5317 = vpack.c.b16 %v5149, %v5147
          %v5318 = vpack.c.b16 %v5150, %v5148
          %v5319 = vpack.c.b16 %v5153, %v5151
          %v5320 = vpack.c.b16 %v5154, %v5152
          %v5321 = vpack.c.b16 %v5157, %v5155
          %v5322 = vpack.c.b16 %v5158, %v5156
          %v5323 = vpack.c.b16 %v5161, %v5159
          %v5324 = vpack.c.b16 %v5162, %v5160
          %v5325 = vpack.c.b16 %v5165, %v5163
          %v5326 = vpack.c.b16 %v5166, %v5164
          %v5327 = vpack.c.b16 %v5169, %v5167
          %v5328 = vpack.c.b16 %v5170, %v5168
          %v5329 = vpack.c.b16 %v5173, %v5171
          %v5330 = vpack.c.b16 %v5174, %v5172
          %v5331 = vpack.c.b16 %v5177, %v5175
          %v5332 = vpack.c.b16 %v5178, %v5176
          %v5333 = vpack.c.b16 %v5181, %v5179
          %v5334 = vpack.c.b16 %v5182, %v5180
          %v5335 = vpack.c.b16 %v5185, %v5183
          %v5336 = vpack.c.b16 %v5186, %v5184
          %v5337 = vpack.c.b16 %v5189, %v5187
          %v5338 = vpack.c.b16 %v5190, %v5188
          %v5339 = vpack.c.b16 %v5193, %v5191
          %v5340 = vpack.c.b16 %v5194, %v5192
          %v5341 = vpack.c.b16 %v5197, %v5195
          %v5342 = vpack.c.b16 %v5198, %v5196
          %v5343 = vpack.c.b16 %v5201, %v5199
          %v5344 = vpack.c.b16 %v5202, %v5200
          %v5345 = vpack.c.b16 %v5205, %v5203
          %v5346 = vpack.c.b16 %v5206, %v5204
          %v5347 = vpack.c.b16 %v5209, %v5207
          %v5348 = vpack.c.b16 %v5210, %v5208
          %v5349 = vpack.c.b16 %v5213, %v5211
          %v5350 = vpack.c.b16 %v5214, %v5212
          %v5351 = vpack.c.b16 %v5217, %v5215
          %v5352 = vpack.c.b16 %v5218, %v5216
          %v5353 = vpack.c.b16 %v5221, %v5219
          %v5354 = vpack.c.b16 %v5222, %v5220
          %v5355 = vpack.c.b16 %v5225, %v5223
          %v5356 = vpack.c.b16 %v5226, %v5224
          %v5357 = vpack.c.b16 %v5229, %v5227
          %v5358 = vpack.c.b16 %v5230, %v5228
          %v5359 = vpack.c.b16 %v5233, %v5231
          %v5360 = vpack.c.b16 %v5234, %v5232
          %v5361 = vpack.c.b16 %v5237, %v5235
          %v5362 = vpack.c.b16 %v5238, %v5236
          %v5363 = vpack.c.b16 %v5241, %v5239
          %v5364 = vpack.c.b16 %v5242, %v5240
          %v5365 = vpack.c.b16 %v5245, %v5243
          %v5366 = vpack.c.b16 %v5246, %v5244
          %v5367 = vpack.c.b16 %v5249, %v5247
          %v5368 = vpack.c.b16 %v5250, %v5248
          %v5369 = vpack.c.b16 %v5253, %v5251
          %v5370 = vpack.c.b16 %v5254, %v5252
          %v5371 = vpack.c.b16 %v5257, %v5255
          %v5372 = vpack.c.b16 %v5258, %v5256
          %v5373 = vpack.c.b16 %v5261, %v5259
          %v5374 = vpack.c.b16 %v5262, %v5260
          %v5375 = vpack.c.b16 %v5265, %v5263
          %v5376 = vpack.c.b16 %v5266, %v5264
          %v5377 = vpack.c.b16 %v5269, %v5267
          %v5378 = vpack.c.b16 %v5270, %v5268
          %v5379 = vpack.c.b16 %v5273, %v5271
          %v5380 = vpack.c.b16 %v5274, %v5272
          %v5381 = vpack.c.b16 %v5277, %v5275
          %v5382 = vpack.c.b16 %v5278, %v5276
          %v5383 = vpack.c.b16 %v5281, %v5279
          %v5384 = vpack.c.b16 %v5282, %v5280
          %v5385 = vpack.c.b16 %v5285, %v5283
          %v5386 = vpack.c.b16 %v5286, %v5284
          %v5387 = vpack.c.b16 %v5289, %v5287
          %v5388 = vpack.c.b16 %v5290, %v5288
          %v5389 = vpack.c.b16 %v5293, %v5291
          %v5390 = vpack.c.b16 %v5294, %v5292
          %5487 = vmatpush.bf16.msra.mxu0 %v5309
          %5488 = vmatpush.bf16.msra.mxu0 %v5307
          %5489 = vmatpush.bf16.msra.mxu0 %v5305
          %5490 = vmatpush.bf16.msra.mxu0 %v5303
          %5491 = vmatpush.bf16.msra.mxu0 %v5301
          %5492 = vmatpush.bf16.msra.mxu0 %v5299
          %5493 = vmatpush.bf16.msra.mxu0 %v5297
          %5494 = vmatpush.bf16.msra.mxu0 %v5295
          %5495 = vmatmul.bf16.gmra.mxu0 %v3579
          %v5496 = vpop.f32.mrf.mxu0
          %v5497 = vadd.f32 0.0, %v5496
          %v5498 = vpop.f32.mrf.mxu0
          %v5499 = vadd.f32 0.0, %v5498
          %5500 = vmatmul.bf16.gmra.mxu0 %v3585
          %v5501 = vpop.f32.mrf.mxu0
          %v5502 = vadd.f32 0.0, %v5501
          %v5503 = vpop.f32.mrf.mxu0
          %v5504 = vadd.f32 0.0, %v5503
          %5505 = vmatmul.bf16.gmra.mxu0 %v3591
          %v5506 = vpop.f32.mrf.mxu0
          %v5507 = vadd.f32 0.0, %v5506
          %v5508 = vpop.f32.mrf.mxu0
          %v5509 = vadd.f32 0.0, %v5508
          %5510 = vmatmul.bf16.gmra.mxu0 %v3597
          %v5511 = vpop.f32.mrf.mxu0
          %v5512 = vadd.f32 0.0, %v5511
          %v5513 = vpop.f32.mrf.mxu0
          %v5514 = vadd.f32 0.0, %v5513
          %5515 = vmatmul.bf16.gmra.mxu0 %v3603
          %v5516 = vpop.f32.mrf.mxu0
          %v5517 = vadd.f32 0.0, %v5516
          %v5518 = vpop.f32.mrf.mxu0
          %v5519 = vadd.f32 0.0, %v5518
          %5520 = vmatmul.bf16.gmra.mxu0 %v3609
          %v5521 = vpop.f32.mrf.mxu0
          %v5522 = vadd.f32 0.0, %v5521
          %v5523 = vpop.f32.mrf.mxu0
          %v5524 = vadd.f32 0.0, %v5523
          %5525 = vmatmul.bf16.gmra.mxu0 %v3615
          %v5526 = vpop.f32.mrf.mxu0
          %v5527 = vadd.f32 0.0, %v5526
          %v5528 = vpop.f32.mrf.mxu0
          %v5529 = vadd.f32 0.0, %v5528
          %5530 = vmatmul.bf16.gmra.mxu0 %v3621
          %v5531 = vpop.f32.mrf.mxu0
          %v5532 = vadd.f32 0.0, %v5531
          %v5533 = vpop.f32.mrf.mxu0
          %v5534 = vadd.f32 0.0, %v5533
          %5535 = vdwg.mxu0
          %5536 = vmatpush.bf16.msra.mxu0 %v5325
          %5537 = vmatpush.bf16.msra.mxu0 %v5323
          %5538 = vmatpush.bf16.msra.mxu0 %v5321
          %5539 = vmatpush.bf16.msra.mxu0 %v5319
          %5540 = vmatpush.bf16.msra.mxu0 %v5317
          %5541 = vmatpush.bf16.msra.mxu0 %v5315
          %5542 = vmatpush.bf16.msra.mxu0 %v5313
          %5543 = vmatpush.bf16.msra.mxu0 %v5311
          %5544 = vmatmul.bf16.gmra.mxu0 %v3580
          %v5545 = vpop.f32.mrf.mxu0
          %v5546 = vadd.f32 %v5497, %v5545
          %v5547 = vpop.f32.mrf.mxu0
          %v5548 = vadd.f32 %v5499, %v5547
          %5549 = vmatmul.bf16.gmra.mxu0 %v3586
          %v5550 = vpop.f32.mrf.mxu0
          %v5551 = vadd.f32 %v5502, %v5550
          %v5552 = vpop.f32.mrf.mxu0
          %v5553 = vadd.f32 %v5504, %v5552
          %5554 = vmatmul.bf16.gmra.mxu0 %v3592
          %v5555 = vpop.f32.mrf.mxu0
          %v5556 = vadd.f32 %v5507, %v5555
          %v5557 = vpop.f32.mrf.mxu0
          %v5558 = vadd.f32 %v5509, %v5557
          %5559 = vmatmul.bf16.gmra.mxu0 %v3598
          %v5560 = vpop.f32.mrf.mxu0
          %v5561 = vadd.f32 %v5512, %v5560
          %v5562 = vpop.f32.mrf.mxu0
          %v5563 = vadd.f32 %v5514, %v5562
          %5564 = vmatmul.bf16.gmra.mxu0 %v3604
          %v5565 = vpop.f32.mrf.mxu0
          %v5566 = vadd.f32 %v5517, %v5565
          %v5567 = vpop.f32.mrf.mxu0
          %v5568 = vadd.f32 %v5519, %v5567
          %5569 = vmatmul.bf16.gmra.mxu0 %v3610
          %v5570 = vpop.f32.mrf.mxu0
          %v5571 = vadd.f32 %v5522, %v5570
          %v5572 = vpop.f32.mrf.mxu0
          %v5573 = vadd.f32 %v5524, %v5572
          %5574 = vmatmul.bf16.gmra.mxu0 %v3616
          %v5575 = vpop.f32.mrf.mxu0
          %v5576 = vadd.f32 %v5527, %v5575
          %v5577 = vpop.f32.mrf.mxu0
          %v5578 = vadd.f32 %v5529, %v5577
          %5579 = vmatmul.bf16.gmra.mxu0 %v3622
          %v5580 = vpop.f32.mrf.mxu0
          %v5581 = vadd.f32 %v5532, %v5580
          %v5582 = vpop.f32.mrf.mxu0
          %v5583 = vadd.f32 %v5534, %v5582
          %5584 = vdwg.mxu0
          %5585 = vmatpush.bf16.msra.mxu0 %v5341
          %5586 = vmatpush.bf16.msra.mxu0 %v5339
          %5587 = vmatpush.bf16.msra.mxu0 %v5337
          %5588 = vmatpush.bf16.msra.mxu0 %v5335
          %5589 = vmatpush.bf16.msra.mxu0 %v5333
          %5590 = vmatpush.bf16.msra.mxu0 %v5331
          %5591 = vmatpush.bf16.msra.mxu0 %v5329
          %5592 = vmatpush.bf16.msra.mxu0 %v5327
          %5593 = vmatmul.bf16.gmra.mxu0 %v3581
          %v5594 = vpop.f32.mrf.mxu0
          %v5595 = vadd.f32 %v5546, %v5594
          %v5596 = vpop.f32.mrf.mxu0
          %v5597 = vadd.f32 %v5548, %v5596
          %5598 = vmatmul.bf16.gmra.mxu0 %v3587
          %v5599 = vpop.f32.mrf.mxu0
          %v5600 = vadd.f32 %v5551, %v5599
          %v5601 = vpop.f32.mrf.mxu0
          %v5602 = vadd.f32 %v5553, %v5601
          %5603 = vmatmul.bf16.gmra.mxu0 %v3593
          %v5604 = vpop.f32.mrf.mxu0
          %v5605 = vadd.f32 %v5556, %v5604
          %v5606 = vpop.f32.mrf.mxu0
          %v5607 = vadd.f32 %v5558, %v5606
          %5608 = vmatmul.bf16.gmra.mxu0 %v3599
          %v5609 = vpop.f32.mrf.mxu0
          %v5610 = vadd.f32 %v5561, %v5609
          %v5611 = vpop.f32.mrf.mxu0
          %v5612 = vadd.f32 %v5563, %v5611
          %5613 = vmatmul.bf16.gmra.mxu0 %v3605
          %v5614 = vpop.f32.mrf.mxu0
          %v5615 = vadd.f32 %v5566, %v5614
          %v5616 = vpop.f32.mrf.mxu0
          %v5617 = vadd.f32 %v5568, %v5616
          %5618 = vmatmul.bf16.gmra.mxu0 %v3611
          %v5619 = vpop.f32.mrf.mxu0
          %v5620 = vadd.f32 %v5571, %v5619
          %v5621 = vpop.f32.mrf.mxu0
          %v5622 = vadd.f32 %v5573, %v5621
          %5623 = vmatmul.bf16.gmra.mxu0 %v3617
          %v5624 = vpop.f32.mrf.mxu0
          %v5625 = vadd.f32 %v5576, %v5624
          %v5626 = vpop.f32.mrf.mxu0
          %v5627 = vadd.f32 %v5578, %v5626
          %5628 = vmatmul.bf16.gmra.mxu0 %v3623
          %v5629 = vpop.f32.mrf.mxu0
          %v5630 = vadd.f32 %v5581, %v5629
          %v5631 = vpop.f32.mrf.mxu0
          %v5632 = vadd.f32 %v5583, %v5631
          %5633 = vdwg.mxu0
          %5634 = vmatpush.bf16.msra.mxu0 %v5357
          %5635 = vmatpush.bf16.msra.mxu0 %v5355
          %5636 = vmatpush.bf16.msra.mxu0 %v5353
          %5637 = vmatpush.bf16.msra.mxu0 %v5351
          %5638 = vmatpush.bf16.msra.mxu0 %v5349
          %5639 = vmatpush.bf16.msra.mxu0 %v5347
          %5640 = vmatpush.bf16.msra.mxu0 %v5345
          %5641 = vmatpush.bf16.msra.mxu0 %v5343
          %5642 = vmatmul.bf16.gmra.mxu0 %v3582
          %v5643 = vpop.f32.mrf.mxu0
          %v5644 = vadd.f32 %v5595, %v5643
          %v5645 = vpop.f32.mrf.mxu0
          %v5646 = vadd.f32 %v5597, %v5645
          %5647 = vmatmul.bf16.gmra.mxu0 %v3588
          %v5648 = vpop.f32.mrf.mxu0
          %v5649 = vadd.f32 %v5600, %v5648
          %v5650 = vpop.f32.mrf.mxu0
          %v5651 = vadd.f32 %v5602, %v5650
          %5652 = vmatmul.bf16.gmra.mxu0 %v3594
          %v5653 = vpop.f32.mrf.mxu0
          %v5654 = vadd.f32 %v5605, %v5653
          %v5655 = vpop.f32.mrf.mxu0
          %v5656 = vadd.f32 %v5607, %v5655
          %5657 = vmatmul.bf16.gmra.mxu0 %v3600
          %v5658 = vpop.f32.mrf.mxu0
          %v5659 = vadd.f32 %v5610, %v5658
          %v5660 = vpop.f32.mrf.mxu0
          %v5661 = vadd.f32 %v5612, %v5660
          %5662 = vmatmul.bf16.gmra.mxu0 %v3606
          %v5663 = vpop.f32.mrf.mxu0
          %v5664 = vadd.f32 %v5615, %v5663
          %v5665 = vpop.f32.mrf.mxu0
          %v5666 = vadd.f32 %v5617, %v5665
          %5667 = vmatmul.bf16.gmra.mxu0 %v3612
          %v5668 = vpop.f32.mrf.mxu0
          %v5669 = vadd.f32 %v5620, %v5668
          %v5670 = vpop.f32.mrf.mxu0
          %v5671 = vadd.f32 %v5622, %v5670
          %5672 = vmatmul.bf16.gmra.mxu0 %v3618
          %v5673 = vpop.f32.mrf.mxu0
          %v5674 = vadd.f32 %v5625, %v5673
          %v5675 = vpop.f32.mrf.mxu0
          %v5676 = vadd.f32 %v5627, %v5675
          %5677 = vmatmul.bf16.gmra.mxu0 %v3624
          %v5678 = vpop.f32.mrf.mxu0
          %v5679 = vadd.f32 %v5630, %v5678
          %v5680 = vpop.f32.mrf.mxu0
          %v5681 = vadd.f32 %v5632, %v5680
          %5682 = vdwg.mxu0
          %5683 = vmatpush.bf16.msra.mxu0 %v5373
          %5684 = vmatpush.bf16.msra.mxu0 %v5371
          %5685 = vmatpush.bf16.msra.mxu0 %v5369
          %5686 = vmatpush.bf16.msra.mxu0 %v5367
          %5687 = vmatpush.bf16.msra.mxu0 %v5365
          %5688 = vmatpush.bf16.msra.mxu0 %v5363
          %5689 = vmatpush.bf16.msra.mxu0 %v5361
          %5690 = vmatpush.bf16.msra.mxu0 %v5359
          %5691 = vmatmul.bf16.gmra.mxu0 %v3583
          %v5692 = vpop.f32.mrf.mxu0
          %v5693 = vadd.f32 %v5644, %v5692
          %v5694 = vpop.f32.mrf.mxu0
          %v5695 = vadd.f32 %v5646, %v5694
          %5696 = vmatmul.bf16.gmra.mxu0 %v3589
          %v5697 = vpop.f32.mrf.mxu0
          %v5698 = vadd.f32 %v5649, %v5697
          %v5699 = vpop.f32.mrf.mxu0
          %v5700 = vadd.f32 %v5651, %v5699
          %5701 = vmatmul.bf16.gmra.mxu0 %v3595
          %v5702 = vpop.f32.mrf.mxu0
          %v5703 = vadd.f32 %v5654, %v5702
          %v5704 = vpop.f32.mrf.mxu0
          %v5705 = vadd.f32 %v5656, %v5704
          %5706 = vmatmul.bf16.gmra.mxu0 %v3601
          %v5707 = vpop.f32.mrf.mxu0
          %v5708 = vadd.f32 %v5659, %v5707
          %v5709 = vpop.f32.mrf.mxu0
          %v5710 = vadd.f32 %v5661, %v5709
          %5711 = vmatmul.bf16.gmra.mxu0 %v3607
          %v5712 = vpop.f32.mrf.mxu0
          %v5713 = vadd.f32 %v5664, %v5712
          %v5714 = vpop.f32.mrf.mxu0
          %v5715 = vadd.f32 %v5666, %v5714
          %5716 = vmatmul.bf16.gmra.mxu0 %v3613
          %v5717 = vpop.f32.mrf.mxu0
          %v5718 = vadd.f32 %v5669, %v5717
          %v5719 = vpop.f32.mrf.mxu0
          %v5720 = vadd.f32 %v5671, %v5719
          %5721 = vmatmul.bf16.gmra.mxu0 %v3619
          %v5722 = vpop.f32.mrf.mxu0
          %v5723 = vadd.f32 %v5674, %v5722
          %v5724 = vpop.f32.mrf.mxu0
          %v5725 = vadd.f32 %v5676, %v5724
          %5726 = vmatmul.bf16.gmra.mxu0 %v3625
          %v5727 = vpop.f32.mrf.mxu0
          %v5728 = vadd.f32 %v5679, %v5727
          %v5729 = vpop.f32.mrf.mxu0
          %v5730 = vadd.f32 %v5681, %v5729
          %5731 = vdwg.mxu0
          %5732 = vmatpush.bf16.msra.mxu0 %v5389
          %5733 = vmatpush.bf16.msra.mxu0 %v5387
          %5734 = vmatpush.bf16.msra.mxu0 %v5385
          %5735 = vmatpush.bf16.msra.mxu0 %v5383
          %5736 = vmatpush.bf16.msra.mxu0 %v5381
          %5737 = vmatpush.bf16.msra.mxu0 %v5379
          %5738 = vmatpush.bf16.msra.mxu0 %v5377
          %5739 = vmatpush.bf16.msra.mxu0 %v5375
          %5740 = vmatmul.bf16.gmra.mxu0 %v3584
          %v5741 = vpop.f32.mrf.mxu0
          %v5742 = vadd.f32 %v5693, %v5741
          %v5743 = vpop.f32.mrf.mxu0
          %v5744 = vadd.f32 %v5695, %v5743
          %5745 = vmatmul.bf16.gmra.mxu0 %v3590
          %v5746 = vpop.f32.mrf.mxu0
          %v5747 = vadd.f32 %v5698, %v5746
          %v5748 = vpop.f32.mrf.mxu0
          %v5749 = vadd.f32 %v5700, %v5748
          %5750 = vmatmul.bf16.gmra.mxu0 %v3596
          %v5751 = vpop.f32.mrf.mxu0
          %v5752 = vadd.f32 %v5703, %v5751
          %v5753 = vpop.f32.mrf.mxu0
          %v5754 = vadd.f32 %v5705, %v5753
          %5755 = vmatmul.bf16.gmra.mxu0 %v3602
          %v5756 = vpop.f32.mrf.mxu0
          %v5757 = vadd.f32 %v5708, %v5756
          %v5758 = vpop.f32.mrf.mxu0
          %v5759 = vadd.f32 %v5710, %v5758
          %5760 = vmatmul.bf16.gmra.mxu0 %v3608
          %v5761 = vpop.f32.mrf.mxu0
          %v5762 = vadd.f32 %v5713, %v5761
          %v5763 = vpop.f32.mrf.mxu0
          %v5764 = vadd.f32 %v5715, %v5763
          %5765 = vmatmul.bf16.gmra.mxu0 %v3614
          %v5766 = vpop.f32.mrf.mxu0
          %v5767 = vadd.f32 %v5718, %v5766
          %v5768 = vpop.f32.mrf.mxu0
          %v5769 = vadd.f32 %v5720, %v5768
          %5770 = vmatmul.bf16.gmra.mxu0 %v3620
          %v5771 = vpop.f32.mrf.mxu0
          %v5772 = vadd.f32 %v5723, %v5771
          %v5773 = vpop.f32.mrf.mxu0
          %v5774 = vadd.f32 %v5725, %v5773
          %5775 = vmatmul.bf16.gmra.mxu0 %v3626
          %v5776 = vpop.f32.mrf.mxu0
          %v5777 = vadd.f32 %v5728, %v5776
          %v5778 = vpop.f32.mrf.mxu0
          %v5779 = vadd.f32 %v5730, %v5778
          %5780 = vdwg.mxu0
          %5781 = vmatpush.bf16.msra.mxu0 %v5310
          %5782 = vmatpush.bf16.msra.mxu0 %v5308
          %5783 = vmatpush.bf16.msra.mxu0 %v5306
          %5784 = vmatpush.bf16.msra.mxu0 %v5304
          %5785 = vmatpush.bf16.msra.mxu0 %v5302
          %5786 = vmatpush.bf16.msra.mxu0 %v5300
          %5787 = vmatpush.bf16.msra.mxu0 %v5298
          %5788 = vmatpush.bf16.msra.mxu0 %v5296
          %5789 = vmatmul.bf16.gmra.mxu0 %v3579
          %v5790 = vpop.f32.mrf.mxu0
          %v5791 = vadd.f32 0.0, %v5790
          %v5792 = vpop.f32.mrf.mxu0
          %v5793 = vadd.f32 0.0, %v5792
          %5794 = vmatmul.bf16.gmra.mxu0 %v3585
          %v5795 = vpop.f32.mrf.mxu0
          %v5796 = vadd.f32 0.0, %v5795
          %v5797 = vpop.f32.mrf.mxu0
          %v5798 = vadd.f32 0.0, %v5797
          %5799 = vmatmul.bf16.gmra.mxu0 %v3591
          %v5800 = vpop.f32.mrf.mxu0
          %v5801 = vadd.f32 0.0, %v5800
          %v5802 = vpop.f32.mrf.mxu0
          %v5803 = vadd.f32 0.0, %v5802
          %5804 = vmatmul.bf16.gmra.mxu0 %v3597
          %v5805 = vpop.f32.mrf.mxu0
          %v5806 = vadd.f32 0.0, %v5805
          %v5807 = vpop.f32.mrf.mxu0
          %v5808 = vadd.f32 0.0, %v5807
          %5809 = vmatmul.bf16.gmra.mxu0 %v3603
          %v5810 = vpop.f32.mrf.mxu0
          %v5811 = vadd.f32 0.0, %v5810
          %v5812 = vpop.f32.mrf.mxu0
          %v5813 = vadd.f32 0.0, %v5812
          %5814 = vmatmul.bf16.gmra.mxu0 %v3609
          %v5815 = vpop.f32.mrf.mxu0
          %v5816 = vadd.f32 0.0, %v5815
          %v5817 = vpop.f32.mrf.mxu0
          %v5818 = vadd.f32 0.0, %v5817
          %5819 = vmatmul.bf16.gmra.mxu0 %v3615
          %v5820 = vpop.f32.mrf.mxu0
          %v5821 = vadd.f32 0.0, %v5820
          %v5822 = vpop.f32.mrf.mxu0
          %v5823 = vadd.f32 0.0, %v5822
          %5824 = vmatmul.bf16.gmra.mxu0 %v3621
          %v5825 = vpop.f32.mrf.mxu0
          %v5826 = vadd.f32 0.0, %v5825
          %v5827 = vpop.f32.mrf.mxu0
          %v5828 = vadd.f32 0.0, %v5827
          %5829 = vdwg.mxu0
          %5830 = vmatpush.bf16.msra.mxu0 %v5326
          %5831 = vmatpush.bf16.msra.mxu0 %v5324
          %5832 = vmatpush.bf16.msra.mxu0 %v5322
          %5833 = vmatpush.bf16.msra.mxu0 %v5320
          %5834 = vmatpush.bf16.msra.mxu0 %v5318
          %5835 = vmatpush.bf16.msra.mxu0 %v5316
          %5836 = vmatpush.bf16.msra.mxu0 %v5314
          %5837 = vmatpush.bf16.msra.mxu0 %v5312
          %5838 = vmatmul.bf16.gmra.mxu0 %v3580
          %v5839 = vpop.f32.mrf.mxu0
          %v5840 = vadd.f32 %v5791, %v5839
          %v5841 = vpop.f32.mrf.mxu0
          %v5842 = vadd.f32 %v5793, %v5841
          %5843 = vmatmul.bf16.gmra.mxu0 %v3586
          %v5844 = vpop.f32.mrf.mxu0
          %v5845 = vadd.f32 %v5796, %v5844
          %v5846 = vpop.f32.mrf.mxu0
          %v5847 = vadd.f32 %v5798, %v5846
          %5848 = vmatmul.bf16.gmra.mxu0 %v3592
          %v5849 = vpop.f32.mrf.mxu0
          %v5850 = vadd.f32 %v5801, %v5849
          %v5851 = vpop.f32.mrf.mxu0
          %v5852 = vadd.f32 %v5803, %v5851
          %5853 = vmatmul.bf16.gmra.mxu0 %v3598
          %v5854 = vpop.f32.mrf.mxu0
          %v5855 = vadd.f32 %v5806, %v5854
          %v5856 = vpop.f32.mrf.mxu0
          %v5857 = vadd.f32 %v5808, %v5856
          %5858 = vmatmul.bf16.gmra.mxu0 %v3604
          %v5859 = vpop.f32.mrf.mxu0
          %v5860 = vadd.f32 %v5811, %v5859
          %v5861 = vpop.f32.mrf.mxu0
          %v5862 = vadd.f32 %v5813, %v5861
          %5863 = vmatmul.bf16.gmra.mxu0 %v3610
          %v5864 = vpop.f32.mrf.mxu0
          %v5865 = vadd.f32 %v5816, %v5864
          %v5866 = vpop.f32.mrf.mxu0
          %v5867 = vadd.f32 %v5818, %v5866
          %5868 = vmatmul.bf16.gmra.mxu0 %v3616
          %v5869 = vpop.f32.mrf.mxu0
          %v5870 = vadd.f32 %v5821, %v5869
          %v5871 = vpop.f32.mrf.mxu0
          %v5872 = vadd.f32 %v5823, %v5871
          %5873 = vmatmul.bf16.gmra.mxu0 %v3622
          %v5874 = vpop.f32.mrf.mxu0
          %v5875 = vadd.f32 %v5826, %v5874
          %v5876 = vpop.f32.mrf.mxu0
          %v5877 = vadd.f32 %v5828, %v5876
          %5878 = vdwg.mxu0
          %5879 = vmatpush.bf16.msra.mxu0 %v5342
          %5880 = vmatpush.bf16.msra.mxu0 %v5340
          %5881 = vmatpush.bf16.msra.mxu0 %v5338
          %5882 = vmatpush.bf16.msra.mxu0 %v5336
          %5883 = vmatpush.bf16.msra.mxu0 %v5334
          %5884 = vmatpush.bf16.msra.mxu0 %v5332
          %5885 = vmatpush.bf16.msra.mxu0 %v5330
          %5886 = vmatpush.bf16.msra.mxu0 %v5328
          %5887 = vmatmul.bf16.gmra.mxu0 %v3581
          %v5888 = vpop.f32.mrf.mxu0
          %v5889 = vadd.f32 %v5840, %v5888
          %v5890 = vpop.f32.mrf.mxu0
          %v5891 = vadd.f32 %v5842, %v5890
          %5892 = vmatmul.bf16.gmra.mxu0 %v3587
          %v5893 = vpop.f32.mrf.mxu0
          %v5894 = vadd.f32 %v5845, %v5893
          %v5895 = vpop.f32.mrf.mxu0
          %v5896 = vadd.f32 %v5847, %v5895
          %5897 = vmatmul.bf16.gmra.mxu0 %v3593
          %v5898 = vpop.f32.mrf.mxu0
          %v5899 = vadd.f32 %v5850, %v5898
          %v5900 = vpop.f32.mrf.mxu0
          %v5901 = vadd.f32 %v5852, %v5900
          %5902 = vmatmul.bf16.gmra.mxu0 %v3599
          %v5903 = vpop.f32.mrf.mxu0
          %v5904 = vadd.f32 %v5855, %v5903
          %v5905 = vpop.f32.mrf.mxu0
          %v5906 = vadd.f32 %v5857, %v5905
          %5907 = vmatmul.bf16.gmra.mxu0 %v3605
          %v5908 = vpop.f32.mrf.mxu0
          %v5909 = vadd.f32 %v5860, %v5908
          %v5910 = vpop.f32.mrf.mxu0
          %v5911 = vadd.f32 %v5862, %v5910
          %5912 = vmatmul.bf16.gmra.mxu0 %v3611
          %v5913 = vpop.f32.mrf.mxu0
          %v5914 = vadd.f32 %v5865, %v5913
          %v5915 = vpop.f32.mrf.mxu0
          %v5916 = vadd.f32 %v5867, %v5915
          %5917 = vmatmul.bf16.gmra.mxu0 %v3617
          %v5918 = vpop.f32.mrf.mxu0
          %v5919 = vadd.f32 %v5870, %v5918
          %v5920 = vpop.f32.mrf.mxu0
          %v5921 = vadd.f32 %v5872, %v5920
          %5922 = vmatmul.bf16.gmra.mxu0 %v3623
          %v5923 = vpop.f32.mrf.mxu0
          %v5924 = vadd.f32 %v5875, %v5923
          %v5925 = vpop.f32.mrf.mxu0
          %v5926 = vadd.f32 %v5877, %v5925
          %5927 = vdwg.mxu0
          %5928 = vmatpush.bf16.msra.mxu0 %v5358
          %5929 = vmatpush.bf16.msra.mxu0 %v5356
          %5930 = vmatpush.bf16.msra.mxu0 %v5354
          %5931 = vmatpush.bf16.msra.mxu0 %v5352
          %5932 = vmatpush.bf16.msra.mxu0 %v5350
          %5933 = vmatpush.bf16.msra.mxu0 %v5348
          %5934 = vmatpush.bf16.msra.mxu0 %v5346
          %5935 = vmatpush.bf16.msra.mxu0 %v5344
          %5936 = vmatmul.bf16.gmra.mxu0 %v3582
          %v5937 = vpop.f32.mrf.mxu0
          %v5938 = vadd.f32 %v5889, %v5937
          %v5939 = vpop.f32.mrf.mxu0
          %v5940 = vadd.f32 %v5891, %v5939
          %5941 = vmatmul.bf16.gmra.mxu0 %v3588
          %v5942 = vpop.f32.mrf.mxu0
          %v5943 = vadd.f32 %v5894, %v5942
          %v5944 = vpop.f32.mrf.mxu0
          %v5945 = vadd.f32 %v5896, %v5944
          %5946 = vmatmul.bf16.gmra.mxu0 %v3594
          %v5947 = vpop.f32.mrf.mxu0
          %v5948 = vadd.f32 %v5899, %v5947
          %v5949 = vpop.f32.mrf.mxu0
          %v5950 = vadd.f32 %v5901, %v5949
          %5951 = vmatmul.bf16.gmra.mxu0 %v3600
          %v5952 = vpop.f32.mrf.mxu0
          %v5953 = vadd.f32 %v5904, %v5952
          %v5954 = vpop.f32.mrf.mxu0
          %v5955 = vadd.f32 %v5906, %v5954
          %5956 = vmatmul.bf16.gmra.mxu0 %v3606
          %v5957 = vpop.f32.mrf.mxu0
          %v5958 = vadd.f32 %v5909, %v5957
          %v5959 = vpop.f32.mrf.mxu0
          %v5960 = vadd.f32 %v5911, %v5959
          %5961 = vmatmul.bf16.gmra.mxu0 %v3612
          %v5962 = vpop.f32.mrf.mxu0
          %v5963 = vadd.f32 %v5914, %v5962
          %v5964 = vpop.f32.mrf.mxu0
          %v5965 = vadd.f32 %v5916, %v5964
          %5966 = vmatmul.bf16.gmra.mxu0 %v3618
          %v5967 = vpop.f32.mrf.mxu0
          %v5968 = vadd.f32 %v5919, %v5967
          %v5969 = vpop.f32.mrf.mxu0
          %v5970 = vadd.f32 %v5921, %v5969
          %5971 = vmatmul.bf16.gmra.mxu0 %v3624
          %v5972 = vpop.f32.mrf.mxu0
          %v5973 = vadd.f32 %v5924, %v5972
          %v5974 = vpop.f32.mrf.mxu0
          %v5975 = vadd.f32 %v5926, %v5974
          %5976 = vdwg.mxu0
          %5977 = vmatpush.bf16.msra.mxu0 %v5374
          %5978 = vmatpush.bf16.msra.mxu0 %v5372
          %5979 = vmatpush.bf16.msra.mxu0 %v5370
          %5980 = vmatpush.bf16.msra.mxu0 %v5368
          %5981 = vmatpush.bf16.msra.mxu0 %v5366
          %5982 = vmatpush.bf16.msra.mxu0 %v5364
          %5983 = vmatpush.bf16.msra.mxu0 %v5362
          %5984 = vmatpush.bf16.msra.mxu0 %v5360
          %5985 = vmatmul.bf16.gmra.mxu0 %v3583
          %v5986 = vpop.f32.mrf.mxu0
          %v5987 = vadd.f32 %v5938, %v5986
          %v5988 = vpop.f32.mrf.mxu0
          %v5989 = vadd.f32 %v5940, %v5988
          %5990 = vmatmul.bf16.gmra.mxu0 %v3589
          %v5991 = vpop.f32.mrf.mxu0
          %v5992 = vadd.f32 %v5943, %v5991
          %v5993 = vpop.f32.mrf.mxu0
          %v5994 = vadd.f32 %v5945, %v5993
          %5995 = vmatmul.bf16.gmra.mxu0 %v3595
          %v5996 = vpop.f32.mrf.mxu0
          %v5997 = vadd.f32 %v5948, %v5996
          %v5998 = vpop.f32.mrf.mxu0
          %v5999 = vadd.f32 %v5950, %v5998
          %6000 = vmatmul.bf16.gmra.mxu0 %v3601
          %v6001 = vpop.f32.mrf.mxu0
          %v6002 = vadd.f32 %v5953, %v6001
          %v6003 = vpop.f32.mrf.mxu0
          %v6004 = vadd.f32 %v5955, %v6003
          %6005 = vmatmul.bf16.gmra.mxu0 %v3607
          %v6006 = vpop.f32.mrf.mxu0
          %v6007 = vadd.f32 %v5958, %v6006
          %v6008 = vpop.f32.mrf.mxu0
          %v6009 = vadd.f32 %v5960, %v6008
          %6010 = vmatmul.bf16.gmra.mxu0 %v3613
          %v6011 = vpop.f32.mrf.mxu0
          %v6012 = vadd.f32 %v5963, %v6011
          %v6013 = vpop.f32.mrf.mxu0
          %v6014 = vadd.f32 %v5965, %v6013
          %6015 = vmatmul.bf16.gmra.mxu0 %v3619
          %v6016 = vpop.f32.mrf.mxu0
          %v6017 = vadd.f32 %v5968, %v6016
          %v6018 = vpop.f32.mrf.mxu0
          %v6019 = vadd.f32 %v5970, %v6018
          %6020 = vmatmul.bf16.gmra.mxu0 %v3625
          %v6021 = vpop.f32.mrf.mxu0
          %v6022 = vadd.f32 %v5973, %v6021
          %v6023 = vpop.f32.mrf.mxu0
          %v6024 = vadd.f32 %v5975, %v6023
          %6025 = vdwg.mxu0
          %6026 = vmatpush.bf16.msra.mxu0 %v5390
          %6027 = vmatpush.bf16.msra.mxu0 %v5388
          %6028 = vmatpush.bf16.msra.mxu0 %v5386
          %6029 = vmatpush.bf16.msra.mxu0 %v5384
          %6030 = vmatpush.bf16.msra.mxu0 %v5382
          %6031 = vmatpush.bf16.msra.mxu0 %v5380
          %6032 = vmatpush.bf16.msra.mxu0 %v5378
          %6033 = vmatpush.bf16.msra.mxu0 %v5376
          %6034 = vmatmul.bf16.gmra.mxu0 %v3584
          %v6035 = vpop.f32.mrf.mxu0
          %v6036 = vadd.f32 %v5987, %v6035
          %v6037 = vpop.f32.mrf.mxu0
          %v6038 = vadd.f32 %v5989, %v6037
          %6039 = vmatmul.bf16.gmra.mxu0 %v3590
          %v6040 = vpop.f32.mrf.mxu0
          %v6041 = vadd.f32 %v5992, %v6040
          %v6042 = vpop.f32.mrf.mxu0
          %v6043 = vadd.f32 %v5994, %v6042
          %6044 = vmatmul.bf16.gmra.mxu0 %v3596
          %v6045 = vpop.f32.mrf.mxu0
          %v6046 = vadd.f32 %v5997, %v6045
          %v6047 = vpop.f32.mrf.mxu0
          %v6048 = vadd.f32 %v5999, %v6047
          %6049 = vmatmul.bf16.gmra.mxu0 %v3602
          %v6050 = vpop.f32.mrf.mxu0
          %v6051 = vadd.f32 %v6002, %v6050
          %v6052 = vpop.f32.mrf.mxu0
          %v6053 = vadd.f32 %v6004, %v6052
          %6054 = vmatmul.bf16.gmra.mxu0 %v3608
          %v6055 = vpop.f32.mrf.mxu0
          %v6056 = vadd.f32 %v6007, %v6055
          %v6057 = vpop.f32.mrf.mxu0
          %v6058 = vadd.f32 %v6009, %v6057
          %6059 = vmatmul.bf16.gmra.mxu0 %v3614
          %v6060 = vpop.f32.mrf.mxu0
          %v6061 = vadd.f32 %v6012, %v6060
          %v6062 = vpop.f32.mrf.mxu0
          %v6063 = vadd.f32 %v6014, %v6062
          %6064 = vmatmul.bf16.gmra.mxu0 %v3620
          %v6065 = vpop.f32.mrf.mxu0
          %v6066 = vadd.f32 %v6017, %v6065
          %v6067 = vpop.f32.mrf.mxu0
          %v6068 = vadd.f32 %v6019, %v6067
          %6069 = vmatmul.bf16.gmra.mxu0 %v3626
          %v6070 = vpop.f32.mrf.mxu0
          %v6071 = vadd.f32 %v6022, %v6070
          %v6072 = vpop.f32.mrf.mxu0
          %v6073 = vadd.f32 %v6024, %v6072
          %6074 = vdwg.mxu0
          %v6075 = vadd.f32 %v4823, %v5742
          %v6076 = vadd.f32 %v4872, %v6036
          %v6077 = vadd.f32 %v4825, %v5744
          %v6078 = vadd.f32 %v4874, %v6038
          %v6079 = vadd.f32 %v4828, %v5747
          %v6080 = vadd.f32 %v4877, %v6041
          %v6081 = vadd.f32 %v4830, %v5749
          %v6082 = vadd.f32 %v4879, %v6043
          %v6083 = vadd.f32 %v4833, %v5752
          %v6084 = vadd.f32 %v4882, %v6046
          %v6085 = vadd.f32 %v4835, %v5754
          %v6086 = vadd.f32 %v4884, %v6048
          %v6087 = vadd.f32 %v4838, %v5757
          %v6088 = vadd.f32 %v4887, %v6051
          %v6089 = vadd.f32 %v4840, %v5759
          %v6090 = vadd.f32 %v4889, %v6053
          %v6091 = vadd.f32 %v4843, %v5762
          %v6092 = vadd.f32 %v4892, %v6056
          %v6093 = vadd.f32 %v4845, %v5764
          %v6094 = vadd.f32 %v4894, %v6058
          %v6095 = vadd.f32 %v4848, %v5767
          %v6096 = vadd.f32 %v4897, %v6061
          %v6097 = vadd.f32 %v4850, %v5769
          %v6098 = vadd.f32 %v4899, %v6063
          %v6099 = vadd.f32 %v4853, %v5772
          %v6100 = vadd.f32 %v4902, %v6066
          %v6101 = vadd.f32 %v4855, %v5774
          %v6102 = vadd.f32 %v4904, %v6068
          %v6103 = vadd.f32 %v4858, %v5777
          %v6104 = vadd.f32 %v4907, %v6071
          %v6105 = vadd.f32 %v4860, %v5779
          %v6106 = vadd.f32 %v4909, %v6073
          %v6107 = vpack.c.bf16 %v6076, %v6075
          %v6108 = vpack.c.bf16 %v6078, %v6077
          %v6109 = vpack.c.bf16 %v6080, %v6079
          %v6110 = vpack.c.bf16 %v6082, %v6081
          %v6111 = vpack.c.bf16 %v6084, %v6083
          %v6112 = vpack.c.bf16 %v6086, %v6085
          %v6113 = vpack.c.bf16 %v6088, %v6087
          %v6114 = vpack.c.bf16 %v6090, %v6089
          %v6115 = vpack.c.bf16 %v6092, %v6091
          %v6116 = vpack.c.bf16 %v6094, %v6093
          %v6117 = vpack.c.bf16 %v6096, %v6095
          %v6118 = vpack.c.bf16 %v6098, %v6097
          %v6119 = vpack.c.bf16 %v6100, %v6099
          %v6120 = vpack.c.bf16 %v6102, %v6101
          %v6121 = vpack.c.bf16 %v6104, %v6103
          %v6122 = vpack.c.bf16 %v6106, %v6105
          %6123 = vst [vmem:[%s376] sm:$0xff] %v6107
          %6124 = vst [vmem:[%s376 + $0x8] sm:$0xff] %v6108
          %6125 = vst [vmem:[%s376 + $0x10] sm:$0xff] %v6109
          %6126 = vst [vmem:[%s376 + $0x18] sm:$0xff] %v6110
          %6127 = vst [vmem:[%s376 + $0x20] sm:$0xff] %v6111
          %6128 = vst [vmem:[%s376 + $0x28] sm:$0xff] %v6112
          %6129 = vst [vmem:[%s376 + $0x30] sm:$0xff] %v6113
          %6130 = vst [vmem:[%s376 + $0x38] sm:$0xff] %v6114
          %6131 = vst [vmem:[%s376 + $0x40] sm:$0xff] %v6115
          %6132 = vst [vmem:[%s376 + $0x48] sm:$0xff] %v6116
          %6133 = vst [vmem:[%s376 + $0x50] sm:$0xff] %v6117
          %6134 = vst [vmem:[%s376 + $0x58] sm:$0xff] %v6118
          %6135 = vst [vmem:[%s376 + $0x60] sm:$0xff] %v6119
          %6136 = vst [vmem:[%s376 + $0x68] sm:$0xff] %v6120
          %6137 = vst [vmem:[%s376 + $0x70] sm:$0xff] %v6121
          %6138 = vst [vmem:[%s376 + $0x78] sm:$0xff] %v6122
        $region68: #{tpu_custom_call.1} parent=39 // pred_fallthru
          _
        %s6139 = sand.u32 %s169, 1
        %s6140 = scalar_lea.sflag [#allocation5], %s6139
        %s6141 = sand.u32 %s169, 1
        %s6142 = smul.addr %s6141, 128
        %s6143 = scalar_lea.vmem [#allocation11], %s6142
        // Predicated region
        $region69: #{tpu_custom_call.1} parent=39 // pred_check
          %p6144 = pneg %p179
        $region70: #{tpu_custom_call.1} parent=39 // pred_check_branch
          %6146 = sbr.rel (%p6144) target = $region72
        $region71: #{tpu_custom_call.1} parent=39 // pred_region
          %s6147 = smul.u32 %s25, %s26
          %s6148 = smul.u32 2, %s6147
          %6150 = vsyncadd %s6140, 0
          %s6151 = smul.addr %s6148, 4
          %s6152 = scalar_lea.hbm %s5, %s6151
          %s6153 = sshll.u32 %s6143, 4
          %s6154 = int_to_ptr.vmem [resolvable:$true] %s6153
          %s6155 = sshll.u32 %s6152, 4
          %s6156 = int_to_ptr.hbm [resolvable:$true] %s6155
          %6161 = dma.vmem_to_hbm [thread:$0]  %s6154, 2048, %s6156, %s6140, 128, 384, 8
        $region72: #{tpu_custom_call.1} parent=39 // pred_fallthru
          _
      $region40: #{tpu_custom_call.1} parent=5 // pred_fallthru
        _
      %p6162 = scmp.le.s32.totalorder 2, %s16
      // Predicated region
      $region73: #{tpu_custom_call.1} parent=5 // pred_check
        %p6163 = pneg %p6162
      $region74: #{tpu_custom_call.1} parent=5 // pred_check_branch
        %6165 = sbr.rel (%p6163) target = $region76
      $region75: #{tpu_custom_call.1} parent=5 // pred_region
        %s6166 = ssub.s32 %s16, 2
        // Predicated region
        $region77: #{tpu_custom_call.1} parent=75 // pred_check
          %p6167 = pneg %p185
        $region78: #{tpu_custom_call.1} parent=75 // pred_check_branch
          %6169 = sbr.rel (%p6167) target = $region80
        $region79: #{tpu_custom_call.1} parent=75 // pred_region
          %s6170 = sand.u32 %s170, 1
          %s6171 = scalar_lea.sflag [#allocation5], %s6170
          %s6172 = sand.u32 %s170, 1
          %s6173 = smul.addr %s6172, 128
          %s6174 = scalar_lea.vmem [#allocation11], %s6173
          %6176 = dma.done %s6171, 2048
        $region80: #{tpu_custom_call.1} parent=75 // pred_fallthru
          _
      $region76: #{tpu_custom_call.1} parent=5 // pred_fallthru
        _
    $region6: #{tpu_custom_call.1} parent=1 // loop_footer
      %s20 = sadd.s32 1, %s16
    $region7: #{tpu_custom_call.1} parent=1 // loop_footer_branch
      %15 = sbr.rel target = $region3
    $region8: #{tpu_custom_call.1} parent=1 // loop_exit
      _
    %6177 = vsyncpa [#allocation4], 1
    %s6178 = scalar_lea.sflag [#allocation4], 1
    %6179 = vsyncpa %s6178, 1
    %6180 = vsyncpa [#allocation7], 1
    %6181 = vsyncpa [#allocation5], 1
    %s6182 = scalar_lea.sflag [#allocation5], 1
    %6183 = vsyncpa %s6182, 1

</llo_original>
